<compile_context>
chip_gen: v7x
topology: tpu7x:2x2x1
jax: 0.10.0
libtpu: 0.0.40
codegen_flags: <defaults>
</compile_context>

<pallas_src>
import functools
import math

import jax
import jax.numpy as jnp
from jax.experimental import pallas as pl
from jax.experimental.pallas import tpu as pltpu

_LN_EPS = 1e-5  # torch.nn.LayerNorm default, used for every norm incl. the final one


def _layer_norm(v, g, b, eps=_LN_EPS):
    mu = jnp.mean(v, axis=-1, keepdims=True)
    var = jnp.mean((v - mu) * (v - mu), axis=-1, keepdims=True)
    return (v - mu) * jax.lax.rsqrt(var + eps) * g + b


# ---------------------------------------------------------------------------
# Pallas kernel: one pre-norm encoder layer for a block of Bb sequences
# ---------------------------------------------------------------------------
def _encoder_layer_kernel(*refs, nhead, causal, apply_final_ln):
    idx = 0
    x_ref = refs[idx]; idx += 1
    pad_ref = refs[idx]; idx += 1
    if not causal:
        cmask_ref = refs[idx]; idx += 1
    (ln1g_ref, ln1b_ref, wqkv_ref, bqkv_ref, wo_ref, bo_ref,
     ln2g_ref, ln2b_ref, w1_ref, b1_ref, w2_ref, b2_ref,
     flng_ref, flnb_ref) = refs[idx:idx + 14]
    out_ref = refs[idx + 14]
    ctx_ref = refs[idx + 15]                       # VMEM scratch (Bb, T, D) f32

    Bb, T, D = x_ref.shape
    d_head = D // nhead
    cdt = wqkv_ref.dtype                           # matmul compute dtype (bf16)

    x = x_ref[...].astype(jnp.float32)             # (Bb, T, D)
    xf = x.reshape(Bb * T, D)                      # flatten -> large MXU M dim
    pad_add = pad_ref[...].astype(jnp.float32)     # (Bb, 1, T) additive key mask

    if causal:
        row = jax.lax.broadcasted_iota(jnp.int32, (T, T), 0)
        col = jax.lax.broadcasted_iota(jnp.int32, (T, T), 1)
        cmask = jnp.where(col > row, -1e9, 0.0).astype(jnp.float32)
    else:
        cmask = cmask_ref[...].astype(jnp.float32)
    mask = cmask[None, :, :] + pad_add             # (Bb, T, T), built once

    # ---- attention (pre-norm) ----
    h = _layer_norm(xf, ln1g_ref[...], ln1b_ref[...])
    qkv = jnp.dot(h.astype(cdt), wqkv_ref[...],
                  preferred_element_type=jnp.float32) + bqkv_ref[...]
    q = qkv[:, 0 * D:1 * D].reshape(Bb, T, D).astype(cdt)   # scale pre-baked in W_q
    k = qkv[:, 1 * D:2 * D].reshape(Bb, T, D).astype(cdt)
    v = qkv[:, 2 * D:3 * D].reshape(Bb, T, D).astype(cdt)

    # TODO(synk): for long T tile keys/values with an online-softmax (flash)
    # accumulator instead of materializing the full (T, T) scores per head.
    for hh in range(nhead):
        lo = hh * d_head
        qh = q[:, :, lo:lo + d_head]
        kh = k[:, :, lo:lo + d_head]
        vh = v[:, :, lo:lo + d_head]
        s = jnp.einsum('btd,bsd->bts', qh, kh,
                       preferred_element_type=jnp.float32) + mask
        m = jnp.max(s, axis=-1, keepdims=True)
        e = jnp.exp(s - m)
        p = e * pl.reciprocal(jnp.sum(e, axis=-1, keepdims=True), approx=True)
        ctx_ref[:, :, lo:lo + d_head] = jnp.einsum(
            'bts,bsd->btd', p.astype(cdt), vh,
            preferred_element_type=jnp.float32)

    # one square (Bb*T, D) x (D, D) output projection instead of nhead skinny ones
    ctx = ctx_ref[...].reshape(Bb * T, D)
    attn = jnp.dot(ctx.astype(cdt), wo_ref[...],
                   preferred_element_type=jnp.float32) + bo_ref[...]
    x1 = xf + attn                                           # residual 1

    # ---- feed forward (pre-norm, ReLU) ----
    h2 = _layer_norm(x1, ln2g_ref[...], ln2b_ref[...])
    f = jnp.dot(h2.astype(cdt), w1_ref[...],
                preferred_element_type=jnp.float32) + b1_ref[...]
    f = jnp.maximum(f, 0.0)
    f = jnp.dot(f.astype(cdt), w2_ref[...],
                preferred_element_type=jnp.float32) + b2_ref[...]
    y = x1 + f                                               # residual 2

    if apply_final_ln:                                       # fused final LayerNorm
        y = _layer_norm(y, flng_ref[...], flnb_ref[...])

    out_ref[...] = y.reshape(Bb, T, D).astype(out_ref.dtype)


# ---------------------------------------------------------------------------
# Wrappers
# ---------------------------------------------------------------------------
def _const_spec(shape):
    return pl.BlockSpec(shape, lambda b: (0,) * len(shape))


def _pick_block_b(B, T):
    """Batch Bb sequences per grid step so the MXU M dim (Bb*T) is sizeable,
    while keeping >= 2 parallel grid blocks (v7x has 2 TensorCores)."""
    target = max(1, (128 + T - 1) // T)
    best = 1
    for d in range(1, B + 1):
        if B % d == 0 and d <= target and (B // d >= 2 or B <= 1):
            best = d
    return best


def _encoder_layer_call(x, pad_add, causal_mask, p, fln_g, fln_b, *,
                        nhead, block_b, apply_final_ln):
    B, T, D = x.shape
    causal = causal_mask is None
    kernel = functools.partial(_encoder_layer_kernel, nhead=nhead,
                               causal=causal, apply_final_ln=apply_final_ln)
    param_order = ("ln1_g", "ln1_b", "w_qkv", "b_qkv", "w_o", "b_o",
                   "ln2_g", "ln2_b", "w1", "b1", "w2", "b2")
    weights = [p[n] for n in param_order] + [fln_g, fln_b]

    inputs = [x, pad_add]
    in_specs = [pl.BlockSpec((block_b, T, D), lambda b: (b, 0, 0)),
                pl.BlockSpec((block_b, 1, T), lambda b: (b, 0, 0))]
    if not causal:
        inputs.append(causal_mask.astype(jnp.float32))
        in_specs.append(_const_spec((T, T)))
    inputs += weights
    in_specs += [_const_spec(w.shape) for w in weights]

    # TODO(synk): at realistic d_model/d_ffn on v7x (64 MiB VMEM), additionally
    # tile w1/w2 over d_ffn with an 'arbitrary' grid axis.
    return pl.pallas_call(
        kernel,
        out_shape=jax.ShapeDtypeStruct((B, T, D), x.dtype),
        grid=(B // block_b,),
        in_specs=in_specs,
        out_specs=pl.BlockSpec((block_b, T, D), lambda b: (b, 0, 0)),
        scratch_shapes=[pltpu.VMEM((block_b, T, D), jnp.float32)],
        compiler_params=pltpu.CompilerParams(
            dimension_semantics=("parallel",),
            vmem_limit_bytes=64 * 1024 * 1024),
    )(*inputs)


def temporal_transformer_forward(x, causal_mask, padding_mask, params, *,
                                 nhead, block_b=None):
    """Forward pass of TemporalTransformer.

    x            : (B, T, d_model) float32
    causal_mask  : None (generate standard causal mask in-kernel) or a (T, T)
                   additive float mask (0 keep / -1e9 mask)
    padding_mask : (B, T) bool, True = padded position
    params       : kernel-layout params (see prepare_params)
    """
    B, T, D = x.shape
    assert D % nhead == 0
    pad_add = jnp.where(padding_mask, -1e9, 0.0).astype(jnp.float32).reshape(B, 1, T)
    bb = block_b or _pick_block_b(B, T)
    assert B % bb == 0
    n_layers = len(params["layers"])
    out = x
    for li, lp in enumerate(params["layers"]):
        out = _encoder_layer_call(out, pad_add, causal_mask, lp,
                                  params["norm_g"], params["norm_b"],
                                  nhead=nhead, block_b=bb,
                                  apply_final_ln=(li == n_layers - 1))
    return out
    # NOTE: the PyTorch encoder also returns per-layer attention weights;
    # TemporalTransformer.forward discards them, so only `out` is returned.


# ---------------------------------------------------------------------------
# Parameters: PyTorch-layout init + kernel-layout preparation
# ---------------------------------------------------------------------------
def init_params(key, num_layers, d_model, d_ffn):
    """PyTorch-layout params (nn.Linear weight = (out_features, in_features))."""
    layers = []
    for _ in range(num_layers):
        key, *ks = jax.random.split(key, 5)
        layers.append({
            "ln1_g": jnp.ones((1, d_model), jnp.float32),
            "ln1_b": jnp.zeros((1, d_model), jnp.float32),
            "w_qkv": 0.02 * jax.random.normal(ks[0], (3 * d_model, d_model), jnp.float32),
            "b_qkv": jnp.zeros((1, 3 * d_model), jnp.float32),
            "w_o":   0.02 * jax.random.normal(ks[1], (d_model, d_model), jnp.float32),
            "b_o":   jnp.zeros((1, d_model), jnp.float32),
            "ln2_g": jnp.ones((1, d_model), jnp.float32),
            "ln2_b": jnp.zeros((1, d_model), jnp.float32),
            "w1":    0.02 * jax.random.normal(ks[2], (d_ffn, d_model), jnp.float32),
            "b1":    jnp.zeros((1, d_ffn), jnp.float32),
            "w2":    0.02 * jax.random.normal(ks[3], (d_model, d_ffn), jnp.float32),
            "b2":    jnp.zeros((1, d_model), jnp.float32),
        })
    return {
        "layers": layers,
        "norm_g": jnp.ones((1, d_model), jnp.float32),
        "norm_b": jnp.zeros((1, d_model), jnp.float32),
    }


def prepare_params(params, *, nhead, compute_dtype=jnp.bfloat16):
    """Kernel layout: transpose every weight so kernels compute `x @ W`,
    bake the 1/sqrt(d_head) attention scale into the Q projection, and store
    weights in bf16 (biases / LayerNorm params stay f32)."""
    layers = []
    for p in params["layers"]:
        D = p["w_qkv"].shape[1]
        d_head = D // nhead
        scale = 1.0 / math.sqrt(d_head)
        col_scale = jnp.concatenate(
            [jnp.full((D,), scale, jnp.float32), jnp.ones((2 * D,), jnp.float32)])
        layers.append({
            "ln1_g": p["ln1_g"].astype(jnp.float32),
            "ln1_b": p["ln1_b"].astype(jnp.float32),
            "w_qkv": (p["w_qkv"].T * col_scale[None, :]).astype(compute_dtype),
            "b_qkv": (p["b_qkv"] * col_scale[None, :]).astype(jnp.float32),
            "w_o":   p["w_o"].T.astype(compute_dtype),
            "b_o":   p["b_o"].astype(jnp.float32),
            "ln2_g": p["ln2_g"].astype(jnp.float32),
            "ln2_b": p["ln2_b"].astype(jnp.float32),
            "w1":    p["w1"].T.astype(compute_dtype),
            "b1":    p["b1"].astype(jnp.float32),
            "w2":    p["w2"].T.astype(compute_dtype),
            "b2":    p["b2"].astype(jnp.float32),
        })
    return {"layers": layers,
            "norm_g": params["norm_g"].astype(jnp.float32),
            "norm_b": params["norm_b"].astype(jnp.float32)}


# ---------------------------------------------------------------------------
if __name__ == "__main__":
    # Small, deterministic config.
    B, T = 2, 8
    num_layers, nhead, d_model, d_ffn = 2, 4, 32, 64

    key = jax.random.PRNGKey(0)
    key, kx = jax.random.split(key)
    x = jax.random.normal(kx, (B, T, d_model), jnp.float32)

    # Padding mask: last 2 timesteps of the second batch element are padded.
    padding_mask = jnp.zeros((B, T), jnp.bool_).at[1, T - 2:].set(True)

    torch_params = init_params(key, num_layers, d_model, d_ffn)
    params = prepare_params(torch_params, nhead=nhead)

    fwd = jax.jit(functools.partial(temporal_transformer_forward, nhead=nhead))

    # Default path: standard causal mask generated in-kernel (no (T,T) HBM traffic).
    out = jax.block_until_ready(fwd(x, None, padding_mask, params))

    # Explicit additive src_mask path (API fidelity) must agree with the iota path.
    i_idx = jnp.arange(T)[:, None]
    j_idx = jnp.arange(T)[None, :]
    causal_mask = jnp.where(j_idx > i_idx, -1e9, 0.0).astype(jnp.float32)
    out_explicit = jax.block_until_ready(fwd(x, causal_mask, padding_mask, params))

    assert out.shape == (B, T, d_model)
    assert bool(jnp.all(jnp.isfinite(out)))
    assert bool(jnp.allclose(out, out_explicit, atol=1e-5, rtol=1e-5))
    print("KERNEL_OK")
</pallas_src>

<mosaic_0001>
module attributes {stable_mosaic.version = 11 : i64} {
  func.func @_encoder_layer_kernel(%arg0: i32, %arg1: memref<1x8x32xf32, #tpu.memory_space<vmem>>, %arg2: memref<1x1x8xf32, #tpu.memory_space<vmem>>, %arg3: memref<1x32xf32, #tpu.memory_space<vmem>>, %arg4: memref<1x32xf32, #tpu.memory_space<vmem>>, %arg5: memref<32x96xbf16, #tpu.memory_space<vmem>>, %arg6: memref<1x96xf32, #tpu.memory_space<vmem>>, %arg7: memref<32x32xbf16, #tpu.memory_space<vmem>>, %arg8: memref<1x32xf32, #tpu.memory_space<vmem>>, %arg9: memref<1x32xf32, #tpu.memory_space<vmem>>, %arg10: memref<1x32xf32, #tpu.memory_space<vmem>>, %arg11: memref<32x64xbf16, #tpu.memory_space<vmem>>, %arg12: memref<1x64xf32, #tpu.memory_space<vmem>>, %arg13: memref<64x32xbf16, #tpu.memory_space<vmem>>, %arg14: memref<1x32xf32, #tpu.memory_space<vmem>>, %arg15: memref<1x32xf32, #tpu.memory_space<vmem>>, %arg16: memref<1x32xf32, #tpu.memory_space<vmem>>, %arg17: memref<1x8x32xf32, #tpu.memory_space<vmem>>, %arg18: memref<1x8x32xf32, #tpu.memory_space<vmem>>) attributes {dimension_semantics = [#tpu.dimension_semantics<parallel>], iteration_bounds = array<i64: 2>, scalar_prefetch = 0 : i64, scratch_operands = 1 : i64, tpu.core_type = #tpu.core_type<tc>, window_params = [{transform_indices = @transform_0, window_bounds = array<i64: 1, 8, 32>}, {transform_indices = @transform_1, window_bounds = array<i64: 1, 1, 8>}, {pipeline_mode = #tpu.pipeline_mode<synchronous>, transform_indices = @transform_2, window_bounds = array<i64: 1, 32>}, {pipeline_mode = #tpu.pipeline_mode<synchronous>, transform_indices = @transform_3, window_bounds = array<i64: 1, 32>}, {pipeline_mode = #tpu.pipeline_mode<synchronous>, transform_indices = @transform_4, window_bounds = array<i64: 32, 96>}, {pipeline_mode = #tpu.pipeline_mode<synchronous>, transform_indices = @transform_5, window_bounds = array<i64: 1, 96>}, {pipeline_mode = #tpu.pipeline_mode<synchronous>, transform_indices = @transform_6, window_bounds = array<i64: 32, 32>}, {pipeline_mode = #tpu.pipeline_mode<synchronous>, transform_indices = @transform_7, window_bounds = array<i64: 1, 32>}, {pipeline_mode = #tpu.pipeline_mode<synchronous>, transform_indices = @transform_8, window_bounds = array<i64: 1, 32>}, {pipeline_mode = #tpu.pipeline_mode<synchronous>, transform_indices = @transform_9, window_bounds = array<i64: 1, 32>}, {pipeline_mode = #tpu.pipeline_mode<synchronous>, transform_indices = @transform_10, window_bounds = array<i64: 32, 64>}, {pipeline_mode = #tpu.pipeline_mode<synchronous>, transform_indices = @transform_11, window_bounds = array<i64: 1, 64>}, {pipeline_mode = #tpu.pipeline_mode<synchronous>, transform_indices = @transform_12, window_bounds = array<i64: 64, 32>}, {pipeline_mode = #tpu.pipeline_mode<synchronous>, transform_indices = @transform_13, window_bounds = array<i64: 1, 32>}, {pipeline_mode = #tpu.pipeline_mode<synchronous>, transform_indices = @transform_14, window_bounds = array<i64: 1, 32>}, {pipeline_mode = #tpu.pipeline_mode<synchronous>, transform_indices = @transform_15, window_bounds = array<i64: 1, 32>}, {transform_indices = @transform_16, window_bounds = array<i64: 1, 8, 32>}]} {
    %c0 = arith.constant 0 : index
    %c0_0 = arith.constant 0 : index
    %c0_1 = arith.constant 0 : index
    %0 = vector.load %arg1[%c0, %c0_0, %c0_1] : memref<1x8x32xf32, #tpu.memory_space<vmem>>, vector<1x8x32xf32>
    %1 = vector.shape_cast %0 : vector<1x8x32xf32> to vector<8x32xf32>
    %c0_2 = arith.constant 0 : index
    %c0_3 = arith.constant 0 : index
    %c0_4 = arith.constant 0 : index
    %2 = vector.load %arg2[%c0_2, %c0_3, %c0_4] : memref<1x1x8xf32, #tpu.memory_space<vmem>>, vector<1x1x8xf32>
    %3 = tpu.iota {dimensions = array<i32: 0>} : vector<8x8xi32>
    %4 = tpu.iota {dimensions = array<i32: 1>} : vector<8x8xi32>
    %5 = arith.cmpi sgt, %4, %3 : vector<8x8xi32>
    %cst = arith.constant -1.000000e+09 : f32
    %cst_5 = arith.constant 0.000000e+00 : f32
    %6 = vector.broadcast %cst : f32 to vector<8x8xf32>
    %7 = vector.broadcast %cst_5 : f32 to vector<8x8xf32>
    %8 = arith.select %5, %6, %7 : vector<8x8xi1>, vector<8x8xf32>
    %9 = vector.shape_cast %8 : vector<8x8xf32> to vector<1x8x8xf32>
    %10 = vector.broadcast %2 : vector<1x1x8xf32> to vector<1x8x8xf32>
    %11 = arith.addf %9, %10 : vector<1x8x8xf32>
    %c0_6 = arith.constant 0 : index
    %c0_7 = arith.constant 0 : index
    %12 = vector.load %arg3[%c0_6, %c0_7] : memref<1x32xf32, #tpu.memory_space<vmem>>, vector<1x32xf32>
    %c0_8 = arith.constant 0 : index
    %c0_9 = arith.constant 0 : index
    %13 = vector.load %arg4[%c0_8, %c0_9] : memref<1x32xf32, #tpu.memory_space<vmem>>, vector<1x32xf32>
    %cst_10 = arith.constant dense<0.000000e+00> : vector<8xf32>
    %14 = vector.multi_reduction <add>, %1, %cst_10 [1] : vector<8x32xf32> to vector<8xf32>
    %15 = vector.shape_cast %14 : vector<8xf32> to vector<8x1xf32>
    %cst_11 = arith.constant 3.200000e+01 : f32
    %16 = vector.broadcast %cst_11 : f32 to vector<8x1xf32>
    %17 = arith.divf %15, %16 : vector<8x1xf32>
    %18 = vector.broadcast %17 : vector<8x1xf32> to vector<8x32xf32>
    %19 = arith.subf %1, %18 : vector<8x32xf32>
    %20 = vector.broadcast %17 : vector<8x1xf32> to vector<8x32xf32>
    %21 = arith.subf %1, %20 : vector<8x32xf32>
    %22 = arith.mulf %19, %21 : vector<8x32xf32>
    %cst_12 = arith.constant dense<0.000000e+00> : vector<8xf32>
    %23 = vector.multi_reduction <add>, %22, %cst_12 [1] : vector<8x32xf32> to vector<8xf32>
    %24 = vector.shape_cast %23 : vector<8xf32> to vector<8x1xf32>
    %cst_13 = arith.constant 3.200000e+01 : f32
    %25 = vector.broadcast %cst_13 : f32 to vector<8x1xf32>
    %26 = arith.divf %24, %25 : vector<8x1xf32>
    %27 = vector.broadcast %17 : vector<8x1xf32> to vector<8x32xf32>
    %28 = arith.subf %1, %27 : vector<8x32xf32>
    %cst_14 = arith.constant 9.99999974E-6 : f32
    %29 = vector.broadcast %cst_14 : f32 to vector<8x1xf32>
    %30 = arith.addf %26, %29 : vector<8x1xf32>
    %31 = math.rsqrt %30 : vector<8x1xf32>
    %32 = vector.broadcast %31 : vector<8x1xf32> to vector<8x32xf32>
    %33 = arith.mulf %28, %32 : vector<8x32xf32>
    %34 = vector.broadcast %12 : vector<1x32xf32> to vector<8x32xf32>
    %35 = arith.mulf %33, %34 : vector<8x32xf32>
    %36 = vector.broadcast %13 : vector<1x32xf32> to vector<8x32xf32>
    %37 = arith.addf %35, %36 : vector<8x32xf32>
    %38 = arith.truncf %37 : vector<8x32xf32> to vector<8x32xbf16>
    %c0_15 = arith.constant 0 : index
    %c0_16 = arith.constant 0 : index
    %39 = vector.load %arg5[%c0_15, %c0_16] : memref<32x96xbf16, #tpu.memory_space<vmem>>, vector<32x96xbf16>
    %cst_17 = arith.constant dense<0.000000e+00> : vector<8x96xf32>
    %40 = tpu.matmul %38, %39, %cst_17 {dimension_numbers = #tpu.dot_dimension_numbers<[1], [0], [0], [1], [0, 0, 1, 1], [], []>} : vector<8x32xbf16>, vector<32x96xbf16>, vector<8x96xf32> -> vector<8x96xf32>
    %c0_18 = arith.constant 0 : index
    %c0_19 = arith.constant 0 : index
    %41 = vector.load %arg6[%c0_18, %c0_19] : memref<1x96xf32, #tpu.memory_space<vmem>>, vector<1x96xf32>
    %42 = vector.broadcast %41 : vector<1x96xf32> to vector<8x96xf32>
    %43 = arith.addf %40, %42 : vector<8x96xf32>
    %44 = vector.extract_strided_slice %43 {offsets = [0, 0], sizes = [8, 32], strides = [1, 1]} : vector<8x96xf32> to vector<8x32xf32>
    %45 = vector.shape_cast %44 : vector<8x32xf32> to vector<1x8x32xf32>
    %46 = arith.truncf %45 : vector<1x8x32xf32> to vector<1x8x32xbf16>
    %47 = vector.extract_strided_slice %43 {offsets = [0, 32], sizes = [8, 32], strides = [1, 1]} : vector<8x96xf32> to vector<8x32xf32>
    %48 = vector.shape_cast %47 : vector<8x32xf32> to vector<1x8x32xf32>
    %49 = arith.truncf %48 : vector<1x8x32xf32> to vector<1x8x32xbf16>
    %50 = vector.extract_strided_slice %43 {offsets = [0, 64], sizes = [8, 32], strides = [1, 1]} : vector<8x96xf32> to vector<8x32xf32>
    %51 = vector.shape_cast %50 : vector<8x32xf32> to vector<1x8x32xf32>
    %52 = arith.truncf %51 : vector<1x8x32xf32> to vector<1x8x32xbf16>
    %53 = vector.extract_strided_slice %46 {offsets = [0, 0, 0], sizes = [1, 8, 8], strides = [1, 1, 1]} : vector<1x8x32xbf16> to vector<1x8x8xbf16>
    %54 = vector.extract_strided_slice %49 {offsets = [0, 0, 0], sizes = [1, 8, 8], strides = [1, 1, 1]} : vector<1x8x32xbf16> to vector<1x8x8xbf16>
    %55 = vector.extract_strided_slice %52 {offsets = [0, 0, 0], sizes = [1, 8, 8], strides = [1, 1, 1]} : vector<1x8x32xbf16> to vector<1x8x8xbf16>
    "tpu.trace_start"() <{level = 10 : i32, message = "btd,bsd->bts"}> : () -> ()
    %cst_20 = arith.constant dense<0.000000e+00> : vector<1x8x8xf32>
    %56 = tpu.matmul %53, %54, %cst_20 {dimension_numbers = #tpu.dot_dimension_numbers<[2], [2], [1], [1], [0, 0, 0, 1, 1, 1], [0], [0]>} : vector<1x8x8xbf16>, vector<1x8x8xbf16>, vector<1x8x8xf32> -> vector<1x8x8xf32>
    "tpu.trace_stop"() : () -> ()
    %57 = arith.addf %56, %11 : vector<1x8x8xf32>
    %cst_21 = arith.constant dense<0xFF800000> : vector<1x8xf32>
    %58 = vector.multi_reduction <maximumf>, %57, %cst_21 [2] : vector<1x8x8xf32> to vector<1x8xf32>
    %59 = vector.shape_cast %58 : vector<1x8xf32> to vector<1x8x1xf32>
    %60 = vector.broadcast %59 : vector<1x8x1xf32> to vector<1x8x8xf32>
    %61 = arith.subf %57, %60 : vector<1x8x8xf32>
    %62 = math.exp %61 : vector<1x8x8xf32>
    %cst_22 = arith.constant dense<0.000000e+00> : vector<1x8xf32>
    %63 = vector.multi_reduction <add>, %62, %cst_22 [2] : vector<1x8x8xf32> to vector<1x8xf32>
    %64 = vector.shape_cast %63 : vector<1x8xf32> to vector<1x8x1xf32>
    %65 = tpu.reciprocal %64 {approx = true} : vector<1x8x1xf32> -> vector<1x8x1xf32>
    %66 = vector.broadcast %65 : vector<1x8x1xf32> to vector<1x8x8xf32>
    %67 = arith.mulf %62, %66 : vector<1x8x8xf32>
    %68 = arith.truncf %67 : vector<1x8x8xf32> to vector<1x8x8xbf16>
    "tpu.trace_start"() <{level = 10 : i32, message = "bts,bsd->btd"}> : () -> ()
    %cst_23 = arith.constant dense<0.000000e+00> : vector<1x8x8xf32>
    %69 = tpu.matmul %68, %55, %cst_23 {dimension_numbers = #tpu.dot_dimension_numbers<[2], [1], [1], [2], [0, 0, 0, 1, 1, 2], [0], [0]>} : vector<1x8x8xbf16>, vector<1x8x8xbf16>, vector<1x8x8xf32> -> vector<1x8x8xf32>
    "tpu.trace_stop"() : () -> ()
    %c0_24 = arith.constant 0 : index
    %c0_25 = arith.constant 0 : index
    %c0_26 = arith.constant 0 : index
    %70 = vector.load %arg18[%c0_24, %c0_25, %c0_26] : memref<1x8x32xf32, #tpu.memory_space<vmem>>, vector<1x8x8xf32>
    tpu.vector_store %arg18[%c0_24, %c0_25, %c0_26], %69 {strides = array<i32>} : memref<1x8x32xf32, #tpu.memory_space<vmem>>, vector<1x8x8xf32>,
    %71 = vector.extract_strided_slice %46 {offsets = [0, 0, 8], sizes = [1, 8, 8], strides = [1, 1, 1]} : vector<1x8x32xbf16> to vector<1x8x8xbf16>
    %72 = vector.extract_strided_slice %49 {offsets = [0, 0, 8], sizes = [1, 8, 8], strides = [1, 1, 1]} : vector<1x8x32xbf16> to vector<1x8x8xbf16>
    %73 = vector.extract_strided_slice %52 {offsets = [0, 0, 8], sizes = [1, 8, 8], strides = [1, 1, 1]} : vector<1x8x32xbf16> to vector<1x8x8xbf16>
    "tpu.trace_start"() <{level = 10 : i32, message = "btd,bsd->bts"}> : () -> ()
    %cst_27 = arith.constant dense<0.000000e+00> : vector<1x8x8xf32>
    %74 = tpu.matmul %71, %72, %cst_27 {dimension_numbers = #tpu.dot_dimension_numbers<[2], [2], [1], [1], [0, 0, 0, 1, 1, 1], [0], [0]>} : vector<1x8x8xbf16>, vector<1x8x8xbf16>, vector<1x8x8xf32> -> vector<1x8x8xf32>
    "tpu.trace_stop"() : () -> ()
    %75 = arith.addf %74, %11 : vector<1x8x8xf32>
    %cst_28 = arith.constant dense<0xFF800000> : vector<1x8xf32>
    %76 = vector.multi_reduction <maximumf>, %75, %cst_28 [2] : vector<1x8x8xf32> to vector<1x8xf32>
    %77 = vector.shape_cast %76 : vector<1x8xf32> to vector<1x8x1xf32>
    %78 = vector.broadcast %77 : vector<1x8x1xf32> to vector<1x8x8xf32>
    %79 = arith.subf %75, %78 : vector<1x8x8xf32>
    %80 = math.exp %79 : vector<1x8x8xf32>
    %cst_29 = arith.constant dense<0.000000e+00> : vector<1x8xf32>
    %81 = vector.multi_reduction <add>, %80, %cst_29 [2] : vector<1x8x8xf32> to vector<1x8xf32>
    %82 = vector.shape_cast %81 : vector<1x8xf32> to vector<1x8x1xf32>
    %83 = tpu.reciprocal %82 {approx = true} : vector<1x8x1xf32> -> vector<1x8x1xf32>
    %84 = vector.broadcast %83 : vector<1x8x1xf32> to vector<1x8x8xf32>
    %85 = arith.mulf %80, %84 : vector<1x8x8xf32>
    %86 = arith.truncf %85 : vector<1x8x8xf32> to vector<1x8x8xbf16>
    "tpu.trace_start"() <{level = 10 : i32, message = "bts,bsd->btd"}> : () -> ()
    %cst_30 = arith.constant dense<0.000000e+00> : vector<1x8x8xf32>
    %87 = tpu.matmul %86, %73, %cst_30 {dimension_numbers = #tpu.dot_dimension_numbers<[2], [1], [1], [2], [0, 0, 0, 1, 1, 2], [0], [0]>} : vector<1x8x8xbf16>, vector<1x8x8xbf16>, vector<1x8x8xf32> -> vector<1x8x8xf32>
    "tpu.trace_stop"() : () -> ()
    %c0_31 = arith.constant 0 : index
    %c0_32 = arith.constant 0 : index
    %c8 = arith.constant 8 : index
    %88 = vector.load %arg18[%c0_31, %c0_32, %c8] : memref<1x8x32xf32, #tpu.memory_space<vmem>>, vector<1x8x8xf32>
    tpu.vector_store %arg18[%c0_31, %c0_32, %c8], %87 {strides = array<i32>} : memref<1x8x32xf32, #tpu.memory_space<vmem>>, vector<1x8x8xf32>,
    %89 = vector.extract_strided_slice %46 {offsets = [0, 0, 16], sizes = [1, 8, 8], strides = [1, 1, 1]} : vector<1x8x32xbf16> to vector<1x8x8xbf16>
    %90 = vector.extract_strided_slice %49 {offsets = [0, 0, 16], sizes = [1, 8, 8], strides = [1, 1, 1]} : vector<1x8x32xbf16> to vector<1x8x8xbf16>
    %91 = vector.extract_strided_slice %52 {offsets = [0, 0, 16], sizes = [1, 8, 8], strides = [1, 1, 1]} : vector<1x8x32xbf16> to vector<1x8x8xbf16>
    "tpu.trace_start"() <{level = 10 : i32, message = "btd,bsd->bts"}> : () -> ()
    %cst_33 = arith.constant dense<0.000000e+00> : vector<1x8x8xf32>
    %92 = tpu.matmul %89, %90, %cst_33 {dimension_numbers = #tpu.dot_dimension_numbers<[2], [2], [1], [1], [0, 0, 0, 1, 1, 1], [0], [0]>} : vector<1x8x8xbf16>, vector<1x8x8xbf16>, vector<1x8x8xf32> -> vector<1x8x8xf32>
    "tpu.trace_stop"() : () -> ()
    %93 = arith.addf %92, %11 : vector<1x8x8xf32>
    %cst_34 = arith.constant dense<0xFF800000> : vector<1x8xf32>
    %94 = vector.multi_reduction <maximumf>, %93, %cst_34 [2] : vector<1x8x8xf32> to vector<1x8xf32>
    %95 = vector.shape_cast %94 : vector<1x8xf32> to vector<1x8x1xf32>
    %96 = vector.broadcast %95 : vector<1x8x1xf32> to vector<1x8x8xf32>
    %97 = arith.subf %93, %96 : vector<1x8x8xf32>
    %98 = math.exp %97 : vector<1x8x8xf32>
    %cst_35 = arith.constant dense<0.000000e+00> : vector<1x8xf32>
    %99 = vector.multi_reduction <add>, %98, %cst_35 [2] : vector<1x8x8xf32> to vector<1x8xf32>
    %100 = vector.shape_cast %99 : vector<1x8xf32> to vector<1x8x1xf32>
    %101 = tpu.reciprocal %100 {approx = true} : vector<1x8x1xf32> -> vector<1x8x1xf32>
    %102 = vector.broadcast %101 : vector<1x8x1xf32> to vector<1x8x8xf32>
    %103 = arith.mulf %98, %102 : vector<1x8x8xf32>
    %104 = arith.truncf %103 : vector<1x8x8xf32> to vector<1x8x8xbf16>
    "tpu.trace_start"() <{level = 10 : i32, message = "bts,bsd->btd"}> : () -> ()
    %cst_36 = arith.constant dense<0.000000e+00> : vector<1x8x8xf32>
    %105 = tpu.matmul %104, %91, %cst_36 {dimension_numbers = #tpu.dot_dimension_numbers<[2], [1], [1], [2], [0, 0, 0, 1, 1, 2], [0], [0]>} : vector<1x8x8xbf16>, vector<1x8x8xbf16>, vector<1x8x8xf32> -> vector<1x8x8xf32>
    "tpu.trace_stop"() : () -> ()
    %c0_37 = arith.constant 0 : index
    %c0_38 = arith.constant 0 : index
    %c16 = arith.constant 16 : index
    %106 = vector.load %arg18[%c0_37, %c0_38, %c16] : memref<1x8x32xf32, #tpu.memory_space<vmem>>, vector<1x8x8xf32>
    tpu.vector_store %arg18[%c0_37, %c0_38, %c16], %105 {strides = array<i32>} : memref<1x8x32xf32, #tpu.memory_space<vmem>>, vector<1x8x8xf32>,
    %107 = vector.extract_strided_slice %46 {offsets = [0, 0, 24], sizes = [1, 8, 8], strides = [1, 1, 1]} : vector<1x8x32xbf16> to vector<1x8x8xbf16>
    %108 = vector.extract_strided_slice %49 {offsets = [0, 0, 24], sizes = [1, 8, 8], strides = [1, 1, 1]} : vector<1x8x32xbf16> to vector<1x8x8xbf16>
    %109 = vector.extract_strided_slice %52 {offsets = [0, 0, 24], sizes = [1, 8, 8], strides = [1, 1, 1]} : vector<1x8x32xbf16> to vector<1x8x8xbf16>
    "tpu.trace_start"() <{level = 10 : i32, message = "btd,bsd->bts"}> : () -> ()
    %cst_39 = arith.constant dense<0.000000e+00> : vector<1x8x8xf32>
    %110 = tpu.matmul %107, %108, %cst_39 {dimension_numbers = #tpu.dot_dimension_numbers<[2], [2], [1], [1], [0, 0, 0, 1, 1, 1], [0], [0]>} : vector<1x8x8xbf16>, vector<1x8x8xbf16>, vector<1x8x8xf32> -> vector<1x8x8xf32>
    "tpu.trace_stop"() : () -> ()
    %111 = arith.addf %110, %11 : vector<1x8x8xf32>
    %cst_40 = arith.constant dense<0xFF800000> : vector<1x8xf32>
    %112 = vector.multi_reduction <maximumf>, %111, %cst_40 [2] : vector<1x8x8xf32> to vector<1x8xf32>
    %113 = vector.shape_cast %112 : vector<1x8xf32> to vector<1x8x1xf32>
    %114 = vector.broadcast %113 : vector<1x8x1xf32> to vector<1x8x8xf32>
    %115 = arith.subf %111, %114 : vector<1x8x8xf32>
    %116 = math.exp %115 : vector<1x8x8xf32>
    %cst_41 = arith.constant dense<0.000000e+00> : vector<1x8xf32>
    %117 = vector.multi_reduction <add>, %116, %cst_41 [2] : vector<1x8x8xf32> to vector<1x8xf32>
    %118 = vector.shape_cast %117 : vector<1x8xf32> to vector<1x8x1xf32>
    %119 = tpu.reciprocal %118 {approx = true} : vector<1x8x1xf32> -> vector<1x8x1xf32>
    %120 = vector.broadcast %119 : vector<1x8x1xf32> to vector<1x8x8xf32>
    %121 = arith.mulf %116, %120 : vector<1x8x8xf32>
    %122 = arith.truncf %121 : vector<1x8x8xf32> to vector<1x8x8xbf16>
    "tpu.trace_start"() <{level = 10 : i32, message = "bts,bsd->btd"}> : () -> ()
    %cst_42 = arith.constant dense<0.000000e+00> : vector<1x8x8xf32>
    %123 = tpu.matmul %122, %109, %cst_42 {dimension_numbers = #tpu.dot_dimension_numbers<[2], [1], [1], [2], [0, 0, 0, 1, 1, 2], [0], [0]>} : vector<1x8x8xbf16>, vector<1x8x8xbf16>, vector<1x8x8xf32> -> vector<1x8x8xf32>
    "tpu.trace_stop"() : () -> ()
    %c0_43 = arith.constant 0 : index
    %c0_44 = arith.constant 0 : index
    %c24 = arith.constant 24 : index
    %124 = vector.load %arg18[%c0_43, %c0_44, %c24] : memref<1x8x32xf32, #tpu.memory_space<vmem>>, vector<1x8x8xf32>
    tpu.vector_store %arg18[%c0_43, %c0_44, %c24], %123 {strides = array<i32>} : memref<1x8x32xf32, #tpu.memory_space<vmem>>, vector<1x8x8xf32>,
    %c0_45 = arith.constant 0 : index
    %c0_46 = arith.constant 0 : index
    %c0_47 = arith.constant 0 : index
    %125 = vector.load %arg18[%c0_45, %c0_46, %c0_47] : memref<1x8x32xf32, #tpu.memory_space<vmem>>, vector<1x8x32xf32>
    %126 = vector.shape_cast %125 : vector<1x8x32xf32> to vector<8x32xf32>
    %127 = arith.truncf %126 : vector<8x32xf32> to vector<8x32xbf16>
    %c0_48 = arith.constant 0 : index
    %c0_49 = arith.constant 0 : index
    %128 = vector.load %arg7[%c0_48, %c0_49] : memref<32x32xbf16, #tpu.memory_space<vmem>>, vector<32x32xbf16>
    %cst_50 = arith.constant dense<0.000000e+00> : vector<8x32xf32>
    %129 = tpu.matmul %127, %128, %cst_50 {dimension_numbers = #tpu.dot_dimension_numbers<[1], [0], [0], [1], [0, 0, 1, 1], [], []>} : vector<8x32xbf16>, vector<32x32xbf16>, vector<8x32xf32> -> vector<8x32xf32>
    %c0_51 = arith.constant 0 : index
    %c0_52 = arith.constant 0 : index
    %130 = vector.load %arg8[%c0_51, %c0_52] : memref<1x32xf32, #tpu.memory_space<vmem>>, vector<1x32xf32>
    %131 = vector.broadcast %130 : vector<1x32xf32> to vector<8x32xf32>
    %132 = arith.addf %129, %131 : vector<8x32xf32>
    %133 = arith.addf %1, %132 : vector<8x32xf32>
    %c0_53 = arith.constant 0 : index
    %c0_54 = arith.constant 0 : index
    %134 = vector.load %arg9[%c0_53, %c0_54] : memref<1x32xf32, #tpu.memory_space<vmem>>, vector<1x32xf32>
    %c0_55 = arith.constant 0 : index
    %c0_56 = arith.constant 0 : index
    %135 = vector.load %arg10[%c0_55, %c0_56] : memref<1x32xf32, #tpu.memory_space<vmem>>, vector<1x32xf32>
    %cst_57 = arith.constant dense<0.000000e+00> : vector<8xf32>
    %136 = vector.multi_reduction <add>, %133, %cst_57 [1] : vector<8x32xf32> to vector<8xf32>
    %137 = vector.shape_cast %136 : vector<8xf32> to vector<8x1xf32>
    %cst_58 = arith.constant 3.200000e+01 : f32
    %138 = vector.broadcast %cst_58 : f32 to vector<8x1xf32>
    %139 = arith.divf %137, %138 : vector<8x1xf32>
    %140 = vector.broadcast %139 : vector<8x1xf32> to vector<8x32xf32>
    %141 = arith.subf %133, %140 : vector<8x32xf32>
    %142 = vector.broadcast %139 : vector<8x1xf32> to vector<8x32xf32>
    %143 = arith.subf %133, %142 : vector<8x32xf32>
    %144 = arith.mulf %141, %143 : vector<8x32xf32>
    %cst_59 = arith.constant dense<0.000000e+00> : vector<8xf32>
    %145 = vector.multi_reduction <add>, %144, %cst_59 [1] : vector<8x32xf32> to vector<8xf32>
    %146 = vector.shape_cast %145 : vector<8xf32> to vector<8x1xf32>
    %cst_60 = arith.constant 3.200000e+01 : f32
    %147 = vector.broadcast %cst_60 : f32 to vector<8x1xf32>
    %148 = arith.divf %146, %147 : vector<8x1xf32>
    %149 = vector.broadcast %139 : vector<8x1xf32> to vector<8x32xf32>
    %150 = arith.subf %133, %149 : vector<8x32xf32>
    %cst_61 = arith.constant 9.99999974E-6 : f32
    %151 = vector.broadcast %cst_61 : f32 to vector<8x1xf32>
    %152 = arith.addf %148, %151 : vector<8x1xf32>
    %153 = math.rsqrt %152 : vector<8x1xf32>
    %154 = vector.broadcast %153 : vector<8x1xf32> to vector<8x32xf32>
    %155 = arith.mulf %150, %154 : vector<8x32xf32>
    %156 = vector.broadcast %134 : vector<1x32xf32> to vector<8x32xf32>
    %157 = arith.mulf %155, %156 : vector<8x32xf32>
    %158 = vector.broadcast %135 : vector<1x32xf32> to vector<8x32xf32>
    %159 = arith.addf %157, %158 : vector<8x32xf32>
    %160 = arith.truncf %159 : vector<8x32xf32> to vector<8x32xbf16>
    %c0_62 = arith.constant 0 : index
    %c0_63 = arith.constant 0 : index
    %161 = vector.load %arg11[%c0_62, %c0_63] : memref<32x64xbf16, #tpu.memory_space<vmem>>, vector<32x64xbf16>
    %cst_64 = arith.constant dense<0.000000e+00> : vector<8x64xf32>
    %162 = tpu.matmul %160, %161, %cst_64 {dimension_numbers = #tpu.dot_dimension_numbers<[1], [0], [0], [1], [0, 0, 1, 1], [], []>} : vector<8x32xbf16>, vector<32x64xbf16>, vector<8x64xf32> -> vector<8x64xf32>
    %c0_65 = arith.constant 0 : index
    %c0_66 = arith.constant 0 : index
    %163 = vector.load %arg12[%c0_65, %c0_66] : memref<1x64xf32, #tpu.memory_space<vmem>>, vector<1x64xf32>
    %164 = vector.broadcast %163 : vector<1x64xf32> to vector<8x64xf32>
    %165 = arith.addf %162, %164 : vector<8x64xf32>
    %cst_67 = arith.constant 0.000000e+00 : f32
    %166 = vector.broadcast %cst_67 : f32 to vector<8x64xf32>
    %167 = arith.maximumf %165, %166 : vector<8x64xf32>
    %168 = arith.truncf %167 : vector<8x64xf32> to vector<8x64xbf16>
    %c0_68 = arith.constant 0 : index
    %c0_69 = arith.constant 0 : index
    %169 = vector.load %arg13[%c0_68, %c0_69] : memref<64x32xbf16, #tpu.memory_space<vmem>>, vector<64x32xbf16>
    %cst_70 = arith.constant dense<0.000000e+00> : vector<8x32xf32>
    %170 = tpu.matmul %168, %169, %cst_70 {dimension_numbers = #tpu.dot_dimension_numbers<[1], [0], [0], [1], [0, 0, 1, 1], [], []>} : vector<8x64xbf16>, vector<64x32xbf16>, vector<8x32xf32> -> vector<8x32xf32>
    %c0_71 = arith.constant 0 : index
    %c0_72 = arith.constant 0 : index
    %171 = vector.load %arg14[%c0_71, %c0_72] : memref<1x32xf32, #tpu.memory_space<vmem>>, vector<1x32xf32>
    %172 = vector.broadcast %171 : vector<1x32xf32> to vector<8x32xf32>
    %173 = arith.addf %170, %172 : vector<8x32xf32>
    %174 = arith.addf %133, %173 : vector<8x32xf32>
    %175 = vector.shape_cast %174 : vector<8x32xf32> to vector<1x8x32xf32>
    %c0_73 = arith.constant 0 : index
    %c0_74 = arith.constant 0 : index
    %c0_75 = arith.constant 0 : index
    %176 = vector.load %arg17[%c0_73, %c0_74, %c0_75] : memref<1x8x32xf32, #tpu.memory_space<vmem>>, vector<1x8x32xf32>
    tpu.vector_store %arg17[%c0_73, %c0_74, %c0_75], %175 {strides = array<i32>} : memref<1x8x32xf32, #tpu.memory_space<vmem>>, vector<1x8x32xf32>,
    return
  }
  func.func @transform_0(%arg0: i32) -> (i32, i32, i32) {
    %c0_i32 = arith.constant 0 : i32
    %c0_i32_0 = arith.constant 0 : i32
    %c0_i32_1 = arith.constant 0 : i32
    return %arg0, %c0_i32, %c0_i32_0 : i32, i32, i32
  }
  func.func @transform_1(%arg0: i32) -> (i32, i32, i32) {
    %c0_i32 = arith.constant 0 : i32
    %c0_i32_0 = arith.constant 0 : i32
    %c0_i32_1 = arith.constant 0 : i32
    return %arg0, %c0_i32, %c0_i32_0 : i32, i32, i32
  }
  func.func @transform_2(%arg0: i32) -> (i32, i32) {
    %c0_i32 = arith.constant 0 : i32
    %c0_i32_0 = arith.constant 0 : i32
    %c0_i32_1 = arith.constant 0 : i32
    return %c0_i32, %c0_i32_0 : i32, i32
  }
  func.func @transform_3(%arg0: i32) -> (i32, i32) {
    %c0_i32 = arith.constant 0 : i32
    %c0_i32_0 = arith.constant 0 : i32
    %c0_i32_1 = arith.constant 0 : i32
    return %c0_i32, %c0_i32_0 : i32, i32
  }
  func.func @transform_4(%arg0: i32) -> (i32, i32) {
    %c0_i32 = arith.constant 0 : i32
    %c0_i32_0 = arith.constant 0 : i32
    %c0_i32_1 = arith.constant 0 : i32
    return %c0_i32, %c0_i32_0 : i32, i32
  }
  func.func @transform_5(%arg0: i32) -> (i32, i32) {
    %c0_i32 = arith.constant 0 : i32
    %c0_i32_0 = arith.constant 0 : i32
    %c0_i32_1 = arith.constant 0 : i32
    return %c0_i32, %c0_i32_0 : i32, i32
  }
  func.func @transform_6(%arg0: i32) -> (i32, i32) {
    %c0_i32 = arith.constant 0 : i32
    %c0_i32_0 = arith.constant 0 : i32
    %c0_i32_1 = arith.constant 0 : i32
    return %c0_i32, %c0_i32_0 : i32, i32
  }
  func.func @transform_7(%arg0: i32) -> (i32, i32) {
    %c0_i32 = arith.constant 0 : i32
    %c0_i32_0 = arith.constant 0 : i32
    %c0_i32_1 = arith.constant 0 : i32
    return %c0_i32, %c0_i32_0 : i32, i32
  }
  func.func @transform_8(%arg0: i32) -> (i32, i32) {
    %c0_i32 = arith.constant 0 : i32
    %c0_i32_0 = arith.constant 0 : i32
    %c0_i32_1 = arith.constant 0 : i32
    return %c0_i32, %c0_i32_0 : i32, i32
  }
  func.func @transform_9(%arg0: i32) -> (i32, i32) {
    %c0_i32 = arith.constant 0 : i32
    %c0_i32_0 = arith.constant 0 : i32
    %c0_i32_1 = arith.constant 0 : i32
    return %c0_i32, %c0_i32_0 : i32, i32
  }
  func.func @transform_10(%arg0: i32) -> (i32, i32) {
    %c0_i32 = arith.constant 0 : i32
    %c0_i32_0 = arith.constant 0 : i32
    %c0_i32_1 = arith.constant 0 : i32
    return %c0_i32, %c0_i32_0 : i32, i32
  }
  func.func @transform_11(%arg0: i32) -> (i32, i32) {
    %c0_i32 = arith.constant 0 : i32
    %c0_i32_0 = arith.constant 0 : i32
    %c0_i32_1 = arith.constant 0 : i32
    return %c0_i32, %c0_i32_0 : i32, i32
  }
  func.func @transform_12(%arg0: i32) -> (i32, i32) {
    %c0_i32 = arith.constant 0 : i32
    %c0_i32_0 = arith.constant 0 : i32
    %c0_i32_1 = arith.constant 0 : i32
    return %c0_i32, %c0_i32_0 : i32, i32
  }
  func.func @transform_13(%arg0: i32) -> (i32, i32) {
    %c0_i32 = arith.constant 0 : i32
    %c0_i32_0 = arith.constant 0 : i32
    %c0_i32_1 = arith.constant 0 : i32
    return %c0_i32, %c0_i32_0 : i32, i32
  }
  func.func @transform_14(%arg0: i32) -> (i32, i32) {
    %c0_i32 = arith.constant 0 : i32
    %c0_i32_0 = arith.constant 0 : i32
    %c0_i32_1 = arith.constant 0 : i32
    return %c0_i32, %c0_i32_0 : i32, i32
  }
  func.func @transform_15(%arg0: i32) -> (i32, i32) {
    %c0_i32 = arith.constant 0 : i32
    %c0_i32_0 = arith.constant 0 : i32
    %c0_i32_1 = arith.constant 0 : i32
    return %c0_i32, %c0_i32_0 : i32, i32
  }
  func.func @transform_16(%arg0: i32) -> (i32, i32, i32) {
    %c0_i32 = arith.constant 0 : i32
    %c0_i32_0 = arith.constant 0 : i32
    %c0_i32_1 = arith.constant 0 : i32
    return %arg0, %c0_i32, %c0_i32_0 : i32, i32, i32
  }
}

module attributes {stable_mosaic.version = 11 : i64} {
  func.func @_encoder_layer_kernel(%arg0: i32, %arg1: memref<1x8x32xf32, #tpu.memory_space<vmem>>, %arg2: memref<1x1x8xf32, #tpu.memory_space<vmem>>, %arg3: memref<1x32xf32, #tpu.memory_space<vmem>>, %arg4: memref<1x32xf32, #tpu.memory_space<vmem>>, %arg5: memref<32x96xbf16, #tpu.memory_space<vmem>>, %arg6: memref<1x96xf32, #tpu.memory_space<vmem>>, %arg7: memref<32x32xbf16, #tpu.memory_space<vmem>>, %arg8: memref<1x32xf32, #tpu.memory_space<vmem>>, %arg9: memref<1x32xf32, #tpu.memory_space<vmem>>, %arg10: memref<1x32xf32, #tpu.memory_space<vmem>>, %arg11: memref<32x64xbf16, #tpu.memory_space<vmem>>, %arg12: memref<1x64xf32, #tpu.memory_space<vmem>>, %arg13: memref<64x32xbf16, #tpu.memory_space<vmem>>, %arg14: memref<1x32xf32, #tpu.memory_space<vmem>>, %arg15: memref<1x32xf32, #tpu.memory_space<vmem>>, %arg16: memref<1x32xf32, #tpu.memory_space<vmem>>, %arg17: memref<1x8x32xf32, #tpu.memory_space<vmem>>, %arg18: memref<1x8x32xf32, #tpu.memory_space<vmem>>) attributes {dimension_semantics = [#tpu.dimension_semantics<parallel>], iteration_bounds = array<i64: 2>, scalar_prefetch = 0 : i64, scratch_operands = 1 : i64, tpu.core_type = #tpu.core_type<tc>, window_params = [{transform_indices = @transform_0, window_bounds = array<i64: 1, 8, 32>}, {transform_indices = @transform_1, window_bounds = array<i64: 1, 1, 8>}, {pipeline_mode = #tpu.pipeline_mode<synchronous>, transform_indices = @transform_2, window_bounds = array<i64: 1, 32>}, {pipeline_mode = #tpu.pipeline_mode<synchronous>, transform_indices = @transform_3, window_bounds = array<i64: 1, 32>}, {pipeline_mode = #tpu.pipeline_mode<synchronous>, transform_indices = @transform_4, window_bounds = array<i64: 32, 96>}, {pipeline_mode = #tpu.pipeline_mode<synchronous>, transform_indices = @transform_5, window_bounds = array<i64: 1, 96>}, {pipeline_mode = #tpu.pipeline_mode<synchronous>, transform_indices = @transform_6, window_bounds = array<i64: 32, 32>}, {pipeline_mode = #tpu.pipeline_mode<synchronous>, transform_indices = @transform_7, window_bounds = array<i64: 1, 32>}, {pipeline_mode = #tpu.pipeline_mode<synchronous>, transform_indices = @transform_8, window_bounds = array<i64: 1, 32>}, {pipeline_mode = #tpu.pipeline_mode<synchronous>, transform_indices = @transform_9, window_bounds = array<i64: 1, 32>}, {pipeline_mode = #tpu.pipeline_mode<synchronous>, transform_indices = @transform_10, window_bounds = array<i64: 32, 64>}, {pipeline_mode = #tpu.pipeline_mode<synchronous>, transform_indices = @transform_11, window_bounds = array<i64: 1, 64>}, {pipeline_mode = #tpu.pipeline_mode<synchronous>, transform_indices = @transform_12, window_bounds = array<i64: 64, 32>}, {pipeline_mode = #tpu.pipeline_mode<synchronous>, transform_indices = @transform_13, window_bounds = array<i64: 1, 32>}, {pipeline_mode = #tpu.pipeline_mode<synchronous>, transform_indices = @transform_14, window_bounds = array<i64: 1, 32>}, {pipeline_mode = #tpu.pipeline_mode<synchronous>, transform_indices = @transform_15, window_bounds = array<i64: 1, 32>}, {transform_indices = @transform_16, window_bounds = array<i64: 1, 8, 32>}]} {
    %c0 = arith.constant 0 : index
    %c0_0 = arith.constant 0 : index
    %c0_1 = arith.constant 0 : index
    %0 = vector.load %arg1[%c0, %c0_0, %c0_1] : memref<1x8x32xf32, #tpu.memory_space<vmem>>, vector<1x8x32xf32>
    %1 = vector.shape_cast %0 : vector<1x8x32xf32> to vector<8x32xf32>
    %c0_2 = arith.constant 0 : index
    %c0_3 = arith.constant 0 : index
    %c0_4 = arith.constant 0 : index
    %2 = vector.load %arg2[%c0_2, %c0_3, %c0_4] : memref<1x1x8xf32, #tpu.memory_space<vmem>>, vector<1x1x8xf32>
    %3 = tpu.iota {dimensions = array<i32: 0>} : vector<8x8xi32>
    %4 = tpu.iota {dimensions = array<i32: 1>} : vector<8x8xi32>
    %5 = arith.cmpi sgt, %4, %3 : vector<8x8xi32>
    %cst = arith.constant -1.000000e+09 : f32
    %cst_5 = arith.constant 0.000000e+00 : f32
    %6 = vector.broadcast %cst : f32 to vector<8x8xf32>
    %7 = vector.broadcast %cst_5 : f32 to vector<8x8xf32>
    %8 = arith.select %5, %6, %7 : vector<8x8xi1>, vector<8x8xf32>
    %9 = vector.shape_cast %8 : vector<8x8xf32> to vector<1x8x8xf32>
    %10 = vector.broadcast %2 : vector<1x1x8xf32> to vector<1x8x8xf32>
    %11 = arith.addf %9, %10 : vector<1x8x8xf32>
    %c0_6 = arith.constant 0 : index
    %c0_7 = arith.constant 0 : index
    %12 = vector.load %arg3[%c0_6, %c0_7] : memref<1x32xf32, #tpu.memory_space<vmem>>, vector<1x32xf32>
    %c0_8 = arith.constant 0 : index
    %c0_9 = arith.constant 0 : index
    %13 = vector.load %arg4[%c0_8, %c0_9] : memref<1x32xf32, #tpu.memory_space<vmem>>, vector<1x32xf32>
    %cst_10 = arith.constant dense<0.000000e+00> : vector<8xf32>
    %14 = vector.multi_reduction <add>, %1, %cst_10 [1] : vector<8x32xf32> to vector<8xf32>
    %15 = vector.shape_cast %14 : vector<8xf32> to vector<8x1xf32>
    %cst_11 = arith.constant 3.200000e+01 : f32
    %16 = vector.broadcast %cst_11 : f32 to vector<8x1xf32>
    %17 = arith.divf %15, %16 : vector<8x1xf32>
    %18 = vector.broadcast %17 : vector<8x1xf32> to vector<8x32xf32>
    %19 = arith.subf %1, %18 : vector<8x32xf32>
    %20 = vector.broadcast %17 : vector<8x1xf32> to vector<8x32xf32>
    %21 = arith.subf %1, %20 : vector<8x32xf32>
    %22 = arith.mulf %19, %21 : vector<8x32xf32>
    %cst_12 = arith.constant dense<0.000000e+00> : vector<8xf32>
    %23 = vector.multi_reduction <add>, %22, %cst_12 [1] : vector<8x32xf32> to vector<8xf32>
    %24 = vector.shape_cast %23 : vector<8xf32> to vector<8x1xf32>
    %cst_13 = arith.constant 3.200000e+01 : f32
    %25 = vector.broadcast %cst_13 : f32 to vector<8x1xf32>
    %26 = arith.divf %24, %25 : vector<8x1xf32>
    %27 = vector.broadcast %17 : vector<8x1xf32> to vector<8x32xf32>
    %28 = arith.subf %1, %27 : vector<8x32xf32>
    %cst_14 = arith.constant 9.99999974E-6 : f32
    %29 = vector.broadcast %cst_14 : f32 to vector<8x1xf32>
    %30 = arith.addf %26, %29 : vector<8x1xf32>
    %31 = math.rsqrt %30 : vector<8x1xf32>
    %32 = vector.broadcast %31 : vector<8x1xf32> to vector<8x32xf32>
    %33 = arith.mulf %28, %32 : vector<8x32xf32>
    %34 = vector.broadcast %12 : vector<1x32xf32> to vector<8x32xf32>
    %35 = arith.mulf %33, %34 : vector<8x32xf32>
    %36 = vector.broadcast %13 : vector<1x32xf32> to vector<8x32xf32>
    %37 = arith.addf %35, %36 : vector<8x32xf32>
    %38 = arith.truncf %37 : vector<8x32xf32> to vector<8x32xbf16>
    %c0_15 = arith.constant 0 : index
    %c0_16 = arith.constant 0 : index
    %39 = vector.load %arg5[%c0_15, %c0_16] : memref<32x96xbf16, #tpu.memory_space<vmem>>, vector<32x96xbf16>
    %cst_17 = arith.constant dense<0.000000e+00> : vector<8x96xf32>
    %40 = tpu.matmul %38, %39, %cst_17 {dimension_numbers = #tpu.dot_dimension_numbers<[1], [0], [0], [1], [0, 0, 1, 1], [], []>} : vector<8x32xbf16>, vector<32x96xbf16>, vector<8x96xf32> -> vector<8x96xf32>
    %c0_18 = arith.constant 0 : index
    %c0_19 = arith.constant 0 : index
    %41 = vector.load %arg6[%c0_18, %c0_19] : memref<1x96xf32, #tpu.memory_space<vmem>>, vector<1x96xf32>
    %42 = vector.broadcast %41 : vector<1x96xf32> to vector<8x96xf32>
    %43 = arith.addf %40, %42 : vector<8x96xf32>
    %44 = vector.extract_strided_slice %43 {offsets = [0, 0], sizes = [8, 32], strides = [1, 1]} : vector<8x96xf32> to vector<8x32xf32>
    %45 = vector.shape_cast %44 : vector<8x32xf32> to vector<1x8x32xf32>
    %46 = arith.truncf %45 : vector<1x8x32xf32> to vector<1x8x32xbf16>
    %47 = vector.extract_strided_slice %43 {offsets = [0, 32], sizes = [8, 32], strides = [1, 1]} : vector<8x96xf32> to vector<8x32xf32>
    %48 = vector.shape_cast %47 : vector<8x32xf32> to vector<1x8x32xf32>
    %49 = arith.truncf %48 : vector<1x8x32xf32> to vector<1x8x32xbf16>
    %50 = vector.extract_strided_slice %43 {offsets = [0, 64], sizes = [8, 32], strides = [1, 1]} : vector<8x96xf32> to vector<8x32xf32>
    %51 = vector.shape_cast %50 : vector<8x32xf32> to vector<1x8x32xf32>
    %52 = arith.truncf %51 : vector<1x8x32xf32> to vector<1x8x32xbf16>
    %53 = vector.extract_strided_slice %46 {offsets = [0, 0, 0], sizes = [1, 8, 8], strides = [1, 1, 1]} : vector<1x8x32xbf16> to vector<1x8x8xbf16>
    %54 = vector.extract_strided_slice %49 {offsets = [0, 0, 0], sizes = [1, 8, 8], strides = [1, 1, 1]} : vector<1x8x32xbf16> to vector<1x8x8xbf16>
    %55 = vector.extract_strided_slice %52 {offsets = [0, 0, 0], sizes = [1, 8, 8], strides = [1, 1, 1]} : vector<1x8x32xbf16> to vector<1x8x8xbf16>
    "tpu.trace_start"() <{level = 10 : i32, message = "btd,bsd->bts"}> : () -> ()
    %cst_20 = arith.constant dense<0.000000e+00> : vector<1x8x8xf32>
    %56 = tpu.matmul %53, %54, %cst_20 {dimension_numbers = #tpu.dot_dimension_numbers<[2], [2], [1], [1], [0, 0, 0, 1, 1, 1], [0], [0]>} : vector<1x8x8xbf16>, vector<1x8x8xbf16>, vector<1x8x8xf32> -> vector<1x8x8xf32>
    "tpu.trace_stop"() : () -> ()
    %57 = arith.addf %56, %11 : vector<1x8x8xf32>
    %cst_21 = arith.constant dense<0xFF800000> : vector<1x8xf32>
    %58 = vector.multi_reduction <maximumf>, %57, %cst_21 [2] : vector<1x8x8xf32> to vector<1x8xf32>
    %59 = vector.shape_cast %58 : vector<1x8xf32> to vector<1x8x1xf32>
    %60 = vector.broadcast %59 : vector<1x8x1xf32> to vector<1x8x8xf32>
    %61 = arith.subf %57, %60 : vector<1x8x8xf32>
    %62 = math.exp %61 : vector<1x8x8xf32>
    %cst_22 = arith.constant dense<0.000000e+00> : vector<1x8xf32>
    %63 = vector.multi_reduction <add>, %62, %cst_22 [2] : vector<1x8x8xf32> to vector<1x8xf32>
    %64 = vector.shape_cast %63 : vector<1x8xf32> to vector<1x8x1xf32>
    %65 = tpu.reciprocal %64 {approx = true} : vector<1x8x1xf32> -> vector<1x8x1xf32>
    %66 = vector.broadcast %65 : vector<1x8x1xf32> to vector<1x8x8xf32>
    %67 = arith.mulf %62, %66 : vector<1x8x8xf32>
    %68 = arith.truncf %67 : vector<1x8x8xf32> to vector<1x8x8xbf16>
    "tpu.trace_start"() <{level = 10 : i32, message = "bts,bsd->btd"}> : () -> ()
    %cst_23 = arith.constant dense<0.000000e+00> : vector<1x8x8xf32>
    %69 = tpu.matmul %68, %55, %cst_23 {dimension_numbers = #tpu.dot_dimension_numbers<[2], [1], [1], [2], [0, 0, 0, 1, 1, 2], [0], [0]>} : vector<1x8x8xbf16>, vector<1x8x8xbf16>, vector<1x8x8xf32> -> vector<1x8x8xf32>
    "tpu.trace_stop"() : () -> ()
    %c0_24 = arith.constant 0 : index
    %c0_25 = arith.constant 0 : index
    %c0_26 = arith.constant 0 : index
    %70 = vector.load %arg18[%c0_24, %c0_25, %c0_26] : memref<1x8x32xf32, #tpu.memory_space<vmem>>, vector<1x8x8xf32>
    tpu.vector_store %arg18[%c0_24, %c0_25, %c0_26], %69 {strides = array<i32>} : memref<1x8x32xf32, #tpu.memory_space<vmem>>, vector<1x8x8xf32>,
    %71 = vector.extract_strided_slice %46 {offsets = [0, 0, 8], sizes = [1, 8, 8], strides = [1, 1, 1]} : vector<1x8x32xbf16> to vector<1x8x8xbf16>
    %72 = vector.extract_strided_slice %49 {offsets = [0, 0, 8], sizes = [1, 8, 8], strides = [1, 1, 1]} : vector<1x8x32xbf16> to vector<1x8x8xbf16>
    %73 = vector.extract_strided_slice %52 {offsets = [0, 0, 8], sizes = [1, 8, 8], strides = [1, 1, 1]} : vector<1x8x32xbf16> to vector<1x8x8xbf16>
    "tpu.trace_start"() <{level = 10 : i32, message = "btd,bsd->bts"}> : () -> ()
    %cst_27 = arith.constant dense<0.000000e+00> : vector<1x8x8xf32>
    %74 = tpu.matmul %71, %72, %cst_27 {dimension_numbers = #tpu.dot_dimension_numbers<[2], [2], [1], [1], [0, 0, 0, 1, 1, 1], [0], [0]>} : vector<1x8x8xbf16>, vector<1x8x8xbf16>, vector<1x8x8xf32> -> vector<1x8x8xf32>
    "tpu.trace_stop"() : () -> ()
    %75 = arith.addf %74, %11 : vector<1x8x8xf32>
    %cst_28 = arith.constant dense<0xFF800000> : vector<1x8xf32>
    %76 = vector.multi_reduction <maximumf>, %75, %cst_28 [2] : vector<1x8x8xf32> to vector<1x8xf32>
    %77 = vector.shape_cast %76 : vector<1x8xf32> to vector<1x8x1xf32>
    %78 = vector.broadcast %77 : vector<1x8x1xf32> to vector<1x8x8xf32>
    %79 = arith.subf %75, %78 : vector<1x8x8xf32>
    %80 = math.exp %79 : vector<1x8x8xf32>
    %cst_29 = arith.constant dense<0.000000e+00> : vector<1x8xf32>
    %81 = vector.multi_reduction <add>, %80, %cst_29 [2] : vector<1x8x8xf32> to vector<1x8xf32>
    %82 = vector.shape_cast %81 : vector<1x8xf32> to vector<1x8x1xf32>
    %83 = tpu.reciprocal %82 {approx = true} : vector<1x8x1xf32> -> vector<1x8x1xf32>
    %84 = vector.broadcast %83 : vector<1x8x1xf32> to vector<1x8x8xf32>
    %85 = arith.mulf %80, %84 : vector<1x8x8xf32>
    %86 = arith.truncf %85 : vector<1x8x8xf32> to vector<1x8x8xbf16>
    "tpu.trace_start"() <{level = 10 : i32, message = "bts,bsd->btd"}> : () -> ()
    %cst_30 = arith.constant dense<0.000000e+00> : vector<1x8x8xf32>
    %87 = tpu.matmul %86, %73, %cst_30 {dimension_numbers = #tpu.dot_dimension_numbers<[2], [1], [1], [2], [0, 0, 0, 1, 1, 2], [0], [0]>} : vector<1x8x8xbf16>, vector<1x8x8xbf16>, vector<1x8x8xf32> -> vector<1x8x8xf32>
    "tpu.trace_stop"() : () -> ()
    %c0_31 = arith.constant 0 : index
    %c0_32 = arith.constant 0 : index
    %c8 = arith.constant 8 : index
    %88 = vector.load %arg18[%c0_31, %c0_32, %c8] : memref<1x8x32xf32, #tpu.memory_space<vmem>>, vector<1x8x8xf32>
    tpu.vector_store %arg18[%c0_31, %c0_32, %c8], %87 {strides = array<i32>} : memref<1x8x32xf32, #tpu.memory_space<vmem>>, vector<1x8x8xf32>,
    %89 = vector.extract_strided_slice %46 {offsets = [0, 0, 16], sizes = [1, 8, 8], strides = [1, 1, 1]} : vector<1x8x32xbf16> to vector<1x8x8xbf16>
    %90 = vector.extract_strided_slice %49 {offsets = [0, 0, 16], sizes = [1, 8, 8], strides = [1, 1, 1]} : vector<1x8x32xbf16> to vector<1x8x8xbf16>
    %91 = vector.extract_strided_slice %52 {offsets = [0, 0, 16], sizes = [1, 8, 8], strides = [1, 1, 1]} : vector<1x8x32xbf16> to vector<1x8x8xbf16>
    "tpu.trace_start"() <{level = 10 : i32, message = "btd,bsd->bts"}> : () -> ()
    %cst_33 = arith.constant dense<0.000000e+00> : vector<1x8x8xf32>
    %92 = tpu.matmul %89, %90, %cst_33 {dimension_numbers = #tpu.dot_dimension_numbers<[2], [2], [1], [1], [0, 0, 0, 1, 1, 1], [0], [0]>} : vector<1x8x8xbf16>, vector<1x8x8xbf16>, vector<1x8x8xf32> -> vector<1x8x8xf32>
    "tpu.trace_stop"() : () -> ()
    %93 = arith.addf %92, %11 : vector<1x8x8xf32>
    %cst_34 = arith.constant dense<0xFF800000> : vector<1x8xf32>
    %94 = vector.multi_reduction <maximumf>, %93, %cst_34 [2] : vector<1x8x8xf32> to vector<1x8xf32>
    %95 = vector.shape_cast %94 : vector<1x8xf32> to vector<1x8x1xf32>
    %96 = vector.broadcast %95 : vector<1x8x1xf32> to vector<1x8x8xf32>
    %97 = arith.subf %93, %96 : vector<1x8x8xf32>
    %98 = math.exp %97 : vector<1x8x8xf32>
    %cst_35 = arith.constant dense<0.000000e+00> : vector<1x8xf32>
    %99 = vector.multi_reduction <add>, %98, %cst_35 [2] : vector<1x8x8xf32> to vector<1x8xf32>
    %100 = vector.shape_cast %99 : vector<1x8xf32> to vector<1x8x1xf32>
    %101 = tpu.reciprocal %100 {approx = true} : vector<1x8x1xf32> -> vector<1x8x1xf32>
    %102 = vector.broadcast %101 : vector<1x8x1xf32> to vector<1x8x8xf32>
    %103 = arith.mulf %98, %102 : vector<1x8x8xf32>
    %104 = arith.truncf %103 : vector<1x8x8xf32> to vector<1x8x8xbf16>
    "tpu.trace_start"() <{level = 10 : i32, message = "bts,bsd->btd"}> : () -> ()
    %cst_36 = arith.constant dense<0.000000e+00> : vector<1x8x8xf32>
    %105 = tpu.matmul %104, %91, %cst_36 {dimension_numbers = #tpu.dot_dimension_numbers<[2], [1], [1], [2], [0, 0, 0, 1, 1, 2], [0], [0]>} : vector<1x8x8xbf16>, vector<1x8x8xbf16>, vector<1x8x8xf32> -> vector<1x8x8xf32>
    "tpu.trace_stop"() : () -> ()
    %c0_37 = arith.constant 0 : index
    %c0_38 = arith.constant 0 : index
    %c16 = arith.constant 16 : index
    %106 = vector.load %arg18[%c0_37, %c0_38, %c16] : memref<1x8x32xf32, #tpu.memory_space<vmem>>, vector<1x8x8xf32>
    tpu.vector_store %arg18[%c0_37, %c0_38, %c16], %105 {strides = array<i32>} : memref<1x8x32xf32, #tpu.memory_space<vmem>>, vector<1x8x8xf32>,
    %107 = vector.extract_strided_slice %46 {offsets = [0, 0, 24], sizes = [1, 8, 8], strides = [1, 1, 1]} : vector<1x8x32xbf16> to vector<1x8x8xbf16>
    %108 = vector.extract_strided_slice %49 {offsets = [0, 0, 24], sizes = [1, 8, 8], strides = [1, 1, 1]} : vector<1x8x32xbf16> to vector<1x8x8xbf16>
    %109 = vector.extract_strided_slice %52 {offsets = [0, 0, 24], sizes = [1, 8, 8], strides = [1, 1, 1]} : vector<1x8x32xbf16> to vector<1x8x8xbf16>
    "tpu.trace_start"() <{level = 10 : i32, message = "btd,bsd->bts"}> : () -> ()
    %cst_39 = arith.constant dense<0.000000e+00> : vector<1x8x8xf32>
    %110 = tpu.matmul %107, %108, %cst_39 {dimension_numbers = #tpu.dot_dimension_numbers<[2], [2], [1], [1], [0, 0, 0, 1, 1, 1], [0], [0]>} : vector<1x8x8xbf16>, vector<1x8x8xbf16>, vector<1x8x8xf32> -> vector<1x8x8xf32>
    "tpu.trace_stop"() : () -> ()
    %111 = arith.addf %110, %11 : vector<1x8x8xf32>
    %cst_40 = arith.constant dense<0xFF800000> : vector<1x8xf32>
    %112 = vector.multi_reduction <maximumf>, %111, %cst_40 [2] : vector<1x8x8xf32> to vector<1x8xf32>
    %113 = vector.shape_cast %112 : vector<1x8xf32> to vector<1x8x1xf32>
    %114 = vector.broadcast %113 : vector<1x8x1xf32> to vector<1x8x8xf32>
    %115 = arith.subf %111, %114 : vector<1x8x8xf32>
    %116 = math.exp %115 : vector<1x8x8xf32>
    %cst_41 = arith.constant dense<0.000000e+00> : vector<1x8xf32>
    %117 = vector.multi_reduction <add>, %116, %cst_41 [2] : vector<1x8x8xf32> to vector<1x8xf32>
    %118 = vector.shape_cast %117 : vector<1x8xf32> to vector<1x8x1xf32>
    %119 = tpu.reciprocal %118 {approx = true} : vector<1x8x1xf32> -> vector<1x8x1xf32>
    %120 = vector.broadcast %119 : vector<1x8x1xf32> to vector<1x8x8xf32>
    %121 = arith.mulf %116, %120 : vector<1x8x8xf32>
    %122 = arith.truncf %121 : vector<1x8x8xf32> to vector<1x8x8xbf16>
    "tpu.trace_start"() <{level = 10 : i32, message = "bts,bsd->btd"}> : () -> ()
    %cst_42 = arith.constant dense<0.000000e+00> : vector<1x8x8xf32>
    %123 = tpu.matmul %122, %109, %cst_42 {dimension_numbers = #tpu.dot_dimension_numbers<[2], [1], [1], [2], [0, 0, 0, 1, 1, 2], [0], [0]>} : vector<1x8x8xbf16>, vector<1x8x8xbf16>, vector<1x8x8xf32> -> vector<1x8x8xf32>
    "tpu.trace_stop"() : () -> ()
    %c0_43 = arith.constant 0 : index
    %c0_44 = arith.constant 0 : index
    %c24 = arith.constant 24 : index
    %124 = vector.load %arg18[%c0_43, %c0_44, %c24] : memref<1x8x32xf32, #tpu.memory_space<vmem>>, vector<1x8x8xf32>
    tpu.vector_store %arg18[%c0_43, %c0_44, %c24], %123 {strides = array<i32>} : memref<1x8x32xf32, #tpu.memory_space<vmem>>, vector<1x8x8xf32>,
    %c0_45 = arith.constant 0 : index
    %c0_46 = arith.constant 0 : index
    %c0_47 = arith.constant 0 : index
    %125 = vector.load %arg18[%c0_45, %c0_46, %c0_47] : memref<1x8x32xf32, #tpu.memory_space<vmem>>, vector<1x8x32xf32>
    %126 = vector.shape_cast %125 : vector<1x8x32xf32> to vector<8x32xf32>
    %127 = arith.truncf %126 : vector<8x32xf32> to vector<8x32xbf16>
    %c0_48 = arith.constant 0 : index
    %c0_49 = arith.constant 0 : index
    %128 = vector.load %arg7[%c0_48, %c0_49] : memref<32x32xbf16, #tpu.memory_space<vmem>>, vector<32x32xbf16>
    %cst_50 = arith.constant dense<0.000000e+00> : vector<8x32xf32>
    %129 = tpu.matmul %127, %128, %cst_50 {dimension_numbers = #tpu.dot_dimension_numbers<[1], [0], [0], [1], [0, 0, 1, 1], [], []>} : vector<8x32xbf16>, vector<32x32xbf16>, vector<8x32xf32> -> vector<8x32xf32>
    %c0_51 = arith.constant 0 : index
    %c0_52 = arith.constant 0 : index
    %130 = vector.load %arg8[%c0_51, %c0_52] : memref<1x32xf32, #tpu.memory_space<vmem>>, vector<1x32xf32>
    %131 = vector.broadcast %130 : vector<1x32xf32> to vector<8x32xf32>
    %132 = arith.addf %129, %131 : vector<8x32xf32>
    %133 = arith.addf %1, %132 : vector<8x32xf32>
    %c0_53 = arith.constant 0 : index
    %c0_54 = arith.constant 0 : index
    %134 = vector.load %arg9[%c0_53, %c0_54] : memref<1x32xf32, #tpu.memory_space<vmem>>, vector<1x32xf32>
    %c0_55 = arith.constant 0 : index
    %c0_56 = arith.constant 0 : index
    %135 = vector.load %arg10[%c0_55, %c0_56] : memref<1x32xf32, #tpu.memory_space<vmem>>, vector<1x32xf32>
    %cst_57 = arith.constant dense<0.000000e+00> : vector<8xf32>
    %136 = vector.multi_reduction <add>, %133, %cst_57 [1] : vector<8x32xf32> to vector<8xf32>
    %137 = vector.shape_cast %136 : vector<8xf32> to vector<8x1xf32>
    %cst_58 = arith.constant 3.200000e+01 : f32
    %138 = vector.broadcast %cst_58 : f32 to vector<8x1xf32>
    %139 = arith.divf %137, %138 : vector<8x1xf32>
    %140 = vector.broadcast %139 : vector<8x1xf32> to vector<8x32xf32>
    %141 = arith.subf %133, %140 : vector<8x32xf32>
    %142 = vector.broadcast %139 : vector<8x1xf32> to vector<8x32xf32>
    %143 = arith.subf %133, %142 : vector<8x32xf32>
    %144 = arith.mulf %141, %143 : vector<8x32xf32>
    %cst_59 = arith.constant dense<0.000000e+00> : vector<8xf32>
    %145 = vector.multi_reduction <add>, %144, %cst_59 [1] : vector<8x32xf32> to vector<8xf32>
    %146 = vector.shape_cast %145 : vector<8xf32> to vector<8x1xf32>
    %cst_60 = arith.constant 3.200000e+01 : f32
    %147 = vector.broadcast %cst_60 : f32 to vector<8x1xf32>
    %148 = arith.divf %146, %147 : vector<8x1xf32>
    %149 = vector.broadcast %139 : vector<8x1xf32> to vector<8x32xf32>
    %150 = arith.subf %133, %149 : vector<8x32xf32>
    %cst_61 = arith.constant 9.99999974E-6 : f32
    %151 = vector.broadcast %cst_61 : f32 to vector<8x1xf32>
    %152 = arith.addf %148, %151 : vector<8x1xf32>
    %153 = math.rsqrt %152 : vector<8x1xf32>
    %154 = vector.broadcast %153 : vector<8x1xf32> to vector<8x32xf32>
    %155 = arith.mulf %150, %154 : vector<8x32xf32>
    %156 = vector.broadcast %134 : vector<1x32xf32> to vector<8x32xf32>
    %157 = arith.mulf %155, %156 : vector<8x32xf32>
    %158 = vector.broadcast %135 : vector<1x32xf32> to vector<8x32xf32>
    %159 = arith.addf %157, %158 : vector<8x32xf32>
    %160 = arith.truncf %159 : vector<8x32xf32> to vector<8x32xbf16>
    %c0_62 = arith.constant 0 : index
    %c0_63 = arith.constant 0 : index
    %161 = vector.load %arg11[%c0_62, %c0_63] : memref<32x64xbf16, #tpu.memory_space<vmem>>, vector<32x64xbf16>
    %cst_64 = arith.constant dense<0.000000e+00> : vector<8x64xf32>
    %162 = tpu.matmul %160, %161, %cst_64 {dimension_numbers = #tpu.dot_dimension_numbers<[1], [0], [0], [1], [0, 0, 1, 1], [], []>} : vector<8x32xbf16>, vector<32x64xbf16>, vector<8x64xf32> -> vector<8x64xf32>
    %c0_65 = arith.constant 0 : index
    %c0_66 = arith.constant 0 : index
    %163 = vector.load %arg12[%c0_65, %c0_66] : memref<1x64xf32, #tpu.memory_space<vmem>>, vector<1x64xf32>
    %164 = vector.broadcast %163 : vector<1x64xf32> to vector<8x64xf32>
    %165 = arith.addf %162, %164 : vector<8x64xf32>
    %cst_67 = arith.constant 0.000000e+00 : f32
    %166 = vector.broadcast %cst_67 : f32 to vector<8x64xf32>
    %167 = arith.maximumf %165, %166 : vector<8x64xf32>
    %168 = arith.truncf %167 : vector<8x64xf32> to vector<8x64xbf16>
    %c0_68 = arith.constant 0 : index
    %c0_69 = arith.constant 0 : index
    %169 = vector.load %arg13[%c0_68, %c0_69] : memref<64x32xbf16, #tpu.memory_space<vmem>>, vector<64x32xbf16>
    %cst_70 = arith.constant dense<0.000000e+00> : vector<8x32xf32>
    %170 = tpu.matmul %168, %169, %cst_70 {dimension_numbers = #tpu.dot_dimension_numbers<[1], [0], [0], [1], [0, 0, 1, 1], [], []>} : vector<8x64xbf16>, vector<64x32xbf16>, vector<8x32xf32> -> vector<8x32xf32>
    %c0_71 = arith.constant 0 : index
    %c0_72 = arith.constant 0 : index
    %171 = vector.load %arg14[%c0_71, %c0_72] : memref<1x32xf32, #tpu.memory_space<vmem>>, vector<1x32xf32>
    %172 = vector.broadcast %171 : vector<1x32xf32> to vector<8x32xf32>
    %173 = arith.addf %170, %172 : vector<8x32xf32>
    %174 = arith.addf %133, %173 : vector<8x32xf32>
    %c0_73 = arith.constant 0 : index
    %c0_74 = arith.constant 0 : index
    %175 = vector.load %arg15[%c0_73, %c0_74] : memref<1x32xf32, #tpu.memory_space<vmem>>, vector<1x32xf32>
    %c0_75 = arith.constant 0 : index
    %c0_76 = arith.constant 0 : index
    %176 = vector.load %arg16[%c0_75, %c0_76] : memref<1x32xf32, #tpu.memory_space<vmem>>, vector<1x32xf32>
    %cst_77 = arith.constant dense<0.000000e+00> : vector<8xf32>
    %177 = vector.multi_reduction <add>, %174, %cst_77 [1] : vector<8x32xf32> to vector<8xf32>
    %178 = vector.shape_cast %177 : vector<8xf32> to vector<8x1xf32>
    %cst_78 = arith.constant 3.200000e+01 : f32
    %179 = vector.broadcast %cst_78 : f32 to vector<8x1xf32>
    %180 = arith.divf %178, %179 : vector<8x1xf32>
    %181 = vector.broadcast %180 : vector<8x1xf32> to vector<8x32xf32>
    %182 = arith.subf %174, %181 : vector<8x32xf32>
    %183 = vector.broadcast %180 : vector<8x1xf32> to vector<8x32xf32>
    %184 = arith.subf %174, %183 : vector<8x32xf32>
    %185 = arith.mulf %182, %184 : vector<8x32xf32>
    %cst_79 = arith.constant dense<0.000000e+00> : vector<8xf32>
    %186 = vector.multi_reduction <add>, %185, %cst_79 [1] : vector<8x32xf32> to vector<8xf32>
    %187 = vector.shape_cast %186 : vector<8xf32> to vector<8x1xf32>
    %cst_80 = arith.constant 3.200000e+01 : f32
    %188 = vector.broadcast %cst_80 : f32 to vector<8x1xf32>
    %189 = arith.divf %187, %188 : vector<8x1xf32>
    %190 = vector.broadcast %180 : vector<8x1xf32> to vector<8x32xf32>
    %191 = arith.subf %174, %190 : vector<8x32xf32>
    %cst_81 = arith.constant 9.99999974E-6 : f32
    %192 = vector.broadcast %cst_81 : f32 to vector<8x1xf32>
    %193 = arith.addf %189, %192 : vector<8x1xf32>
    %194 = math.rsqrt %193 : vector<8x1xf32>
    %195 = vector.broadcast %194 : vector<8x1xf32> to vector<8x32xf32>
    %196 = arith.mulf %191, %195 : vector<8x32xf32>
    %197 = vector.broadcast %175 : vector<1x32xf32> to vector<8x32xf32>
    %198 = arith.mulf %196, %197 : vector<8x32xf32>
    %199 = vector.broadcast %176 : vector<1x32xf32> to vector<8x32xf32>
    %200 = arith.addf %198, %199 : vector<8x32xf32>
    %201 = vector.shape_cast %200 : vector<8x32xf32> to vector<1x8x32xf32>
    %c0_82 = arith.constant 0 : index
    %c0_83 = arith.constant 0 : index
    %c0_84 = arith.constant 0 : index
    %202 = vector.load %arg17[%c0_82, %c0_83, %c0_84] : memref<1x8x32xf32, #tpu.memory_space<vmem>>, vector<1x8x32xf32>
    tpu.vector_store %arg17[%c0_82, %c0_83, %c0_84], %201 {strides = array<i32>} : memref<1x8x32xf32, #tpu.memory_space<vmem>>, vector<1x8x32xf32>,
    return
  }
  func.func @transform_0(%arg0: i32) -> (i32, i32, i32) {
    %c0_i32 = arith.constant 0 : i32
    %c0_i32_0 = arith.constant 0 : i32
    %c0_i32_1 = arith.constant 0 : i32
    return %arg0, %c0_i32, %c0_i32_0 : i32, i32, i32
  }
  func.func @transform_1(%arg0: i32) -> (i32, i32, i32) {
    %c0_i32 = arith.constant 0 : i32
    %c0_i32_0 = arith.constant 0 : i32
    %c0_i32_1 = arith.constant 0 : i32
    return %arg0, %c0_i32, %c0_i32_0 : i32, i32, i32
  }
  func.func @transform_2(%arg0: i32) -> (i32, i32) {
    %c0_i32 = arith.constant 0 : i32
    %c0_i32_0 = arith.constant 0 : i32
    %c0_i32_1 = arith.constant 0 : i32
    return %c0_i32, %c0_i32_0 : i32, i32
  }
  func.func @transform_3(%arg0: i32) -> (i32, i32) {
    %c0_i32 = arith.constant 0 : i32
    %c0_i32_0 = arith.constant 0 : i32
    %c0_i32_1 = arith.constant 0 : i32
    return %c0_i32, %c0_i32_0 : i32, i32
  }
  func.func @transform_4(%arg0: i32) -> (i32, i32) {
    %c0_i32 = arith.constant 0 : i32
    %c0_i32_0 = arith.constant 0 : i32
    %c0_i32_1 = arith.constant 0 : i32
    return %c0_i32, %c0_i32_0 : i32, i32
  }
  func.func @transform_5(%arg0: i32) -> (i32, i32) {
    %c0_i32 = arith.constant 0 : i32
    %c0_i32_0 = arith.constant 0 : i32
    %c0_i32_1 = arith.constant 0 : i32
    return %c0_i32, %c0_i32_0 : i32, i32
  }
  func.func @transform_6(%arg0: i32) -> (i32, i32) {
    %c0_i32 = arith.constant 0 : i32
    %c0_i32_0 = arith.constant 0 : i32
    %c0_i32_1 = arith.constant 0 : i32
    return %c0_i32, %c0_i32_0 : i32, i32
  }
  func.func @transform_7(%arg0: i32) -> (i32, i32) {
    %c0_i32 = arith.constant 0 : i32
    %c0_i32_0 = arith.constant 0 : i32
    %c0_i32_1 = arith.constant 0 : i32
    return %c0_i32, %c0_i32_0 : i32, i32
  }
  func.func @transform_8(%arg0: i32) -> (i32, i32) {
    %c0_i32 = arith.constant 0 : i32
    %c0_i32_0 = arith.constant 0 : i32
    %c0_i32_1 = arith.constant 0 : i32
    return %c0_i32, %c0_i32_0 : i32, i32
  }
  func.func @transform_9(%arg0: i32) -> (i32, i32) {
    %c0_i32 = arith.constant 0 : i32
    %c0_i32_0 = arith.constant 0 : i32
    %c0_i32_1 = arith.constant 0 : i32
    return %c0_i32, %c0_i32_0 : i32, i32
  }
  func.func @transform_10(%arg0: i32) -> (i32, i32) {
    %c0_i32 = arith.constant 0 : i32
    %c0_i32_0 = arith.constant 0 : i32
    %c0_i32_1 = arith.constant 0 : i32
    return %c0_i32, %c0_i32_0 : i32, i32
  }
  func.func @transform_11(%arg0: i32) -> (i32, i32) {
    %c0_i32 = arith.constant 0 : i32
    %c0_i32_0 = arith.constant 0 : i32
    %c0_i32_1 = arith.constant 0 : i32
    return %c0_i32, %c0_i32_0 : i32, i32
  }
  func.func @transform_12(%arg0: i32) -> (i32, i32) {
    %c0_i32 = arith.constant 0 : i32
    %c0_i32_0 = arith.constant 0 : i32
    %c0_i32_1 = arith.constant 0 : i32
    return %c0_i32, %c0_i32_0 : i32, i32
  }
  func.func @transform_13(%arg0: i32) -> (i32, i32) {
    %c0_i32 = arith.constant 0 : i32
    %c0_i32_0 = arith.constant 0 : i32
    %c0_i32_1 = arith.constant 0 : i32
    return %c0_i32, %c0_i32_0 : i32, i32
  }
  func.func @transform_14(%arg0: i32) -> (i32, i32) {
    %c0_i32 = arith.constant 0 : i32
    %c0_i32_0 = arith.constant 0 : i32
    %c0_i32_1 = arith.constant 0 : i32
    return %c0_i32, %c0_i32_0 : i32, i32
  }
  func.func @transform_15(%arg0: i32) -> (i32, i32) {
    %c0_i32 = arith.constant 0 : i32
    %c0_i32_0 = arith.constant 0 : i32
    %c0_i32_1 = arith.constant 0 : i32
    return %c0_i32, %c0_i32_0 : i32, i32
  }
  func.func @transform_16(%arg0: i32) -> (i32, i32, i32) {
    %c0_i32 = arith.constant 0 : i32
    %c0_i32_0 = arith.constant 0 : i32
    %c0_i32_1 = arith.constant 0 : i32
    return %arg0, %c0_i32, %c0_i32_0 : i32, i32, i32
  }
}

</mosaic_0001>

<llo_original>
// kernel: temporal_transformer_forward.2
$region0: #{temporal_transformer_forward.2}
  #allocation0 [shape = 'u32[]', space=smem, size = 0x4, offset = 0x4, fixed_abs, tag = 'smem constant byte address 0x4 - core index']
  #allocation1 [shape = 'u32[144,128]{1,0:T(1,128)}', space=vmem, size = 0x12000, scoped, tag = 'internal scratch']
  #allocation2 [shape = 'f32[1,8,32]{2,1,0:T(8,128)}', space=vmem, size = 0x1000, scoped, tag = 'scratch operand']
  %s0 = inlined_call_operand.hbm [shape: f32[2,8,32], index: 0, kind: input, shape index: {}]
  %s1 = inlined_call_operand.hbm [shape: f32[2,1,8], index: 1, kind: input, shape index: {}]
  %s2 = inlined_call_operand.hbm [shape: f32[1,32], index: 2, kind: input, shape index: {}]
  %s3 = inlined_call_operand.hbm [shape: f32[1,32], index: 3, kind: input, shape index: {}]
  %s4 = inlined_call_operand.hbm [shape: bf16[32,96], index: 4, kind: input, shape index: {}]
  %s5 = inlined_call_operand.hbm [shape: f32[1,96], index: 5, kind: input, shape index: {}]
  %s6 = inlined_call_operand.hbm [shape: bf16[32,32], index: 6, kind: input, shape index: {}]
  %s7 = inlined_call_operand.hbm [shape: f32[1,32], index: 7, kind: input, shape index: {}]
  %s8 = inlined_call_operand.hbm [shape: f32[1,32], index: 8, kind: input, shape index: {}]
  %s9 = inlined_call_operand.hbm [shape: f32[1,32], index: 9, kind: input, shape index: {}]
  %s10 = inlined_call_operand.hbm [shape: bf16[32,64], index: 10, kind: input, shape index: {}]
  %s11 = inlined_call_operand.hbm [shape: f32[1,64], index: 11, kind: input, shape index: {}]
  %s12 = inlined_call_operand.hbm [shape: bf16[64,32], index: 12, kind: input, shape index: {}]
  %s13 = inlined_call_operand.hbm [shape: f32[1,32], index: 13, kind: input, shape index: {}]
  %s14 = inlined_call_operand.hbm [shape: f32[1,32], index: 14, kind: input, shape index: {}]
  %s15 = inlined_call_operand.hbm [shape: f32[1,32], index: 15, kind: input, shape index: {}]
  %s16 = inlined_call_operand.hbm [shape: f32[2,8,32], index: 16, kind: output, shape index: {}]
  %s17 = sld [smem:[#allocation0]]
  $region161: #{temporal_transformer_forward.2} parent=0
    _
  %s19 = ssub.s32 1, %s17
  %s20 = scalar_select 0, %s19, %s17
  $region1: #{temporal_transformer_forward.2} parent=0
    #allocation3 [shape = 'u8[8192]{0}', space=vmem, size = 0x2000, scoped, tag = 'input window, operand 0']
    #allocation4 [shape = 's32[2]{0}', space=sflag, size = 0x8, scoped, tag = 'scoped memory for temporal_transformer_forward.2']
    #allocation5 [shape = 's32[2]{0}', space=sflag, size = 0x8, scoped, tag = 'scoped memory for temporal_transformer_forward.2']
    #allocation6 [shape = 'u8[1024]{0}', space=vmem, size = 0x400, scoped, tag = 'input window, operand 1']
    #allocation7 [shape = 's32[2]{0}', space=sflag, size = 0x8, scoped, tag = 'scoped memory for temporal_transformer_forward.2']
    #allocation8 [shape = 'u8[512]{0}', space=vmem, size = 0x400, scoped, tag = 'input window, operand 2, single buffered']
    #allocation9 [shape = 'u8[512]{0}', space=vmem, size = 0x400, scoped, tag = 'input window, operand 3, single buffered']
    #allocation10 [shape = 's32[1]{0}', space=sflag, size = 0x4, scoped, tag = 'scoped memory for temporal_transformer_forward.2']
    #allocation11 [shape = 'u8[8192]{0}', space=vmem, size = 0x2000, scoped, tag = 'input window, operand 4, single buffered']
    #allocation12 [shape = 'u8[512]{0}', space=vmem, size = 0x400, scoped, tag = 'input window, operand 5, single buffered']
    #allocation13 [shape = 's32[1]{0}', space=sflag, size = 0x4, scoped, tag = 'scoped memory for temporal_transformer_forward.2']
    #allocation14 [shape = 'u8[8192]{0}', space=vmem, size = 0x2000, scoped, tag = 'input window, operand 6, single buffered']
    #allocation15 [shape = 'u8[512]{0}', space=vmem, size = 0x400, scoped, tag = 'input window, operand 7, single buffered']
    #allocation16 [shape = 's32[1]{0}', space=sflag, size = 0x4, scoped, tag = 'scoped memory for temporal_transformer_forward.2']
    #allocation17 [shape = 'u8[512]{0}', space=vmem, size = 0x400, scoped, tag = 'input window, operand 8, single buffered']
    #allocation18 [shape = 'u8[512]{0}', space=vmem, size = 0x400, scoped, tag = 'input window, operand 9, single buffered']
    #allocation19 [shape = 's32[1]{0}', space=sflag, size = 0x4, scoped, tag = 'scoped memory for temporal_transformer_forward.2']
    #allocation20 [shape = 'u8[8192]{0}', space=vmem, size = 0x2000, scoped, tag = 'input window, operand 10, single buffered']
    #allocation21 [shape = 'u8[512]{0}', space=vmem, size = 0x400, scoped, tag = 'input window, operand 11, single buffered']
    #allocation22 [shape = 's32[1]{0}', space=sflag, size = 0x4, scoped, tag = 'scoped memory for temporal_transformer_forward.2']
    #allocation23 [shape = 'u8[16384]{0}', space=vmem, size = 0x4000, scoped, tag = 'input window, operand 12, single buffered']
    #allocation24 [shape = 'u8[512]{0}', space=vmem, size = 0x400, scoped, tag = 'input window, operand 13, single buffered']
    #allocation25 [shape = 's32[1]{0}', space=sflag, size = 0x4, scoped, tag = 'scoped memory for temporal_transformer_forward.2']
    #allocation26 [shape = 'u8[512]{0}', space=vmem, size = 0x400, scoped, tag = 'input window, operand 14, single buffered']
    #allocation27 [shape = 'u8[512]{0}', space=vmem, size = 0x400, scoped, tag = 'input window, operand 15, single buffered']
    #allocation28 [shape = 's32[1]{0}', space=sflag, size = 0x4, scoped, tag = 'scoped memory for temporal_transformer_forward.2']
    #allocation29 [shape = 'u8[8192]{0}', space=vmem, size = 0x2000, scoped, tag = 'output window, operand 0']
    %21 = vsyncpa [#allocation4], 0
    %s22 = scalar_lea.sflag [#allocation4], 1
    %23 = vsyncpa %s22, 0
    %24 = vsyncpa [#allocation7], 0
    %s25 = scalar_lea.sflag [#allocation7], 1
    %26 = vsyncpa %s25, 0
    %27 = vsyncpa [#allocation10], 0
    %28 = vsyncpa [#allocation13], 0
    %29 = vsyncpa [#allocation16], 0
    %30 = vsyncpa [#allocation19], 0
    %31 = vsyncpa [#allocation22], 0
    %32 = vsyncpa [#allocation25], 0
    %33 = vsyncpa [#allocation28], 0
    %34 = vsyncpa [#allocation5], 0
    %s35 = scalar_lea.sflag [#allocation5], 1
    %36 = vsyncpa %s35, 0
    loop: start=0, step=1, limit=4
    $region2: #{temporal_transformer_forward.2} parent=1 // loop_pre_header
      _
    $region3: #{temporal_transformer_forward.2} parent=1 // loop_header
      %s38 = sphi 0, %s42
      %p39 = scmp.ge.s32.totalorder %s38, 4
      %s48 = sphi 0, %s50
      %s51 = sphi 0, %s48
      %s52 = sphi 0, %s51
      %s68 = sphi 0, %s52
      %s74 = sphi 0, %s76
      %s77 = sphi 0, %s74
      %s78 = sphi 0, %s77
      %s94 = sphi 0, %s78
      %s98 = sphi 0, %s98
      %s100 = sphi 0, %s98
      %s101 = sphi 0, %s100
      %s115 = sphi 0, %s101
      %s119 = sphi 0, %s119
      %s121 = sphi 0, %s119
      %s122 = sphi 0, %s121
      %s136 = sphi 0, %s122
      %s140 = sphi 0, %s140
      %s142 = sphi 0, %s140
      %s143 = sphi 0, %s142
      %s157 = sphi 0, %s143
      %s161 = sphi 0, %s161
      %s163 = sphi 0, %s161
      %s164 = sphi 0, %s163
      %s178 = sphi 0, %s164
      %s182 = sphi 0, %s182
      %s184 = sphi 0, %s182
      %s185 = sphi 0, %s184
      %s199 = sphi 0, %s185
      %s203 = sphi 0, %s203
      %s205 = sphi 0, %s203
      %s206 = sphi 0, %s205
      %s220 = sphi 0, %s206
      %s224 = sphi 0, %s224
      %s226 = sphi 0, %s224
      %s227 = sphi 0, %s226
      %s241 = sphi 0, %s227
      %s245 = sphi 0, %s245
      %s247 = sphi 0, %s245
      %s248 = sphi 0, %s247
      %s262 = sphi 0, %s248
      %s266 = sphi 0, %s266
      %s268 = sphi 0, %s266
      %s269 = sphi 0, %s268
      %s283 = sphi 0, %s269
      %s287 = sphi 0, %s287
      %s289 = sphi 0, %s287
      %s290 = sphi 0, %s289
      %s304 = sphi 0, %s290
      %s308 = sphi 0, %s308
      %s310 = sphi 0, %s308
      %s311 = sphi 0, %s310
      %s325 = sphi 0, %s311
      %s329 = sphi 0, %s329
      %s331 = sphi 0, %s329
      %s332 = sphi 0, %s331
      %s346 = sphi 0, %s332
      %s350 = sphi 0, %s350
      %s352 = sphi 0, %s350
      %s353 = sphi 0, %s352
      %s367 = sphi 0, %s353
      %s371 = sphi 0, %s371
      %s373 = sphi 0, %s371
      %s374 = sphi 0, %s373
      %s388 = sphi 0, %s374
      %s394 = sphi 0, %s396
      %s397 = sphi 0, %s394
      %s398 = sphi 0, %s397
      %s414 = sphi 0, %s398
    $region4: #{temporal_transformer_forward.2} parent=1 // loop_header_branch
      %41 = sbr.rel (%p39) target = $region8
    $region5: #{temporal_transformer_forward.2} parent=1 // loop_body
      %s43 = ssub.s32 %s38, 1
      %s44 = ssub.s32 %s38, 2
      %s45 = sadd.s32 %s38, 1
      %s46 = ssub.s32 %s38, %s45
      %p47 = scmp.eq.s32.totalorder %s46, 0
      %s49 = sadd.s32 %s48, 1
      %s50 = scalar_select %p47, %s48, %s49
      %p53 = pneg %p47
      %p54 = scmp.eq.s32.totalorder %s38, 1
      %p55 = por %p53, %p54
      %p56 = scmp.ne.s32.totalorder %s48, %s51
      %p57 = scmp.eq.s32.totalorder %s38, 0
      %p58 = por %p56, %p57
      %p59 = scmp.ne.s32.totalorder %s48, %s51
      %p60 = scmp.eq.s32.totalorder %s43, 1
      %p61 = por %p59, %p60
      %p62 = scmp.ne.s32.totalorder %s51, %s52
      %p63 = scmp.eq.s32.totalorder %s43, 0
      %p64 = por %p62, %p63
      %p65 = scmp.ne.s32.totalorder %s51, %s52
      %p66 = scmp.eq.s32.totalorder %s44, 1
      %p67 = por %p65, %p66
      %p69 = scmp.ne.s32.totalorder %s52, %s68
      %p70 = scmp.eq.s32.totalorder %s44, 0
      %p71 = por %p69, %p70
      %s72 = ssub.s32 %s38, %s45
      %p73 = scmp.eq.s32.totalorder %s72, 0
      %s75 = sadd.s32 %s74, 1
      %s76 = scalar_select %p73, %s74, %s75
      %p79 = pneg %p73
      %p80 = scmp.eq.s32.totalorder %s38, 1
      %p81 = por %p79, %p80
      %p82 = scmp.ne.s32.totalorder %s74, %s77
      %p83 = scmp.eq.s32.totalorder %s38, 0
      %p84 = por %p82, %p83
      %p85 = scmp.ne.s32.totalorder %s74, %s77
      %p86 = scmp.eq.s32.totalorder %s43, 1
      %p87 = por %p85, %p86
      %p88 = scmp.ne.s32.totalorder %s77, %s78
      %p89 = scmp.eq.s32.totalorder %s43, 0
      %p90 = por %p88, %p89
      %p91 = scmp.ne.s32.totalorder %s77, %s78
      %p92 = scmp.eq.s32.totalorder %s44, 1
      %p93 = por %p91, %p92
      %p95 = scmp.ne.s32.totalorder %s78, %s94
      %p96 = scmp.eq.s32.totalorder %s44, 0
      %p97 = por %p95, %p96
      %s99 = sadd.s32 %s98, 1
      %p102 = scmp.eq.s32.totalorder %s38, 1
      %p103 = scmp.ne.s32.totalorder %s98, %s100
      %p104 = scmp.eq.s32.totalorder %s38, 0
      %p105 = por %p103, %p104
      %p106 = scmp.ne.s32.totalorder %s98, %s100
      %p107 = scmp.eq.s32.totalorder %s43, 1
      %p108 = por %p106, %p107
      %p109 = scmp.ne.s32.totalorder %s100, %s101
      %p110 = scmp.eq.s32.totalorder %s43, 0
      %p111 = por %p109, %p110
      %p112 = scmp.ne.s32.totalorder %s100, %s101
      %p113 = scmp.eq.s32.totalorder %s44, 1
      %p114 = por %p112, %p113
      %p116 = scmp.ne.s32.totalorder %s101, %s115
      %p117 = scmp.eq.s32.totalorder %s44, 0
      %p118 = por %p116, %p117
      %s120 = sadd.s32 %s119, 1
      %p123 = scmp.eq.s32.totalorder %s38, 1
      %p124 = scmp.ne.s32.totalorder %s119, %s121
      %p125 = scmp.eq.s32.totalorder %s38, 0
      %p126 = por %p124, %p125
      %p127 = scmp.ne.s32.totalorder %s119, %s121
      %p128 = scmp.eq.s32.totalorder %s43, 1
      %p129 = por %p127, %p128
      %p130 = scmp.ne.s32.totalorder %s121, %s122
      %p131 = scmp.eq.s32.totalorder %s43, 0
      %p132 = por %p130, %p131
      %p133 = scmp.ne.s32.totalorder %s121, %s122
      %p134 = scmp.eq.s32.totalorder %s44, 1
      %p135 = por %p133, %p134
      %p137 = scmp.ne.s32.totalorder %s122, %s136
      %p138 = scmp.eq.s32.totalorder %s44, 0
      %p139 = por %p137, %p138
      %s141 = sadd.s32 %s140, 1
      %p144 = scmp.eq.s32.totalorder %s38, 1
      %p145 = scmp.ne.s32.totalorder %s140, %s142
      %p146 = scmp.eq.s32.totalorder %s38, 0
      %p147 = por %p145, %p146
      %p148 = scmp.ne.s32.totalorder %s140, %s142
      %p149 = scmp.eq.s32.totalorder %s43, 1
      %p150 = por %p148, %p149
      %p151 = scmp.ne.s32.totalorder %s142, %s143
      %p152 = scmp.eq.s32.totalorder %s43, 0
      %p153 = por %p151, %p152
      %p154 = scmp.ne.s32.totalorder %s142, %s143
      %p155 = scmp.eq.s32.totalorder %s44, 1
      %p156 = por %p154, %p155
      %p158 = scmp.ne.s32.totalorder %s143, %s157
      %p159 = scmp.eq.s32.totalorder %s44, 0
      %p160 = por %p158, %p159
      %s162 = sadd.s32 %s161, 1
      %p165 = scmp.eq.s32.totalorder %s38, 1
      %p166 = scmp.ne.s32.totalorder %s161, %s163
      %p167 = scmp.eq.s32.totalorder %s38, 0
      %p168 = por %p166, %p167
      %p169 = scmp.ne.s32.totalorder %s161, %s163
      %p170 = scmp.eq.s32.totalorder %s43, 1
      %p171 = por %p169, %p170
      %p172 = scmp.ne.s32.totalorder %s163, %s164
      %p173 = scmp.eq.s32.totalorder %s43, 0
      %p174 = por %p172, %p173
      %p175 = scmp.ne.s32.totalorder %s163, %s164
      %p176 = scmp.eq.s32.totalorder %s44, 1
      %p177 = por %p175, %p176
      %p179 = scmp.ne.s32.totalorder %s164, %s178
      %p180 = scmp.eq.s32.totalorder %s44, 0
      %p181 = por %p179, %p180
      %s183 = sadd.s32 %s182, 1
      %p186 = scmp.eq.s32.totalorder %s38, 1
      %p187 = scmp.ne.s32.totalorder %s182, %s184
      %p188 = scmp.eq.s32.totalorder %s38, 0
      %p189 = por %p187, %p188
      %p190 = scmp.ne.s32.totalorder %s182, %s184
      %p191 = scmp.eq.s32.totalorder %s43, 1
      %p192 = por %p190, %p191
      %p193 = scmp.ne.s32.totalorder %s184, %s185
      %p194 = scmp.eq.s32.totalorder %s43, 0
      %p195 = por %p193, %p194
      %p196 = scmp.ne.s32.totalorder %s184, %s185
      %p197 = scmp.eq.s32.totalorder %s44, 1
      %p198 = por %p196, %p197
      %p200 = scmp.ne.s32.totalorder %s185, %s199
      %p201 = scmp.eq.s32.totalorder %s44, 0
      %p202 = por %p200, %p201
      %s204 = sadd.s32 %s203, 1
      %p207 = scmp.eq.s32.totalorder %s38, 1
      %p208 = scmp.ne.s32.totalorder %s203, %s205
      %p209 = scmp.eq.s32.totalorder %s38, 0
      %p210 = por %p208, %p209
      %p211 = scmp.ne.s32.totalorder %s203, %s205
      %p212 = scmp.eq.s32.totalorder %s43, 1
      %p213 = por %p211, %p212
      %p214 = scmp.ne.s32.totalorder %s205, %s206
      %p215 = scmp.eq.s32.totalorder %s43, 0
      %p216 = por %p214, %p215
      %p217 = scmp.ne.s32.totalorder %s205, %s206
      %p218 = scmp.eq.s32.totalorder %s44, 1
      %p219 = por %p217, %p218
      %p221 = scmp.ne.s32.totalorder %s206, %s220
      %p222 = scmp.eq.s32.totalorder %s44, 0
      %p223 = por %p221, %p222
      %s225 = sadd.s32 %s224, 1
      %p228 = scmp.eq.s32.totalorder %s38, 1
      %p229 = scmp.ne.s32.totalorder %s224, %s226
      %p230 = scmp.eq.s32.totalorder %s38, 0
      %p231 = por %p229, %p230
      %p232 = scmp.ne.s32.totalorder %s224, %s226
      %p233 = scmp.eq.s32.totalorder %s43, 1
      %p234 = por %p232, %p233
      %p235 = scmp.ne.s32.totalorder %s226, %s227
      %p236 = scmp.eq.s32.totalorder %s43, 0
      %p237 = por %p235, %p236
      %p238 = scmp.ne.s32.totalorder %s226, %s227
      %p239 = scmp.eq.s32.totalorder %s44, 1
      %p240 = por %p238, %p239
      %p242 = scmp.ne.s32.totalorder %s227, %s241
      %p243 = scmp.eq.s32.totalorder %s44, 0
      %p244 = por %p242, %p243
      %s246 = sadd.s32 %s245, 1
      %p249 = scmp.eq.s32.totalorder %s38, 1
      %p250 = scmp.ne.s32.totalorder %s245, %s247
      %p251 = scmp.eq.s32.totalorder %s38, 0
      %p252 = por %p250, %p251
      %p253 = scmp.ne.s32.totalorder %s245, %s247
      %p254 = scmp.eq.s32.totalorder %s43, 1
      %p255 = por %p253, %p254
      %p256 = scmp.ne.s32.totalorder %s247, %s248
      %p257 = scmp.eq.s32.totalorder %s43, 0
      %p258 = por %p256, %p257
      %p259 = scmp.ne.s32.totalorder %s247, %s248
      %p260 = scmp.eq.s32.totalorder %s44, 1
      %p261 = por %p259, %p260
      %p263 = scmp.ne.s32.totalorder %s248, %s262
      %p264 = scmp.eq.s32.totalorder %s44, 0
      %p265 = por %p263, %p264
      %s267 = sadd.s32 %s266, 1
      %p270 = scmp.eq.s32.totalorder %s38, 1
      %p271 = scmp.ne.s32.totalorder %s266, %s268
      %p272 = scmp.eq.s32.totalorder %s38, 0
      %p273 = por %p271, %p272
      %p274 = scmp.ne.s32.totalorder %s266, %s268
      %p275 = scmp.eq.s32.totalorder %s43, 1
      %p276 = por %p274, %p275
      %p277 = scmp.ne.s32.totalorder %s268, %s269
      %p278 = scmp.eq.s32.totalorder %s43, 0
      %p279 = por %p277, %p278
      %p280 = scmp.ne.s32.totalorder %s268, %s269
      %p281 = scmp.eq.s32.totalorder %s44, 1
      %p282 = por %p280, %p281
      %p284 = scmp.ne.s32.totalorder %s269, %s283
      %p285 = scmp.eq.s32.totalorder %s44, 0
      %p286 = por %p284, %p285
      %s288 = sadd.s32 %s287, 1
      %p291 = scmp.eq.s32.totalorder %s38, 1
      %p292 = scmp.ne.s32.totalorder %s287, %s289
      %p293 = scmp.eq.s32.totalorder %s38, 0
      %p294 = por %p292, %p293
      %p295 = scmp.ne.s32.totalorder %s287, %s289
      %p296 = scmp.eq.s32.totalorder %s43, 1
      %p297 = por %p295, %p296
      %p298 = scmp.ne.s32.totalorder %s289, %s290
      %p299 = scmp.eq.s32.totalorder %s43, 0
      %p300 = por %p298, %p299
      %p301 = scmp.ne.s32.totalorder %s289, %s290
      %p302 = scmp.eq.s32.totalorder %s44, 1
      %p303 = por %p301, %p302
      %p305 = scmp.ne.s32.totalorder %s290, %s304
      %p306 = scmp.eq.s32.totalorder %s44, 0
      %p307 = por %p305, %p306
      %s309 = sadd.s32 %s308, 1
      %p312 = scmp.eq.s32.totalorder %s38, 1
      %p313 = scmp.ne.s32.totalorder %s308, %s310
      %p314 = scmp.eq.s32.totalorder %s38, 0
      %p315 = por %p313, %p314
      %p316 = scmp.ne.s32.totalorder %s308, %s310
      %p317 = scmp.eq.s32.totalorder %s43, 1
      %p318 = por %p316, %p317
      %p319 = scmp.ne.s32.totalorder %s310, %s311
      %p320 = scmp.eq.s32.totalorder %s43, 0
      %p321 = por %p319, %p320
      %p322 = scmp.ne.s32.totalorder %s310, %s311
      %p323 = scmp.eq.s32.totalorder %s44, 1
      %p324 = por %p322, %p323
      %p326 = scmp.ne.s32.totalorder %s311, %s325
      %p327 = scmp.eq.s32.totalorder %s44, 0
      %p328 = por %p326, %p327
      %s330 = sadd.s32 %s329, 1
      %p333 = scmp.eq.s32.totalorder %s38, 1
      %p334 = scmp.ne.s32.totalorder %s329, %s331
      %p335 = scmp.eq.s32.totalorder %s38, 0
      %p336 = por %p334, %p335
      %p337 = scmp.ne.s32.totalorder %s329, %s331
      %p338 = scmp.eq.s32.totalorder %s43, 1
      %p339 = por %p337, %p338
      %p340 = scmp.ne.s32.totalorder %s331, %s332
      %p341 = scmp.eq.s32.totalorder %s43, 0
      %p342 = por %p340, %p341
      %p343 = scmp.ne.s32.totalorder %s331, %s332
      %p344 = scmp.eq.s32.totalorder %s44, 1
      %p345 = por %p343, %p344
      %p347 = scmp.ne.s32.totalorder %s332, %s346
      %p348 = scmp.eq.s32.totalorder %s44, 0
      %p349 = por %p347, %p348
      %s351 = sadd.s32 %s350, 1
      %p354 = scmp.eq.s32.totalorder %s38, 1
      %p355 = scmp.ne.s32.totalorder %s350, %s352
      %p356 = scmp.eq.s32.totalorder %s38, 0
      %p357 = por %p355, %p356
      %p358 = scmp.ne.s32.totalorder %s350, %s352
      %p359 = scmp.eq.s32.totalorder %s43, 1
      %p360 = por %p358, %p359
      %p361 = scmp.ne.s32.totalorder %s352, %s353
      %p362 = scmp.eq.s32.totalorder %s43, 0
      %p363 = por %p361, %p362
      %p364 = scmp.ne.s32.totalorder %s352, %s353
      %p365 = scmp.eq.s32.totalorder %s44, 1
      %p366 = por %p364, %p365
      %p368 = scmp.ne.s32.totalorder %s353, %s367
      %p369 = scmp.eq.s32.totalorder %s44, 0
      %p370 = por %p368, %p369
      %s372 = sadd.s32 %s371, 1
      %p375 = scmp.eq.s32.totalorder %s38, 1
      %p376 = scmp.ne.s32.totalorder %s371, %s373
      %p377 = scmp.eq.s32.totalorder %s38, 0
      %p378 = por %p376, %p377
      %p379 = scmp.ne.s32.totalorder %s371, %s373
      %p380 = scmp.eq.s32.totalorder %s43, 1
      %p381 = por %p379, %p380
      %p382 = scmp.ne.s32.totalorder %s373, %s374
      %p383 = scmp.eq.s32.totalorder %s43, 0
      %p384 = por %p382, %p383
      %p385 = scmp.ne.s32.totalorder %s373, %s374
      %p386 = scmp.eq.s32.totalorder %s44, 1
      %p387 = por %p385, %p386
      %p389 = scmp.ne.s32.totalorder %s374, %s388
      %p390 = scmp.eq.s32.totalorder %s44, 0
      %p391 = por %p389, %p390
      %s392 = ssub.s32 %s38, %s45
      %p393 = scmp.eq.s32.totalorder %s392, 0
      %s395 = sadd.s32 %s394, 1
      %s396 = scalar_select %p393, %s394, %s395
      %p399 = pneg %p393
      %p400 = scmp.eq.s32.totalorder %s38, 1
      %p401 = por %p399, %p400
      %p402 = scmp.ne.s32.totalorder %s394, %s397
      %p403 = scmp.eq.s32.totalorder %s38, 0
      %p404 = por %p402, %p403
      %p405 = scmp.ne.s32.totalorder %s394, %s397
      %p406 = scmp.eq.s32.totalorder %s43, 1
      %p407 = por %p405, %p406
      %p408 = scmp.ne.s32.totalorder %s397, %s398
      %p409 = scmp.eq.s32.totalorder %s43, 0
      %p410 = por %p408, %p409
      %p411 = scmp.ne.s32.totalorder %s397, %s398
      %p412 = scmp.eq.s32.totalorder %s44, 1
      %p413 = por %p411, %p412
      %p415 = scmp.ne.s32.totalorder %s398, %s414
      %p416 = scmp.eq.s32.totalorder %s44, 0
      %p417 = por %p415, %p416
      %p418 = scmp.le.s32.totalorder 1, %s38
      %p419 = scmp.lt.s32.totalorder %s38, 3
      %p420 = pnand %p418, %p419
      %p421 = pneg %p420
      // Predicated region
      $region9: #{temporal_transformer_forward.2} parent=5 // pred_check
        _
      $region10: #{temporal_transformer_forward.2} parent=5 // pred_check_branch
        %423 = sbr.rel (%p420) target = $region12
      $region11: #{temporal_transformer_forward.2} parent=5 // pred_region
        %s424 = ssub.s32 %s38, 1
        // Predicated region
        $region13: #{temporal_transformer_forward.2} parent=11 // pred_check
          %p425 = pneg %p111
        $region14: #{temporal_transformer_forward.2} parent=11 // pred_check_branch
          %427 = sbr.rel (%p425) target = $region16
        $region15: #{temporal_transformer_forward.2} parent=11 // pred_region
          %s429 = ssub.s32 16, 16
          %430 = vsyncadd [#allocation7], %s429
          %s432 = sshll.u32 [#allocation8], 4
          %s433 = int_to_ptr.vmem [resolvable:$true] %s432
          %435 = dma.hbm_to_vmem [thread:$0]  %s2, 16, %s433, [#allocation7]
        $region16: #{temporal_transformer_forward.2} parent=11 // pred_fallthru
          _
        // Predicated region
        $region17: #{temporal_transformer_forward.2} parent=11 // pred_check
          %p436 = pneg %p132
        $region18: #{temporal_transformer_forward.2} parent=11 // pred_check_branch
          %438 = sbr.rel (%p436) target = $region20
        $region19: #{temporal_transformer_forward.2} parent=11 // pred_region
          %s440 = ssub.s32 16, 16
          %441 = vsyncadd [#allocation10], %s440
          %s443 = sshll.u32 [#allocation9], 4
          %s444 = int_to_ptr.vmem [resolvable:$true] %s443
          %446 = dma.hbm_to_vmem [thread:$0]  %s3, 16, %s444, [#allocation10]
        $region20: #{temporal_transformer_forward.2} parent=11 // pred_fallthru
          _
        // Predicated region
        $region21: #{temporal_transformer_forward.2} parent=11 // pred_check
          %p447 = pneg %p153
        $region22: #{temporal_transformer_forward.2} parent=11 // pred_check_branch
          %449 = sbr.rel (%p447) target = $region24
        $region23: #{temporal_transformer_forward.2} parent=11 // pred_region
          %s451 = ssub.s32 256, 256
          %452 = vsyncadd [#allocation10], %s451
          %s453 = sshll.u32 [#allocation11], 4
          %s454 = int_to_ptr.vmem [resolvable:$true] %s453
          %459 = dma.hbm_to_vmem [thread:$0]  %s4, 256, %s454, [#allocation10], 64, 64, 4
        $region24: #{temporal_transformer_forward.2} parent=11 // pred_fallthru
          _
        // Predicated region
        $region25: #{temporal_transformer_forward.2} parent=11 // pred_check
          %p460 = pneg %p174
        $region26: #{temporal_transformer_forward.2} parent=11 // pred_check_branch
          %462 = sbr.rel (%p460) target = $region28
        $region27: #{temporal_transformer_forward.2} parent=11 // pred_region
          %s464 = ssub.s32 16, 16
          %465 = vsyncadd [#allocation13], %s464
          %s467 = sshll.u32 [#allocation12], 4
          %s468 = int_to_ptr.vmem [resolvable:$true] %s467
          %470 = dma.hbm_to_vmem [thread:$0]  %s5, 16, %s468, [#allocation13]
        $region28: #{temporal_transformer_forward.2} parent=11 // pred_fallthru
          _
        // Predicated region
        $region29: #{temporal_transformer_forward.2} parent=11 // pred_check
          %p471 = pneg %p195
        $region30: #{temporal_transformer_forward.2} parent=11 // pred_check_branch
          %473 = sbr.rel (%p471) target = $region32
        $region31: #{temporal_transformer_forward.2} parent=11 // pred_region
          %s475 = ssub.s32 256, 256
          %476 = vsyncadd [#allocation13], %s475
          %s477 = sshll.u32 [#allocation14], 4
          %s478 = int_to_ptr.vmem [resolvable:$true] %s477
          %483 = dma.hbm_to_vmem [thread:$0]  %s6, 256, %s478, [#allocation13], 64, 64, 4
        $region32: #{temporal_transformer_forward.2} parent=11 // pred_fallthru
          _
        // Predicated region
        $region33: #{temporal_transformer_forward.2} parent=11 // pred_check
          %p484 = pneg %p216
        $region34: #{temporal_transformer_forward.2} parent=11 // pred_check_branch
          %486 = sbr.rel (%p484) target = $region36
        $region35: #{temporal_transformer_forward.2} parent=11 // pred_region
          %s488 = ssub.s32 16, 16
          %489 = vsyncadd [#allocation16], %s488
          %s491 = sshll.u32 [#allocation15], 4
          %s492 = int_to_ptr.vmem [resolvable:$true] %s491
          %494 = dma.hbm_to_vmem [thread:$0]  %s7, 16, %s492, [#allocation16]
        $region36: #{temporal_transformer_forward.2} parent=11 // pred_fallthru
          _
        // Predicated region
        $region37: #{temporal_transformer_forward.2} parent=11 // pred_check
          %p495 = pneg %p237
        $region38: #{temporal_transformer_forward.2} parent=11 // pred_check_branch
          %497 = sbr.rel (%p495) target = $region40
        $region39: #{temporal_transformer_forward.2} parent=11 // pred_region
          %s499 = ssub.s32 16, 16
          %500 = vsyncadd [#allocation16], %s499
          %s502 = sshll.u32 [#allocation17], 4
          %s503 = int_to_ptr.vmem [resolvable:$true] %s502
          %505 = dma.hbm_to_vmem [thread:$0]  %s8, 16, %s503, [#allocation16]
        $region40: #{temporal_transformer_forward.2} parent=11 // pred_fallthru
          _
        // Predicated region
        $region41: #{temporal_transformer_forward.2} parent=11 // pred_check
          %p506 = pneg %p258
        $region42: #{temporal_transformer_forward.2} parent=11 // pred_check_branch
          %508 = sbr.rel (%p506) target = $region44
        $region43: #{temporal_transformer_forward.2} parent=11 // pred_region
          %s510 = ssub.s32 16, 16
          %511 = vsyncadd [#allocation19], %s510
          %s513 = sshll.u32 [#allocation18], 4
          %s514 = int_to_ptr.vmem [resolvable:$true] %s513
          %516 = dma.hbm_to_vmem [thread:$0]  %s9, 16, %s514, [#allocation19]
        $region44: #{temporal_transformer_forward.2} parent=11 // pred_fallthru
          _
        // Predicated region
        $region45: #{temporal_transformer_forward.2} parent=11 // pred_check
          %p517 = pneg %p279
        $region46: #{temporal_transformer_forward.2} parent=11 // pred_check_branch
          %519 = sbr.rel (%p517) target = $region48
        $region47: #{temporal_transformer_forward.2} parent=11 // pred_region
          %s521 = ssub.s32 256, 256
          %522 = vsyncadd [#allocation19], %s521
          %s523 = sshll.u32 [#allocation20], 4
          %s524 = int_to_ptr.vmem [resolvable:$true] %s523
          %529 = dma.hbm_to_vmem [thread:$0]  %s10, 256, %s524, [#allocation19], 64, 64, 4
        $region48: #{temporal_transformer_forward.2} parent=11 // pred_fallthru
          _
        // Predicated region
        $region49: #{temporal_transformer_forward.2} parent=11 // pred_check
          %p530 = pneg %p300
        $region50: #{temporal_transformer_forward.2} parent=11 // pred_check_branch
          %532 = sbr.rel (%p530) target = $region52
        $region51: #{temporal_transformer_forward.2} parent=11 // pred_region
          %s534 = ssub.s32 16, 16
          %535 = vsyncadd [#allocation22], %s534
          %s537 = sshll.u32 [#allocation21], 4
          %s538 = int_to_ptr.vmem [resolvable:$true] %s537
          %540 = dma.hbm_to_vmem [thread:$0]  %s11, 16, %s538, [#allocation22]
        $region52: #{temporal_transformer_forward.2} parent=11 // pred_fallthru
          _
        // Predicated region
        $region53: #{temporal_transformer_forward.2} parent=11 // pred_check
          %p541 = pneg %p321
        $region54: #{temporal_transformer_forward.2} parent=11 // pred_check_branch
          %543 = sbr.rel (%p541) target = $region56
        $region55: #{temporal_transformer_forward.2} parent=11 // pred_region
          %s545 = ssub.s32 512, 512
          %546 = vsyncadd [#allocation22], %s545
          %s547 = sshll.u32 [#allocation23], 4
          %s548 = int_to_ptr.vmem [resolvable:$true] %s547
          %553 = dma.hbm_to_vmem [thread:$0]  %s12, 512, %s548, [#allocation22], 64, 64, 4
        $region56: #{temporal_transformer_forward.2} parent=11 // pred_fallthru
          _
        // Predicated region
        $region57: #{temporal_transformer_forward.2} parent=11 // pred_check
          %p554 = pneg %p342
        $region58: #{temporal_transformer_forward.2} parent=11 // pred_check_branch
          %556 = sbr.rel (%p554) target = $region60
        $region59: #{temporal_transformer_forward.2} parent=11 // pred_region
          %s558 = ssub.s32 16, 16
          %559 = vsyncadd [#allocation25], %s558
          %s561 = sshll.u32 [#allocation24], 4
          %s562 = int_to_ptr.vmem [resolvable:$true] %s561
          %564 = dma.hbm_to_vmem [thread:$0]  %s13, 16, %s562, [#allocation25]
        $region60: #{temporal_transformer_forward.2} parent=11 // pred_fallthru
          _
        // Predicated region
        $region61: #{temporal_transformer_forward.2} parent=11 // pred_check
          %p565 = pneg %p363
        $region62: #{temporal_transformer_forward.2} parent=11 // pred_check_branch
          %567 = sbr.rel (%p565) target = $region64
        $region63: #{temporal_transformer_forward.2} parent=11 // pred_region
          %s569 = ssub.s32 16, 16
          %570 = vsyncadd [#allocation25], %s569
          %s572 = sshll.u32 [#allocation26], 4
          %s573 = int_to_ptr.vmem [resolvable:$true] %s572
          %575 = dma.hbm_to_vmem [thread:$0]  %s14, 16, %s573, [#allocation25]
        $region64: #{temporal_transformer_forward.2} parent=11 // pred_fallthru
          _
        // Predicated region
        $region65: #{temporal_transformer_forward.2} parent=11 // pred_check
          %p576 = pneg %p384
        $region66: #{temporal_transformer_forward.2} parent=11 // pred_check_branch
          %578 = sbr.rel (%p576) target = $region68
        $region67: #{temporal_transformer_forward.2} parent=11 // pred_region
          %s580 = ssub.s32 16, 16
          %581 = vsyncadd [#allocation28], %s580
          %s583 = sshll.u32 [#allocation27], 4
          %s584 = int_to_ptr.vmem [resolvable:$true] %s583
          %586 = dma.hbm_to_vmem [thread:$0]  %s15, 16, %s584, [#allocation28]
        $region68: #{temporal_transformer_forward.2} parent=11 // pred_fallthru
          _
      $region12: #{temporal_transformer_forward.2} parent=5 // pred_fallthru
        _
      %p587 = scmp.lt.s32.totalorder %s38, 2
      // Predicated region
      $region69: #{temporal_transformer_forward.2} parent=5 // pred_check
        %p588 = pneg %p587
      $region70: #{temporal_transformer_forward.2} parent=5 // pred_check_branch
        %590 = sbr.rel (%p588) target = $region72
      $region71: #{temporal_transformer_forward.2} parent=5 // pred_region
        // Predicated region
        $region73: #{temporal_transformer_forward.2} parent=71 // pred_check
          %p591 = pneg %p58
        $region74: #{temporal_transformer_forward.2} parent=71 // pred_check_branch
          %593 = sbr.rel (%p591) target = $region76
        $region75: #{temporal_transformer_forward.2} parent=71 // pred_region
          %s594 = sand.u32 %s48, 1
          %s595 = scalar_lea.sflag [#allocation4], %s594
          %s596 = sand.u32 %s48, 1
          %s597 = smul.addr %s596, 8
          %s598 = scalar_lea.vmem [#allocation3], %s597
          %s600 = ssub.s32 128, 128
          %601 = vsyncadd %s595, %s600
          %s602 = smul.addr %s38, 128
          %s603 = scalar_lea.hbm %s0, %s602
          %s605 = sshll.u32 %s598, 4
          %s606 = int_to_ptr.vmem [resolvable:$true] %s605
          %608 = dma.hbm_to_vmem [thread:$0]  %s603, 128, %s606, %s595
        $region76: #{temporal_transformer_forward.2} parent=71 // pred_fallthru
          _
        // Predicated region
        $region77: #{temporal_transformer_forward.2} parent=71 // pred_check
          %p609 = pneg %p84
        $region78: #{temporal_transformer_forward.2} parent=71 // pred_check_branch
          %611 = sbr.rel (%p609) target = $region80
        $region79: #{temporal_transformer_forward.2} parent=71 // pred_region
          %s612 = sand.u32 %s38, 1
          %s613 = scalar_lea.sflag [#allocation7], %s612
          %s614 = sand.u32 %s74, 1
          %s615 = scalar_lea.vmem [#allocation6], %s614
          %s617 = ssub.s32 16, 16
          %618 = vsyncadd %s613, %s617
          %s619 = smul.addr %s38, 16
          %s620 = scalar_lea.hbm %s1, %s619
          %s622 = sshll.u32 %s615, 4
          %s623 = int_to_ptr.vmem [resolvable:$true] %s622
          %625 = dma.hbm_to_vmem [thread:$0]  %s620, 16, %s623, %s613
        $region80: #{temporal_transformer_forward.2} parent=71 // pred_fallthru
          _
      $region72: #{temporal_transformer_forward.2} parent=5 // pred_fallthru
        _
      %p626 = scmp.le.s32.totalorder 1, %s38
      %p627 = scmp.lt.s32.totalorder %s38, 3
      %p628 = pnand %p626, %p627
      %p629 = pneg %p628
      // Predicated region
      $region81: #{temporal_transformer_forward.2} parent=5 // pred_check
        _
      $region82: #{temporal_transformer_forward.2} parent=5 // pred_check_branch
        %631 = sbr.rel (%p628) target = $region84
      $region83: #{temporal_transformer_forward.2} parent=5 // pred_region
        %s632 = ssub.s32 %s38, 1
        %s633 = sand.u32 %s51, 1
        %s634 = scalar_lea.sflag [#allocation4], %s633
        %s635 = sand.u32 %s51, 1
        %s636 = smul.addr %s635, 8
        %s637 = scalar_lea.vmem [#allocation3], %s636
        // Predicated region
        $region85: #{temporal_transformer_forward.2} parent=83 // pred_check
          %p638 = pneg %p64
        $region86: #{temporal_transformer_forward.2} parent=83 // pred_check_branch
          %640 = sbr.rel (%p638) target = $region88
        $region87: #{temporal_transformer_forward.2} parent=83 // pred_region
          %641 = dma.done %s634, 128
        $region88: #{temporal_transformer_forward.2} parent=83 // pred_fallthru
          _
        %s642 = sand.u32 %s43, 1
        %s643 = scalar_lea.sflag [#allocation7], %s642
        %s644 = sand.u32 %s77, 1
        %s645 = scalar_lea.vmem [#allocation6], %s644
        // Predicated region
        $region89: #{temporal_transformer_forward.2} parent=83 // pred_check
          %p646 = pneg %p90
        $region90: #{temporal_transformer_forward.2} parent=83 // pred_check_branch
          %648 = sbr.rel (%p646) target = $region92
        $region91: #{temporal_transformer_forward.2} parent=83 // pred_region
          %649 = dma.done %s643, 16
        $region92: #{temporal_transformer_forward.2} parent=83 // pred_fallthru
          _
        // Predicated region
        $region93: #{temporal_transformer_forward.2} parent=83 // pred_check
          %p650 = pneg %p111
        $region94: #{temporal_transformer_forward.2} parent=83 // pred_check_branch
          %652 = sbr.rel (%p650) target = $region96
        $region95: #{temporal_transformer_forward.2} parent=83 // pred_region
          %653 = dma.done [#allocation7], 16
        $region96: #{temporal_transformer_forward.2} parent=83 // pred_fallthru
          _
        // Predicated region
        $region97: #{temporal_transformer_forward.2} parent=83 // pred_check
          %p654 = pneg %p132
        $region98: #{temporal_transformer_forward.2} parent=83 // pred_check_branch
          %656 = sbr.rel (%p654) target = $region100
        $region99: #{temporal_transformer_forward.2} parent=83 // pred_region
          %657 = dma.done [#allocation10], 16
        $region100: #{temporal_transformer_forward.2} parent=83 // pred_fallthru
          _
        // Predicated region
        $region101: #{temporal_transformer_forward.2} parent=83 // pred_check
          %p658 = pneg %p153
        $region102: #{temporal_transformer_forward.2} parent=83 // pred_check_branch
          %660 = sbr.rel (%p658) target = $region104
        $region103: #{temporal_transformer_forward.2} parent=83 // pred_region
          %661 = dma.done [#allocation10], 256
        $region104: #{temporal_transformer_forward.2} parent=83 // pred_fallthru
          _
        // Predicated region
        $region105: #{temporal_transformer_forward.2} parent=83 // pred_check
          %p662 = pneg %p174
        $region106: #{temporal_transformer_forward.2} parent=83 // pred_check_branch
          %664 = sbr.rel (%p662) target = $region108
        $region107: #{temporal_transformer_forward.2} parent=83 // pred_region
          %665 = dma.done [#allocation13], 16
        $region108: #{temporal_transformer_forward.2} parent=83 // pred_fallthru
          _
        // Predicated region
        $region109: #{temporal_transformer_forward.2} parent=83 // pred_check
          %p666 = pneg %p195
        $region110: #{temporal_transformer_forward.2} parent=83 // pred_check_branch
          %668 = sbr.rel (%p666) target = $region112
        $region111: #{temporal_transformer_forward.2} parent=83 // pred_region
          %669 = dma.done [#allocation13], 256
        $region112: #{temporal_transformer_forward.2} parent=83 // pred_fallthru
          _
        // Predicated region
        $region113: #{temporal_transformer_forward.2} parent=83 // pred_check
          %p670 = pneg %p216
        $region114: #{temporal_transformer_forward.2} parent=83 // pred_check_branch
          %672 = sbr.rel (%p670) target = $region116
        $region115: #{temporal_transformer_forward.2} parent=83 // pred_region
          %673 = dma.done [#allocation16], 16
        $region116: #{temporal_transformer_forward.2} parent=83 // pred_fallthru
          _
        // Predicated region
        $region117: #{temporal_transformer_forward.2} parent=83 // pred_check
          %p674 = pneg %p237
        $region118: #{temporal_transformer_forward.2} parent=83 // pred_check_branch
          %676 = sbr.rel (%p674) target = $region120
        $region119: #{temporal_transformer_forward.2} parent=83 // pred_region
          %677 = dma.done [#allocation16], 16
        $region120: #{temporal_transformer_forward.2} parent=83 // pred_fallthru
          _
        // Predicated region
        $region121: #{temporal_transformer_forward.2} parent=83 // pred_check
          %p678 = pneg %p258
        $region122: #{temporal_transformer_forward.2} parent=83 // pred_check_branch
          %680 = sbr.rel (%p678) target = $region124
        $region123: #{temporal_transformer_forward.2} parent=83 // pred_region
          %681 = dma.done [#allocation19], 16
        $region124: #{temporal_transformer_forward.2} parent=83 // pred_fallthru
          _
        // Predicated region
        $region125: #{temporal_transformer_forward.2} parent=83 // pred_check
          %p682 = pneg %p279
        $region126: #{temporal_transformer_forward.2} parent=83 // pred_check_branch
          %684 = sbr.rel (%p682) target = $region128
        $region127: #{temporal_transformer_forward.2} parent=83 // pred_region
          %685 = dma.done [#allocation19], 256
        $region128: #{temporal_transformer_forward.2} parent=83 // pred_fallthru
          _
        // Predicated region
        $region129: #{temporal_transformer_forward.2} parent=83 // pred_check
          %p686 = pneg %p300
        $region130: #{temporal_transformer_forward.2} parent=83 // pred_check_branch
          %688 = sbr.rel (%p686) target = $region132
        $region131: #{temporal_transformer_forward.2} parent=83 // pred_region
          %689 = dma.done [#allocation22], 16
        $region132: #{temporal_transformer_forward.2} parent=83 // pred_fallthru
          _
        // Predicated region
        $region133: #{temporal_transformer_forward.2} parent=83 // pred_check
          %p690 = pneg %p321
        $region134: #{temporal_transformer_forward.2} parent=83 // pred_check_branch
          %692 = sbr.rel (%p690) target = $region136
        $region135: #{temporal_transformer_forward.2} parent=83 // pred_region
          %693 = dma.done [#allocation22], 512
        $region136: #{temporal_transformer_forward.2} parent=83 // pred_fallthru
          _
        // Predicated region
        $region137: #{temporal_transformer_forward.2} parent=83 // pred_check
          %p694 = pneg %p342
        $region138: #{temporal_transformer_forward.2} parent=83 // pred_check_branch
          %696 = sbr.rel (%p694) target = $region140
        $region139: #{temporal_transformer_forward.2} parent=83 // pred_region
          %697 = dma.done [#allocation25], 16
        $region140: #{temporal_transformer_forward.2} parent=83 // pred_fallthru
          _
        // Predicated region
        $region141: #{temporal_transformer_forward.2} parent=83 // pred_check
          %p698 = pneg %p363
        $region142: #{temporal_transformer_forward.2} parent=83 // pred_check_branch
          %700 = sbr.rel (%p698) target = $region144
        $region143: #{temporal_transformer_forward.2} parent=83 // pred_region
          %701 = dma.done [#allocation25], 16
        $region144: #{temporal_transformer_forward.2} parent=83 // pred_fallthru
          _
        // Predicated region
        $region145: #{temporal_transformer_forward.2} parent=83 // pred_check
          %p702 = pneg %p384
        $region146: #{temporal_transformer_forward.2} parent=83 // pred_check_branch
          %704 = sbr.rel (%p702) target = $region148
        $region147: #{temporal_transformer_forward.2} parent=83 // pred_region
          %705 = dma.done [#allocation28], 16
        $region148: #{temporal_transformer_forward.2} parent=83 // pred_fallthru
          _
        %s706 = sand.u32 %s51, 1
        %s707 = scalar_lea.sflag [#allocation4], %s706
        %s708 = sand.u32 %s51, 1
        %s709 = smul.addr %s708, 8
        %s710 = scalar_lea.vmem [#allocation3], %s709
        %p711 = pneg %p64
        %p712 = pneg %p61
        %s713 = sand.u32 %s43, 1
        %s714 = scalar_lea.sflag [#allocation7], %s713
        %s715 = sand.u32 %s77, 1
        %s716 = scalar_lea.vmem [#allocation6], %s715
        %p717 = pneg %p90
        %p718 = pneg %p87
        %p719 = pneg %p111
        %p720 = pneg %p108
        %p721 = pneg %p132
        %p722 = pneg %p129
        %p723 = pneg %p153
        %p724 = pneg %p150
        %p725 = pneg %p174
        %p726 = pneg %p171
        %p727 = pneg %p195
        %p728 = pneg %p192
        %p729 = pneg %p216
        %p730 = pneg %p213
        %p731 = pneg %p237
        %p732 = pneg %p234
        %p733 = pneg %p258
        %p734 = pneg %p255
        %p735 = pneg %p279
        %p736 = pneg %p276
        %p737 = pneg %p300
        %p738 = pneg %p297
        %p739 = pneg %p321
        %p740 = pneg %p318
        %p741 = pneg %p342
        %p742 = pneg %p339
        %p743 = pneg %p363
        %p744 = pneg %p360
        %p745 = pneg %p384
        %p746 = pneg %p381
        %p747 = pneg %p410
        %p748 = pneg %p407
        %s749 = sand.u32 %s397, 1
        %s750 = scalar_lea.sflag [#allocation5], %s749
        %s751 = sand.u32 %s397, 1
        %s752 = smul.addr %s751, 8
        %s753 = scalar_lea.vmem [#allocation29], %s752
        %v755 = vld [vmem:[%s637] sm:$0xff]
        %v756 = vld [vmem:[%s645] sm:$0x1]
        %v757 = vlaneseq
        %v758 = vshrl.u32 %v757, 7
        %v759 = vlaneseq
        %v760 = vand.u32 %v759, 127
        %vm761 = vcmp.gt.s32.totalorder %v760, %v758
        %v762 = vsel %vm761, -1e+09, 0.0
        %v764 = vlaneseq
        %v765 = vshrl.u32 %v764, 7
        %v766 = vsub.s32 0, %v765
        %v767 = vrot.slane %v756, %v766
        %v769 = vadd.f32 %v762, %v767
        %v770 = vld [vmem:[#allocation8] sm:$0x1]
        %v771 = vld [vmem:[#allocation9] sm:$0x1]
        %vm772 = vcmask 261120
        %v773 = vsel %vm772, %v755, 0.0
        %774 = vadd.xlane.f32.xlu0 %v773
        %v775 = vpop.xlane.xlu0 %774
        %v776 = vrcp.pop 32.0
        %v777 = vmul.f32 %v775, %v776
        %v778 = vsub.f32 %v755, %v777
        %v779 = vmul.f32 %v778, %v778
        %v780 = vsel %vm772, %v779, 0.0
        %781 = vadd.xlane.f32.xlu0 %v780
        %v782 = vpop.xlane.xlu0 %781
        %v783 = vmul.f32 %v782, %v776
        %v784 = vadd.f32 %v783, 1e-05
        %v785 = vrsqrt.pop %v784
        %v786 = vmul.f32 %v778, %v785
        %v788 = vlaneseq
        %v789 = vshrl.u32 %v788, 7
        %v790 = vsub.s32 0, %v789
        %v791 = vrot.slane %v770, %v790
        %v793 = vmul.f32 %v786, %v791
        %v795 = vlaneseq
        %v796 = vshrl.u32 %v795, 7
        %v797 = vsub.s32 0, %v796
        %v798 = vrot.slane %v771, %v797
        %v800 = vadd.f32 %v793, %v798
        %v801 = vpack.c.bf16 %v800, %v800
        %v802 = vld [vmem:[#allocation11] sm:$0xf]
        %v803 = vld [vmem:[#allocation11 + $0x4] sm:$0xf]
        %v804 = vld [vmem:[#allocation11 + $0x8] sm:$0xf]
        %v805 = vld [vmem:[#allocation11 + $0xc] sm:$0xf]
        %v806 = vld [vmem:[#allocation12] sm:$0x1]
        %v808 = vlaneseq
        %v809 = vshrl.u32 %v808, 7
        %v810 = vsub.s32 0, %v809
        %v811 = vrot.slane %v806, %v810
        %v817 = vunpack.c.l.b16 %v802
        %v818 = vunpack.c.l.b16 %v803
        %v819 = vunpack.c.l.b16 %v804
        %v820 = vunpack.c.l.b16 %v805
        %v821 = vpack.c.b16 %v818, %v817
        %v822 = vpack.c.b16 %v820, %v819
        %v826 = vsel %vm772, %v801, 0
        %828 = vmatprep.subr.bf16.mxu0 0
        %829 = vmatpush1.bf16.msra.mxu0 %v821
        %830 = vmatprep.subr.bf16.mxu0 0
        %831 = vmatpush1.bf16.msra.mxu0 %v822
        %832 = vmatprep.subr.bf16.mxu0 0
        %833 = vmatpush1.bf16.msra.mxu0 0
        %834 = vmatprep.subr.bf16.mxu0 0
        %835 = vmatpush1.bf16.msra.mxu0 0
        %836 = vmatprep.subr.bf16.mxu0 0
        %837 = vmatpush1.bf16.msra.mxu0 0
        %838 = vmatprep.subr.bf16.mxu0 0
        %839 = vmatpush1.bf16.msra.mxu0 0
        %840 = vmatprep.subr.bf16.mxu0 0
        %841 = vmatpush1.bf16.msra.mxu0 0
        %842 = vmatprep.subr.bf16.mxu0 0
        %843 = vmatpush1.bf16.msra.mxu0 0
        %844 = vmatprep.subr.bf16.mxu0 0
        %845 = vmatpush1.bf16.msra.mxu0 0
        %846 = vmatprep.subr.bf16.mxu0 0
        %847 = vmatpush1.bf16.msra.mxu0 0
        %848 = vmatprep.subr.bf16.mxu0 0
        %849 = vmatpush1.bf16.msra.mxu0 0
        %850 = vmatprep.subr.bf16.mxu0 0
        %851 = vmatpush1.bf16.msra.mxu0 0
        %852 = vmatprep.subr.bf16.mxu0 0
        %853 = vmatpush1.bf16.msra.mxu0 0
        %854 = vmatprep.subr.bf16.mxu0 0
        %855 = vmatpush1.bf16.msra.mxu0 0
        %856 = vmatprep.subr.bf16.mxu0 0
        %857 = vmatpush1.bf16.msra.mxu0 0
        %858 = vmatprep.subr.bf16.mxu0 0
        %859 = vmatpush1.bf16.msra.mxu0 0
        %860 = vmatprep.mubr.bf16.mxu0 0
        %861 = vmatmul.mubr.bf16.gmra.mrb[0].mxu0 %v826
        %v862 = vpop.f32.mrb[0].mxu0
        %v863 = vadd.f32 %v811, %v862
        %v864 = vpop.f32.mrb[0].mxu0
        %v865 = vpop.f32.mrb[0].mxu0
        %v866 = vpop.f32.mrb[0].mxu0
        %867 = vdwg.mxu0
        %v868 = vpack.c.bf16 %v863, %v863
        %870 = vrot.lane.b32.xlu0 %v868, 96
        %v871 = vpop.permute.xlu0 %870
        %vm872 = vcmask 64512
        %v874 = vsel %vm872, %v868, 0
        %v877 = vsel %vm872, %v871, 0
        %879 = vmatprep.subr.bf16.mxu0 0
        %880 = vmatpush1.bf16.xpose.msra.mxu0 %v877
        %881 = vmatprep.subr.bf16.mxu0 0
        %882 = vmatpush1.bf16.xpose.msra.mxu0 0
        %883 = vmatprep.subr.bf16.mxu0 0
        %884 = vmatpush1.bf16.xpose.msra.mxu0 0
        %885 = vmatprep.subr.bf16.mxu0 0
        %886 = vmatpush1.bf16.xpose.msra.mxu0 0
        %887 = vmatprep.subr.bf16.mxu0 0
        %888 = vmatpush1.bf16.xpose.msra.mxu0 0
        %889 = vmatprep.subr.bf16.mxu0 0
        %890 = vmatpush1.bf16.xpose.msra.mxu0 0
        %891 = vmatprep.subr.bf16.mxu0 0
        %892 = vmatpush1.bf16.xpose.msra.mxu0 0
        %893 = vmatprep.subr.bf16.mxu0 0
        %894 = vmatpush1.bf16.xpose.msra.mxu0 0
        %895 = vmatprep.subr.bf16.mxu0 0
        %896 = vmatpush1.bf16.xpose.msra.mxu0 0
        %897 = vmatprep.subr.bf16.mxu0 0
        %898 = vmatpush1.bf16.xpose.msra.mxu0 0
        %899 = vmatprep.subr.bf16.mxu0 0
        %900 = vmatpush1.bf16.xpose.msra.mxu0 0
        %901 = vmatprep.subr.bf16.mxu0 0
        %902 = vmatpush1.bf16.xpose.msra.mxu0 0
        %903 = vmatprep.subr.bf16.mxu0 0
        %904 = vmatpush1.bf16.xpose.msra.mxu0 0
        %905 = vmatprep.subr.bf16.mxu0 0
        %906 = vmatpush1.bf16.xpose.msra.mxu0 0
        %907 = vmatprep.subr.bf16.mxu0 0
        %908 = vmatpush1.bf16.xpose.msra.mxu0 0
        %909 = vmatprep.subr.bf16.mxu0 0
        %910 = vmatpush1.bf16.xpose.msra.mxu0 0
        %911 = vmatprep.mubr.bf16.mxu0 0
        %912 = vmatmul.mubr.bf16.gmra.mrb[0].mxu0 %v874
        %v913 = vpop.f32.mrb[0].mxu0
        %v914 = vadd.f32 %v769, %v913
        %v915 = vpop.f32.mrb[0].mxu0
        %v916 = vpop.f32.mrb[0].mxu0
        %v917 = vpop.f32.mrb[0].mxu0
        %918 = vdwg.mxu0
        %v919 = vsel %vm872, %v914, -inf
        %920 = vmax.xlane.f32.xlu0 %v919
        %v921 = vpop.xlane.xlu0 %920
        %v922 = vsub.f32 %v914, %v921
        %v923 = vmul.f32 %v922, 1.442695
        %v924 = vpow.pop %v923
        %v925 = vsel %vm872, %v924, 0.0
        %926 = vadd.xlane.f32.xlu0 %v925
        %v927 = vpop.xlane.xlu0 %926
        %v928 = vrcp.pop %v927
        %v929 = vmul.f32 %v924, %v928
        %v930 = vpack.c.bf16 %v929, %v929
        %931 = vrot.lane.b32.xlu0 %v868, 64
        %v932 = vpop.permute.xlu0 %931
        %v934 = vsel %vm872, %v930, 0
        %vm936 = vcmask 1043456
        %v938 = vsel %vm936, %v932, 0
        %940 = vmatprep.subr.bf16.mxu0 0
        %941 = vmatpush1.bf16.msra.mxu0 %v938
        %942 = vmatprep.subr.bf16.mxu0 0
        %943 = vmatpush1.bf16.msra.mxu0 0
        %944 = vmatprep.subr.bf16.mxu0 0
        %945 = vmatpush1.bf16.msra.mxu0 0
        %946 = vmatprep.subr.bf16.mxu0 0
        %947 = vmatpush1.bf16.msra.mxu0 0
        %948 = vmatprep.subr.bf16.mxu0 0
        %949 = vmatpush1.bf16.msra.mxu0 0
        %950 = vmatprep.subr.bf16.mxu0 0
        %951 = vmatpush1.bf16.msra.mxu0 0
        %952 = vmatprep.subr.bf16.mxu0 0
        %953 = vmatpush1.bf16.msra.mxu0 0
        %954 = vmatprep.subr.bf16.mxu0 0
        %955 = vmatpush1.bf16.msra.mxu0 0
        %956 = vmatprep.subr.bf16.mxu0 0
        %957 = vmatpush1.bf16.msra.mxu0 0
        %958 = vmatprep.subr.bf16.mxu0 0
        %959 = vmatpush1.bf16.msra.mxu0 0
        %960 = vmatprep.subr.bf16.mxu0 0
        %961 = vmatpush1.bf16.msra.mxu0 0
        %962 = vmatprep.subr.bf16.mxu0 0
        %963 = vmatpush1.bf16.msra.mxu0 0
        %964 = vmatprep.subr.bf16.mxu0 0
        %965 = vmatpush1.bf16.msra.mxu0 0
        %966 = vmatprep.subr.bf16.mxu0 0
        %967 = vmatpush1.bf16.msra.mxu0 0
        %968 = vmatprep.subr.bf16.mxu0 0
        %969 = vmatpush1.bf16.msra.mxu0 0
        %970 = vmatprep.subr.bf16.mxu0 0
        %971 = vmatpush1.bf16.msra.mxu0 0
        %972 = vmatprep.mubr.bf16.mxu0 0
        %973 = vmatmul.mubr.bf16.gmra.mrb[0].mxu0 %v934
        %v974 = vpop.f32.mrb[0].mxu0
        %v975 = vadd.f32 0.0, %v974
        %v976 = vpop.f32.mrb[0].mxu0
        %v977 = vpop.f32.mrb[0].mxu0
        %v978 = vpop.f32.mrb[0].mxu0
        %979 = vdwg.mxu0
        %980 = vst.msk [vmem:[#allocation2] sm:$0xff] %vm872, %v975
        %981 = vrot.lane.b32.xlu0 %v868, 120
        %v982 = vpop.permute.xlu0 %981
        %983 = vrot.lane.b32.xlu0 %v868, 88
        %v984 = vpop.permute.xlu0 %983
        %v986 = vsel %vm872, %v982, 0
        %v989 = vsel %vm872, %v984, 0
        %991 = vmatprep.subr.bf16.mxu0 0
        %992 = vmatpush1.bf16.xpose.msra.mxu0 %v989
        %993 = vmatprep.subr.bf16.mxu0 0
        %994 = vmatpush1.bf16.xpose.msra.mxu0 0
        %995 = vmatprep.subr.bf16.mxu0 0
        %996 = vmatpush1.bf16.xpose.msra.mxu0 0
        %997 = vmatprep.subr.bf16.mxu0 0
        %998 = vmatpush1.bf16.xpose.msra.mxu0 0
        %999 = vmatprep.subr.bf16.mxu0 0
        %1000 = vmatpush1.bf16.xpose.msra.mxu0 0
        %1001 = vmatprep.subr.bf16.mxu0 0
        %1002 = vmatpush1.bf16.xpose.msra.mxu0 0
        %1003 = vmatprep.subr.bf16.mxu0 0
        %1004 = vmatpush1.bf16.xpose.msra.mxu0 0
        %1005 = vmatprep.subr.bf16.mxu0 0
        %1006 = vmatpush1.bf16.xpose.msra.mxu0 0
        %1007 = vmatprep.subr.bf16.mxu0 0
        %1008 = vmatpush1.bf16.xpose.msra.mxu0 0
        %1009 = vmatprep.subr.bf16.mxu0 0
        %1010 = vmatpush1.bf16.xpose.msra.mxu0 0
        %1011 = vmatprep.subr.bf16.mxu0 0
        %1012 = vmatpush1.bf16.xpose.msra.mxu0 0
        %1013 = vmatprep.subr.bf16.mxu0 0
        %1014 = vmatpush1.bf16.xpose.msra.mxu0 0
        %1015 = vmatprep.subr.bf16.mxu0 0
        %1016 = vmatpush1.bf16.xpose.msra.mxu0 0
        %1017 = vmatprep.subr.bf16.mxu0 0
        %1018 = vmatpush1.bf16.xpose.msra.mxu0 0
        %1019 = vmatprep.subr.bf16.mxu0 0
        %1020 = vmatpush1.bf16.xpose.msra.mxu0 0
        %1021 = vmatprep.subr.bf16.mxu0 0
        %1022 = vmatpush1.bf16.xpose.msra.mxu0 0
        %1023 = vmatprep.mubr.bf16.mxu0 0
        %1024 = vmatmul.mubr.bf16.gmra.mrb[0].mxu0 %v986
        %v1025 = vpop.f32.mrb[0].mxu0
        %v1026 = vadd.f32 %v769, %v1025
        %v1027 = vpop.f32.mrb[0].mxu0
        %v1028 = vpop.f32.mrb[0].mxu0
        %v1029 = vpop.f32.mrb[0].mxu0
        %1030 = vdwg.mxu0
        %v1031 = vsel %vm872, %v1026, -inf
        %1032 = vmax.xlane.f32.xlu0 %v1031
        %v1033 = vpop.xlane.xlu0 %1032
        %v1034 = vsub.f32 %v1026, %v1033
        %v1035 = vmul.f32 %v1034, 1.442695
        %v1036 = vpow.pop %v1035
        %v1037 = vsel %vm872, %v1036, 0.0
        %1038 = vadd.xlane.f32.xlu0 %v1037
        %v1039 = vpop.xlane.xlu0 %1038
        %v1040 = vrcp.pop %v1039
        %v1041 = vmul.f32 %v1036, %v1040
        %v1042 = vpack.c.bf16 %v1041, %v1041
        %1043 = vrot.lane.b32.xlu0 %v868, 56
        %v1044 = vpop.permute.xlu0 %1043
        %v1046 = vsel %vm872, %v1042, 0
        %v1049 = vsel %vm936, %v1044, 0
        %1051 = vmatprep.subr.bf16.mxu0 0
        %1052 = vmatpush1.bf16.msra.mxu0 %v1049
        %1053 = vmatprep.subr.bf16.mxu0 0
        %1054 = vmatpush1.bf16.msra.mxu0 0
        %1055 = vmatprep.subr.bf16.mxu0 0
        %1056 = vmatpush1.bf16.msra.mxu0 0
        %1057 = vmatprep.subr.bf16.mxu0 0
        %1058 = vmatpush1.bf16.msra.mxu0 0
        %1059 = vmatprep.subr.bf16.mxu0 0
        %1060 = vmatpush1.bf16.msra.mxu0 0
        %1061 = vmatprep.subr.bf16.mxu0 0
        %1062 = vmatpush1.bf16.msra.mxu0 0
        %1063 = vmatprep.subr.bf16.mxu0 0
        %1064 = vmatpush1.bf16.msra.mxu0 0
        %1065 = vmatprep.subr.bf16.mxu0 0
        %1066 = vmatpush1.bf16.msra.mxu0 0
        %1067 = vmatprep.subr.bf16.mxu0 0
        %1068 = vmatpush1.bf16.msra.mxu0 0
        %1069 = vmatprep.subr.bf16.mxu0 0
        %1070 = vmatpush1.bf16.msra.mxu0 0
        %1071 = vmatprep.subr.bf16.mxu0 0
        %1072 = vmatpush1.bf16.msra.mxu0 0
        %1073 = vmatprep.subr.bf16.mxu0 0
        %1074 = vmatpush1.bf16.msra.mxu0 0
        %1075 = vmatprep.subr.bf16.mxu0 0
        %1076 = vmatpush1.bf16.msra.mxu0 0
        %1077 = vmatprep.subr.bf16.mxu0 0
        %1078 = vmatpush1.bf16.msra.mxu0 0
        %1079 = vmatprep.subr.bf16.mxu0 0
        %1080 = vmatpush1.bf16.msra.mxu0 0
        %1081 = vmatprep.subr.bf16.mxu0 0
        %1082 = vmatpush1.bf16.msra.mxu0 0
        %1083 = vmatprep.mubr.bf16.mxu0 0
        %1084 = vmatmul.mubr.bf16.gmra.mrb[0].mxu0 %v1046
        %v1085 = vpop.f32.mrb[0].mxu0
        %v1086 = vadd.f32 0.0, %v1085
        %v1087 = vpop.f32.mrb[0].mxu0
        %v1088 = vpop.f32.mrb[0].mxu0
        %v1089 = vpop.f32.mrb[0].mxu0
        %1090 = vdwg.mxu0
        %1092 = vrot.lane.b32.xlu0 %v1086, 8
        %v1093 = vpop.permute.xlu0 %1092
        %vm1095 = vcmask 130112
        %1096 = vst.msk [vmem:[#allocation2] sm:$0xff] %vm1095, %v1093
        %1097 = vrot.lane.b32.xlu0 %v868, 112
        %v1098 = vpop.permute.xlu0 %1097
        %1099 = vrot.lane.b32.xlu0 %v868, 80
        %v1100 = vpop.permute.xlu0 %1099
        %v1102 = vsel %vm872, %v1098, 0
        %v1105 = vsel %vm872, %v1100, 0
        %1107 = vmatprep.subr.bf16.mxu0 0
        %1108 = vmatpush1.bf16.xpose.msra.mxu0 %v1105
        %1109 = vmatprep.subr.bf16.mxu0 0
        %1110 = vmatpush1.bf16.xpose.msra.mxu0 0
        %1111 = vmatprep.subr.bf16.mxu0 0
        %1112 = vmatpush1.bf16.xpose.msra.mxu0 0
        %1113 = vmatprep.subr.bf16.mxu0 0
        %1114 = vmatpush1.bf16.xpose.msra.mxu0 0
        %1115 = vmatprep.subr.bf16.mxu0 0
        %1116 = vmatpush1.bf16.xpose.msra.mxu0 0
        %1117 = vmatprep.subr.bf16.mxu0 0
        %1118 = vmatpush1.bf16.xpose.msra.mxu0 0
        %1119 = vmatprep.subr.bf16.mxu0 0
        %1120 = vmatpush1.bf16.xpose.msra.mxu0 0
        %1121 = vmatprep.subr.bf16.mxu0 0
        %1122 = vmatpush1.bf16.xpose.msra.mxu0 0
        %1123 = vmatprep.subr.bf16.mxu0 0
        %1124 = vmatpush1.bf16.xpose.msra.mxu0 0
        %1125 = vmatprep.subr.bf16.mxu0 0
        %1126 = vmatpush1.bf16.xpose.msra.mxu0 0
        %1127 = vmatprep.subr.bf16.mxu0 0
        %1128 = vmatpush1.bf16.xpose.msra.mxu0 0
        %1129 = vmatprep.subr.bf16.mxu0 0
        %1130 = vmatpush1.bf16.xpose.msra.mxu0 0
        %1131 = vmatprep.subr.bf16.mxu0 0
        %1132 = vmatpush1.bf16.xpose.msra.mxu0 0
        %1133 = vmatprep.subr.bf16.mxu0 0
        %1134 = vmatpush1.bf16.xpose.msra.mxu0 0
        %1135 = vmatprep.subr.bf16.mxu0 0
        %1136 = vmatpush1.bf16.xpose.msra.mxu0 0
        %1137 = vmatprep.subr.bf16.mxu0 0
        %1138 = vmatpush1.bf16.xpose.msra.mxu0 0
        %1139 = vmatprep.mubr.bf16.mxu0 0
        %1140 = vmatmul.mubr.bf16.gmra.mrb[0].mxu0 %v1102
        %v1141 = vpop.f32.mrb[0].mxu0
        %v1142 = vadd.f32 %v769, %v1141
        %v1143 = vpop.f32.mrb[0].mxu0
        %v1144 = vpop.f32.mrb[0].mxu0
        %v1145 = vpop.f32.mrb[0].mxu0
        %1146 = vdwg.mxu0
        %v1147 = vsel %vm872, %v1142, -inf
        %1148 = vmax.xlane.f32.xlu0 %v1147
        %v1149 = vpop.xlane.xlu0 %1148
        %v1150 = vsub.f32 %v1142, %v1149
        %v1151 = vmul.f32 %v1150, 1.442695
        %v1152 = vpow.pop %v1151
        %v1153 = vsel %vm872, %v1152, 0.0
        %1154 = vadd.xlane.f32.xlu0 %v1153
        %v1155 = vpop.xlane.xlu0 %1154
        %v1156 = vrcp.pop %v1155
        %v1157 = vmul.f32 %v1152, %v1156
        %v1158 = vpack.c.bf16 %v1157, %v1157
        %1159 = vrot.lane.b32.xlu0 %v868, 48
        %v1160 = vpop.permute.xlu0 %1159
        %v1162 = vsel %vm872, %v1158, 0
        %v1165 = vsel %vm936, %v1160, 0
        %1167 = vmatprep.subr.bf16.mxu0 0
        %1168 = vmatpush1.bf16.msra.mxu0 %v1165
        %1169 = vmatprep.subr.bf16.mxu0 0
        %1170 = vmatpush1.bf16.msra.mxu0 0
        %1171 = vmatprep.subr.bf16.mxu0 0
        %1172 = vmatpush1.bf16.msra.mxu0 0
        %1173 = vmatprep.subr.bf16.mxu0 0
        %1174 = vmatpush1.bf16.msra.mxu0 0
        %1175 = vmatprep.subr.bf16.mxu0 0
        %1176 = vmatpush1.bf16.msra.mxu0 0
        %1177 = vmatprep.subr.bf16.mxu0 0
        %1178 = vmatpush1.bf16.msra.mxu0 0
        %1179 = vmatprep.subr.bf16.mxu0 0
        %1180 = vmatpush1.bf16.msra.mxu0 0
        %1181 = vmatprep.subr.bf16.mxu0 0
        %1182 = vmatpush1.bf16.msra.mxu0 0
        %1183 = vmatprep.subr.bf16.mxu0 0
        %1184 = vmatpush1.bf16.msra.mxu0 0
        %1185 = vmatprep.subr.bf16.mxu0 0
        %1186 = vmatpush1.bf16.msra.mxu0 0
        %1187 = vmatprep.subr.bf16.mxu0 0
        %1188 = vmatpush1.bf16.msra.mxu0 0
        %1189 = vmatprep.subr.bf16.mxu0 0
        %1190 = vmatpush1.bf16.msra.mxu0 0
        %1191 = vmatprep.subr.bf16.mxu0 0
        %1192 = vmatpush1.bf16.msra.mxu0 0
        %1193 = vmatprep.subr.bf16.mxu0 0
        %1194 = vmatpush1.bf16.msra.mxu0 0
        %1195 = vmatprep.subr.bf16.mxu0 0
        %1196 = vmatpush1.bf16.msra.mxu0 0
        %1197 = vmatprep.subr.bf16.mxu0 0
        %1198 = vmatpush1.bf16.msra.mxu0 0
        %1199 = vmatprep.mubr.bf16.mxu0 0
        %1200 = vmatmul.mubr.bf16.gmra.mrb[0].mxu0 %v1162
        %v1201 = vpop.f32.mrb[0].mxu0
        %v1202 = vadd.f32 0.0, %v1201
        %v1203 = vpop.f32.mrb[0].mxu0
        %v1204 = vpop.f32.mrb[0].mxu0
        %v1205 = vpop.f32.mrb[0].mxu0
        %1206 = vdwg.mxu0
        %1208 = vrot.lane.b32.xlu0 %v1202, 16
        %v1209 = vpop.permute.xlu0 %1208
        %vm1211 = vcmask 195712
        %1212 = vst.msk [vmem:[#allocation2] sm:$0xff] %vm1211, %v1209
        %1213 = vrot.lane.b32.xlu0 %v868, 104
        %v1214 = vpop.permute.xlu0 %1213
        %1215 = vrot.lane.b32.xlu0 %v868, 72
        %v1216 = vpop.permute.xlu0 %1215
        %v1218 = vsel %vm872, %v1214, 0
        %v1221 = vsel %vm872, %v1216, 0
        %1223 = vmatprep.subr.bf16.mxu0 0
        %1224 = vmatpush1.bf16.xpose.msra.mxu0 %v1221
        %1225 = vmatprep.subr.bf16.mxu0 0
        %1226 = vmatpush1.bf16.xpose.msra.mxu0 0
        %1227 = vmatprep.subr.bf16.mxu0 0
        %1228 = vmatpush1.bf16.xpose.msra.mxu0 0
        %1229 = vmatprep.subr.bf16.mxu0 0
        %1230 = vmatpush1.bf16.xpose.msra.mxu0 0
        %1231 = vmatprep.subr.bf16.mxu0 0
        %1232 = vmatpush1.bf16.xpose.msra.mxu0 0
        %1233 = vmatprep.subr.bf16.mxu0 0
        %1234 = vmatpush1.bf16.xpose.msra.mxu0 0
        %1235 = vmatprep.subr.bf16.mxu0 0
        %1236 = vmatpush1.bf16.xpose.msra.mxu0 0
        %1237 = vmatprep.subr.bf16.mxu0 0
        %1238 = vmatpush1.bf16.xpose.msra.mxu0 0
        %1239 = vmatprep.subr.bf16.mxu0 0
        %1240 = vmatpush1.bf16.xpose.msra.mxu0 0
        %1241 = vmatprep.subr.bf16.mxu0 0
        %1242 = vmatpush1.bf16.xpose.msra.mxu0 0
        %1243 = vmatprep.subr.bf16.mxu0 0
        %1244 = vmatpush1.bf16.xpose.msra.mxu0 0
        %1245 = vmatprep.subr.bf16.mxu0 0
        %1246 = vmatpush1.bf16.xpose.msra.mxu0 0
        %1247 = vmatprep.subr.bf16.mxu0 0
        %1248 = vmatpush1.bf16.xpose.msra.mxu0 0
        %1249 = vmatprep.subr.bf16.mxu0 0
        %1250 = vmatpush1.bf16.xpose.msra.mxu0 0
        %1251 = vmatprep.subr.bf16.mxu0 0
        %1252 = vmatpush1.bf16.xpose.msra.mxu0 0
        %1253 = vmatprep.subr.bf16.mxu0 0
        %1254 = vmatpush1.bf16.xpose.msra.mxu0 0
        %1255 = vmatprep.mubr.bf16.mxu0 0
        %1256 = vmatmul.mubr.bf16.gmra.mrb[0].mxu0 %v1218
        %v1257 = vpop.f32.mrb[0].mxu0
        %v1258 = vadd.f32 %v769, %v1257
        %v1259 = vpop.f32.mrb[0].mxu0
        %v1260 = vpop.f32.mrb[0].mxu0
        %v1261 = vpop.f32.mrb[0].mxu0
        %1262 = vdwg.mxu0
        %v1263 = vsel %vm872, %v1258, -inf
        %1264 = vmax.xlane.f32.xlu0 %v1263
        %v1265 = vpop.xlane.xlu0 %1264
        %v1266 = vsub.f32 %v1258, %v1265
        %v1267 = vmul.f32 %v1266, 1.442695
        %v1268 = vpow.pop %v1267
        %v1269 = vsel %vm872, %v1268, 0.0
        %1270 = vadd.xlane.f32.xlu0 %v1269
        %v1271 = vpop.xlane.xlu0 %1270
        %v1272 = vrcp.pop %v1271
        %v1273 = vmul.f32 %v1268, %v1272
        %v1274 = vpack.c.bf16 %v1273, %v1273
        %1275 = vrot.lane.b32.xlu0 %v868, 40
        %v1276 = vpop.permute.xlu0 %1275
        %v1278 = vsel %vm872, %v1274, 0
        %v1281 = vsel %vm936, %v1276, 0
        %1283 = vmatprep.subr.bf16.mxu0 0
        %1284 = vmatpush1.bf16.msra.mxu0 %v1281
        %1285 = vmatprep.subr.bf16.mxu0 0
        %1286 = vmatpush1.bf16.msra.mxu0 0
        %1287 = vmatprep.subr.bf16.mxu0 0
        %1288 = vmatpush1.bf16.msra.mxu0 0
        %1289 = vmatprep.subr.bf16.mxu0 0
        %1290 = vmatpush1.bf16.msra.mxu0 0
        %1291 = vmatprep.subr.bf16.mxu0 0
        %1292 = vmatpush1.bf16.msra.mxu0 0
        %1293 = vmatprep.subr.bf16.mxu0 0
        %1294 = vmatpush1.bf16.msra.mxu0 0
        %1295 = vmatprep.subr.bf16.mxu0 0
        %1296 = vmatpush1.bf16.msra.mxu0 0
        %1297 = vmatprep.subr.bf16.mxu0 0
        %1298 = vmatpush1.bf16.msra.mxu0 0
        %1299 = vmatprep.subr.bf16.mxu0 0
        %1300 = vmatpush1.bf16.msra.mxu0 0
        %1301 = vmatprep.subr.bf16.mxu0 0
        %1302 = vmatpush1.bf16.msra.mxu0 0
        %1303 = vmatprep.subr.bf16.mxu0 0
        %1304 = vmatpush1.bf16.msra.mxu0 0
        %1305 = vmatprep.subr.bf16.mxu0 0
        %1306 = vmatpush1.bf16.msra.mxu0 0
        %1307 = vmatprep.subr.bf16.mxu0 0
        %1308 = vmatpush1.bf16.msra.mxu0 0
        %1309 = vmatprep.subr.bf16.mxu0 0
        %1310 = vmatpush1.bf16.msra.mxu0 0
        %1311 = vmatprep.subr.bf16.mxu0 0
        %1312 = vmatpush1.bf16.msra.mxu0 0
        %1313 = vmatprep.subr.bf16.mxu0 0
        %1314 = vmatpush1.bf16.msra.mxu0 0
        %1315 = vmatprep.mubr.bf16.mxu0 0
        %1316 = vmatmul.mubr.bf16.gmra.mrb[0].mxu0 %v1278
        %v1317 = vpop.f32.mrb[0].mxu0
        %v1318 = vadd.f32 0.0, %v1317
        %v1319 = vpop.f32.mrb[0].mxu0
        %v1320 = vpop.f32.mrb[0].mxu0
        %v1321 = vpop.f32.mrb[0].mxu0
        %1322 = vdwg.mxu0
        %1324 = vrot.lane.b32.xlu0 %v1318, 24
        %v1325 = vpop.permute.xlu0 %1324
        %vm1327 = vcmask 261312
        %1328 = vst.msk [vmem:[#allocation2] sm:$0xff] %vm1327, %v1325
        %v1329 = vld [vmem:[#allocation2] sm:$0xff]
        %v1330 = vpack.c.bf16 %v1329, %v1329
        %v1331 = vld [vmem:[#allocation14] sm:$0xf]
        %v1332 = vld [vmem:[#allocation14 + $0x4] sm:$0xf]
        %v1333 = vld [vmem:[#allocation14 + $0x8] sm:$0xf]
        %v1334 = vld [vmem:[#allocation14 + $0xc] sm:$0xf]
        %v1335 = vld [vmem:[#allocation15] sm:$0x1]
        %v1337 = vlaneseq
        %v1338 = vshrl.u32 %v1337, 7
        %v1339 = vsub.s32 0, %v1338
        %v1340 = vrot.slane %v1335, %v1339
        %v1346 = vunpack.c.l.b16 %v1331
        %v1347 = vunpack.c.l.b16 %v1332
        %v1348 = vunpack.c.l.b16 %v1333
        %v1349 = vunpack.c.l.b16 %v1334
        %v1350 = vpack.c.b16 %v1347, %v1346
        %v1351 = vpack.c.b16 %v1349, %v1348
        %v1355 = vsel %vm772, %v1330, 0
        %1357 = vmatprep.subr.bf16.mxu0 0
        %1358 = vmatpush1.bf16.msra.mxu0 %v1350
        %1359 = vmatprep.subr.bf16.mxu0 0
        %1360 = vmatpush1.bf16.msra.mxu0 %v1351
        %1361 = vmatprep.subr.bf16.mxu0 0
        %1362 = vmatpush1.bf16.msra.mxu0 0
        %1363 = vmatprep.subr.bf16.mxu0 0
        %1364 = vmatpush1.bf16.msra.mxu0 0
        %1365 = vmatprep.subr.bf16.mxu0 0
        %1366 = vmatpush1.bf16.msra.mxu0 0
        %1367 = vmatprep.subr.bf16.mxu0 0
        %1368 = vmatpush1.bf16.msra.mxu0 0
        %1369 = vmatprep.subr.bf16.mxu0 0
        %1370 = vmatpush1.bf16.msra.mxu0 0
        %1371 = vmatprep.subr.bf16.mxu0 0
        %1372 = vmatpush1.bf16.msra.mxu0 0
        %1373 = vmatprep.subr.bf16.mxu0 0
        %1374 = vmatpush1.bf16.msra.mxu0 0
        %1375 = vmatprep.subr.bf16.mxu0 0
        %1376 = vmatpush1.bf16.msra.mxu0 0
        %1377 = vmatprep.subr.bf16.mxu0 0
        %1378 = vmatpush1.bf16.msra.mxu0 0
        %1379 = vmatprep.subr.bf16.mxu0 0
        %1380 = vmatpush1.bf16.msra.mxu0 0
        %1381 = vmatprep.subr.bf16.mxu0 0
        %1382 = vmatpush1.bf16.msra.mxu0 0
        %1383 = vmatprep.subr.bf16.mxu0 0
        %1384 = vmatpush1.bf16.msra.mxu0 0
        %1385 = vmatprep.subr.bf16.mxu0 0
        %1386 = vmatpush1.bf16.msra.mxu0 0
        %1387 = vmatprep.subr.bf16.mxu0 0
        %1388 = vmatpush1.bf16.msra.mxu0 0
        %1389 = vmatprep.mubr.bf16.mxu0 0
        %1390 = vmatmul.mubr.bf16.gmra.mrb[0].mxu0 %v1355
        %v1391 = vpop.f32.mrb[0].mxu0
        %v1392 = vadd.f32 %v1340, %v1391
        %v1393 = vpop.f32.mrb[0].mxu0
        %v1394 = vpop.f32.mrb[0].mxu0
        %v1395 = vpop.f32.mrb[0].mxu0
        %1396 = vdwg.mxu0
        %v1397 = vadd.f32 %v755, %v1392
        %v1398 = vld [vmem:[#allocation17] sm:$0x1]
        %v1399 = vld [vmem:[#allocation18] sm:$0x1]
        %v1400 = vsel %vm772, %v1397, 0.0
        %1401 = vadd.xlane.f32.xlu0 %v1400
        %v1402 = vpop.xlane.xlu0 %1401
        %v1403 = vmul.f32 %v1402, %v776
        %v1404 = vsub.f32 %v1397, %v1403
        %v1405 = vmul.f32 %v1404, %v1404
        %v1406 = vsel %vm772, %v1405, 0.0
        %1407 = vadd.xlane.f32.xlu0 %v1406
        %v1408 = vpop.xlane.xlu0 %1407
        %v1409 = vmul.f32 %v1408, %v776
        %v1410 = vadd.f32 %v1409, 1e-05
        %v1411 = vrsqrt.pop %v1410
        %v1412 = vmul.f32 %v1404, %v1411
        %v1414 = vlaneseq
        %v1415 = vshrl.u32 %v1414, 7
        %v1416 = vsub.s32 0, %v1415
        %v1417 = vrot.slane %v1398, %v1416
        %v1419 = vmul.f32 %v1412, %v1417
        %v1421 = vlaneseq
        %v1422 = vshrl.u32 %v1421, 7
        %v1423 = vsub.s32 0, %v1422
        %v1424 = vrot.slane %v1399, %v1423
        %v1426 = vadd.f32 %v1419, %v1424
        %v1427 = vpack.c.bf16 %v1426, %v1426
        %v1428 = vld [vmem:[#allocation20] sm:$0xf]
        %v1429 = vld [vmem:[#allocation20 + $0x4] sm:$0xf]
        %v1430 = vld [vmem:[#allocation20 + $0x8] sm:$0xf]
        %v1431 = vld [vmem:[#allocation20 + $0xc] sm:$0xf]
        %v1432 = vld [vmem:[#allocation21] sm:$0x1]
        %v1434 = vlaneseq
        %v1435 = vshrl.u32 %v1434, 7
        %v1436 = vsub.s32 0, %v1435
        %v1437 = vrot.slane %v1432, %v1436
        %v1443 = vunpack.c.l.b16 %v1428
        %v1444 = vunpack.c.l.b16 %v1429
        %v1445 = vunpack.c.l.b16 %v1430
        %v1446 = vunpack.c.l.b16 %v1431
        %v1447 = vpack.c.b16 %v1444, %v1443
        %v1448 = vpack.c.b16 %v1446, %v1445
        %v1452 = vsel %vm772, %v1427, 0
        %1454 = vmatprep.subr.bf16.mxu0 0
        %1455 = vmatpush1.bf16.msra.mxu0 %v1447
        %1456 = vmatprep.subr.bf16.mxu0 0
        %1457 = vmatpush1.bf16.msra.mxu0 %v1448
        %1458 = vmatprep.subr.bf16.mxu0 0
        %1459 = vmatpush1.bf16.msra.mxu0 0
        %1460 = vmatprep.subr.bf16.mxu0 0
        %1461 = vmatpush1.bf16.msra.mxu0 0
        %1462 = vmatprep.subr.bf16.mxu0 0
        %1463 = vmatpush1.bf16.msra.mxu0 0
        %1464 = vmatprep.subr.bf16.mxu0 0
        %1465 = vmatpush1.bf16.msra.mxu0 0
        %1466 = vmatprep.subr.bf16.mxu0 0
        %1467 = vmatpush1.bf16.msra.mxu0 0
        %1468 = vmatprep.subr.bf16.mxu0 0
        %1469 = vmatpush1.bf16.msra.mxu0 0
        %1470 = vmatprep.subr.bf16.mxu0 0
        %1471 = vmatpush1.bf16.msra.mxu0 0
        %1472 = vmatprep.subr.bf16.mxu0 0
        %1473 = vmatpush1.bf16.msra.mxu0 0
        %1474 = vmatprep.subr.bf16.mxu0 0
        %1475 = vmatpush1.bf16.msra.mxu0 0
        %1476 = vmatprep.subr.bf16.mxu0 0
        %1477 = vmatpush1.bf16.msra.mxu0 0
        %1478 = vmatprep.subr.bf16.mxu0 0
        %1479 = vmatpush1.bf16.msra.mxu0 0
        %1480 = vmatprep.subr.bf16.mxu0 0
        %1481 = vmatpush1.bf16.msra.mxu0 0
        %1482 = vmatprep.subr.bf16.mxu0 0
        %1483 = vmatpush1.bf16.msra.mxu0 0
        %1484 = vmatprep.subr.bf16.mxu0 0
        %1485 = vmatpush1.bf16.msra.mxu0 0
        %1486 = vmatprep.mubr.bf16.mxu0 0
        %1487 = vmatmul.mubr.bf16.gmra.mrb[0].mxu0 %v1452
        %v1488 = vpop.f32.mrb[0].mxu0
        %v1489 = vadd.f32 %v1437, %v1488
        %v1490 = vpop.f32.mrb[0].mxu0
        %v1491 = vpop.f32.mrb[0].mxu0
        %v1492 = vpop.f32.mrb[0].mxu0
        %1493 = vdwg.mxu0
        %v1494 = vmax.f32 %v1489, 0.0
        %v1495 = vpack.c.bf16 %v1494, %v1494
        %v1496 = vld [vmem:[#allocation23] sm:$0xf]
        %v1497 = vld [vmem:[#allocation23 + $0x4] sm:$0xf]
        %v1498 = vld [vmem:[#allocation23 + $0x8] sm:$0xf]
        %v1499 = vld [vmem:[#allocation23 + $0xc] sm:$0xf]
        %v1500 = vld [vmem:[#allocation23 + $0x10] sm:$0xf]
        %v1501 = vld [vmem:[#allocation23 + $0x14] sm:$0xf]
        %v1502 = vld [vmem:[#allocation23 + $0x18] sm:$0xf]
        %v1503 = vld [vmem:[#allocation23 + $0x1c] sm:$0xf]
        %v1504 = vld [vmem:[#allocation24] sm:$0x1]
        %v1506 = vlaneseq
        %v1507 = vshrl.u32 %v1506, 7
        %v1508 = vsub.s32 0, %v1507
        %v1509 = vrot.slane %v1504, %v1508
        %v1519 = vunpack.c.l.b16 %v1496
        %v1520 = vunpack.c.l.b16 %v1497
        %v1521 = vunpack.c.l.b16 %v1498
        %v1522 = vunpack.c.l.b16 %v1499
        %v1523 = vunpack.c.l.b16 %v1500
        %v1524 = vunpack.c.l.b16 %v1501
        %v1525 = vunpack.c.l.b16 %v1502
        %v1526 = vunpack.c.l.b16 %v1503
        %v1527 = vpack.c.b16 %v1520, %v1519
        %v1528 = vpack.c.b16 %v1522, %v1521
        %v1529 = vpack.c.b16 %v1524, %v1523
        %v1530 = vpack.c.b16 %v1526, %v1525
        %vm1535 = vcmask 523264
        %v1537 = vsel %vm1535, %v1495, 0
        %1539 = vmatprep.subr.bf16.mxu0 0
        %1540 = vmatpush1.bf16.msra.mxu0 %v1527
        %1541 = vmatprep.subr.bf16.mxu0 0
        %1542 = vmatpush1.bf16.msra.mxu0 %v1528
        %1543 = vmatprep.subr.bf16.mxu0 0
        %1544 = vmatpush1.bf16.msra.mxu0 %v1529
        %1545 = vmatprep.subr.bf16.mxu0 0
        %1546 = vmatpush1.bf16.msra.mxu0 %v1530
        %1547 = vmatprep.subr.bf16.mxu0 0
        %1548 = vmatpush1.bf16.msra.mxu0 0
        %1549 = vmatprep.subr.bf16.mxu0 0
        %1550 = vmatpush1.bf16.msra.mxu0 0
        %1551 = vmatprep.subr.bf16.mxu0 0
        %1552 = vmatpush1.bf16.msra.mxu0 0
        %1553 = vmatprep.subr.bf16.mxu0 0
        %1554 = vmatpush1.bf16.msra.mxu0 0
        %1555 = vmatprep.subr.bf16.mxu0 0
        %1556 = vmatpush1.bf16.msra.mxu0 0
        %1557 = vmatprep.subr.bf16.mxu0 0
        %1558 = vmatpush1.bf16.msra.mxu0 0
        %1559 = vmatprep.subr.bf16.mxu0 0
        %1560 = vmatpush1.bf16.msra.mxu0 0
        %1561 = vmatprep.subr.bf16.mxu0 0
        %1562 = vmatpush1.bf16.msra.mxu0 0
        %1563 = vmatprep.subr.bf16.mxu0 0
        %1564 = vmatpush1.bf16.msra.mxu0 0
        %1565 = vmatprep.subr.bf16.mxu0 0
        %1566 = vmatpush1.bf16.msra.mxu0 0
        %1567 = vmatprep.subr.bf16.mxu0 0
        %1568 = vmatpush1.bf16.msra.mxu0 0
        %1569 = vmatprep.subr.bf16.mxu0 0
        %1570 = vmatpush1.bf16.msra.mxu0 0
        %1571 = vmatprep.mubr.bf16.mxu0 0
        %1572 = vmatmul.mubr.bf16.gmra.mrb[0].mxu0 %v1537
        %v1573 = vpop.f32.mrb[0].mxu0
        %v1574 = vadd.f32 %v1509, %v1573
        %v1575 = vpop.f32.mrb[0].mxu0
        %v1576 = vpop.f32.mrb[0].mxu0
        %v1577 = vpop.f32.mrb[0].mxu0
        %1578 = vdwg.mxu0
        %v1579 = vadd.f32 %v1397, %v1574
        %1580 = vst.msk [vmem:[%s753] sm:$0xff] %vm772, %v1579
        %s1581 = sand.u32 %s397, 1
        %s1582 = scalar_lea.sflag [#allocation5], %s1581
        %s1583 = sand.u32 %s397, 1
        %s1584 = smul.addr %s1583, 8
        %s1585 = scalar_lea.vmem [#allocation29], %s1584
        // Predicated region
        $region149: #{temporal_transformer_forward.2} parent=83 // pred_check
          %p1586 = pneg %p407
        $region150: #{temporal_transformer_forward.2} parent=83 // pred_check_branch
          %1588 = sbr.rel (%p1586) target = $region152
        $region151: #{temporal_transformer_forward.2} parent=83 // pred_region
          %s1590 = ssub.s32 128, 128
          %1591 = vsyncadd %s1582, %s1590
          %s1592 = smul.addr %s43, 128
          %s1593 = scalar_lea.hbm %s16, %s1592
          %s1595 = sshll.u32 %s1585, 4
          %s1596 = int_to_ptr.vmem [resolvable:$true] %s1595
          %1598 = dma.vmem_to_hbm [thread:$0]  %s1596, 128, %s1593, %s1582
        $region152: #{temporal_transformer_forward.2} parent=83 // pred_fallthru
          _
      $region84: #{temporal_transformer_forward.2} parent=5 // pred_fallthru
        _
      %p1599 = scmp.le.s32.totalorder 2, %s38
      // Predicated region
      $region153: #{temporal_transformer_forward.2} parent=5 // pred_check
        %p1600 = pneg %p1599
      $region154: #{temporal_transformer_forward.2} parent=5 // pred_check_branch
        %1602 = sbr.rel (%p1600) target = $region156
      $region155: #{temporal_transformer_forward.2} parent=5 // pred_region
        %s1603 = ssub.s32 %s38, 2
        // Predicated region
        $region157: #{temporal_transformer_forward.2} parent=155 // pred_check
          %p1604 = pneg %p413
        $region158: #{temporal_transformer_forward.2} parent=155 // pred_check_branch
          %1606 = sbr.rel (%p1604) target = $region160
        $region159: #{temporal_transformer_forward.2} parent=155 // pred_region
          %s1607 = sand.u32 %s398, 1
          %s1608 = scalar_lea.sflag [#allocation5], %s1607
          %s1609 = sand.u32 %s398, 1
          %s1610 = smul.addr %s1609, 8
          %s1611 = scalar_lea.vmem [#allocation29], %s1610
          %1612 = dma.done %s1608, 128
        $region160: #{temporal_transformer_forward.2} parent=155 // pred_fallthru
          _
      $region156: #{temporal_transformer_forward.2} parent=5 // pred_fallthru
        _
    $region6: #{temporal_transformer_forward.2} parent=1 // loop_footer
      %s42 = sadd.s32 1, %s38
    $region7: #{temporal_transformer_forward.2} parent=1 // loop_footer_branch
      %37 = sbr.rel target = $region3
    $region8: #{temporal_transformer_forward.2} parent=1 // loop_exit
      _
    %1613 = vsyncpa [#allocation4], 1
    %s1614 = scalar_lea.sflag [#allocation4], 1
    %1615 = vsyncpa %s1614, 1
    %1616 = vsyncpa [#allocation7], 1
    %s1617 = scalar_lea.sflag [#allocation7], 1
    %1618 = vsyncpa %s1617, 1
    %1619 = vsyncpa [#allocation10], 1
    %1620 = vsyncpa [#allocation13], 1
    %1621 = vsyncpa [#allocation16], 1
    %1622 = vsyncpa [#allocation19], 1
    %1623 = vsyncpa [#allocation22], 1
    %1624 = vsyncpa [#allocation25], 1
    %1625 = vsyncpa [#allocation28], 1
    %1626 = vsyncpa [#allocation5], 1
    %s1627 = scalar_lea.sflag [#allocation5], 1
    %1628 = vsyncpa %s1627, 1

// kernel: temporal_transformer_forward.3
$region0: #{temporal_transformer_forward.3}
  #allocation0 [shape = 'u32[]', space=smem, size = 0x4, offset = 0x4, fixed_abs, tag = 'smem constant byte address 0x4 - core index']
  #allocation1 [shape = 'u32[144,128]{1,0:T(1,128)}', space=vmem, size = 0x12000, scoped, tag = 'internal scratch']
  #allocation2 [shape = 'f32[1,8,32]{2,1,0:T(8,128)}', space=vmem, size = 0x1000, scoped, tag = 'scratch operand']
  %s0 = inlined_call_operand.hbm [shape: f32[2,8,32], index: 0, kind: input, shape index: {}]
  %s1 = inlined_call_operand.hbm [shape: f32[2,1,8], index: 1, kind: input, shape index: {}]
  %s2 = inlined_call_operand.hbm [shape: f32[1,32], index: 2, kind: input, shape index: {}]
  %s3 = inlined_call_operand.hbm [shape: f32[1,32], index: 3, kind: input, shape index: {}]
  %s4 = inlined_call_operand.hbm [shape: bf16[32,96], index: 4, kind: input, shape index: {}]
  %s5 = inlined_call_operand.hbm [shape: f32[1,96], index: 5, kind: input, shape index: {}]
  %s6 = inlined_call_operand.hbm [shape: bf16[32,32], index: 6, kind: input, shape index: {}]
  %s7 = inlined_call_operand.hbm [shape: f32[1,32], index: 7, kind: input, shape index: {}]
  %s8 = inlined_call_operand.hbm [shape: f32[1,32], index: 8, kind: input, shape index: {}]
  %s9 = inlined_call_operand.hbm [shape: f32[1,32], index: 9, kind: input, shape index: {}]
  %s10 = inlined_call_operand.hbm [shape: bf16[32,64], index: 10, kind: input, shape index: {}]
  %s11 = inlined_call_operand.hbm [shape: f32[1,64], index: 11, kind: input, shape index: {}]
  %s12 = inlined_call_operand.hbm [shape: bf16[64,32], index: 12, kind: input, shape index: {}]
  %s13 = inlined_call_operand.hbm [shape: f32[1,32], index: 13, kind: input, shape index: {}]
  %s14 = inlined_call_operand.hbm [shape: f32[1,32], index: 14, kind: input, shape index: {}]
  %s15 = inlined_call_operand.hbm [shape: f32[1,32], index: 15, kind: input, shape index: {}]
  %s16 = inlined_call_operand.hbm [shape: f32[2,8,32], index: 16, kind: output, shape index: {}]
  %s17 = sld [smem:[#allocation0]]
  $region161: #{temporal_transformer_forward.3} parent=0
    _
  %s19 = ssub.s32 1, %s17
  %s20 = scalar_select 0, %s19, %s17
  $region1: #{temporal_transformer_forward.3} parent=0
    #allocation3 [shape = 'u8[8192]{0}', space=vmem, size = 0x2000, scoped, tag = 'input window, operand 0']
    #allocation4 [shape = 's32[2]{0}', space=sflag, size = 0x8, scoped, tag = 'scoped memory for temporal_transformer_forward.3']
    #allocation5 [shape = 's32[2]{0}', space=sflag, size = 0x8, scoped, tag = 'scoped memory for temporal_transformer_forward.3']
    #allocation6 [shape = 'u8[1024]{0}', space=vmem, size = 0x400, scoped, tag = 'input window, operand 1']
    #allocation7 [shape = 's32[2]{0}', space=sflag, size = 0x8, scoped, tag = 'scoped memory for temporal_transformer_forward.3']
    #allocation8 [shape = 'u8[512]{0}', space=vmem, size = 0x400, scoped, tag = 'input window, operand 2, single buffered']
    #allocation9 [shape = 'u8[512]{0}', space=vmem, size = 0x400, scoped, tag = 'input window, operand 3, single buffered']
    #allocation10 [shape = 's32[1]{0}', space=sflag, size = 0x4, scoped, tag = 'scoped memory for temporal_transformer_forward.3']
    #allocation11 [shape = 'u8[8192]{0}', space=vmem, size = 0x2000, scoped, tag = 'input window, operand 4, single buffered']
    #allocation12 [shape = 'u8[512]{0}', space=vmem, size = 0x400, scoped, tag = 'input window, operand 5, single buffered']
    #allocation13 [shape = 's32[1]{0}', space=sflag, size = 0x4, scoped, tag = 'scoped memory for temporal_transformer_forward.3']
    #allocation14 [shape = 'u8[8192]{0}', space=vmem, size = 0x2000, scoped, tag = 'input window, operand 6, single buffered']
    #allocation15 [shape = 'u8[512]{0}', space=vmem, size = 0x400, scoped, tag = 'input window, operand 7, single buffered']
    #allocation16 [shape = 's32[1]{0}', space=sflag, size = 0x4, scoped, tag = 'scoped memory for temporal_transformer_forward.3']
    #allocation17 [shape = 'u8[512]{0}', space=vmem, size = 0x400, scoped, tag = 'input window, operand 8, single buffered']
    #allocation18 [shape = 'u8[512]{0}', space=vmem, size = 0x400, scoped, tag = 'input window, operand 9, single buffered']
    #allocation19 [shape = 's32[1]{0}', space=sflag, size = 0x4, scoped, tag = 'scoped memory for temporal_transformer_forward.3']
    #allocation20 [shape = 'u8[8192]{0}', space=vmem, size = 0x2000, scoped, tag = 'input window, operand 10, single buffered']
    #allocation21 [shape = 'u8[512]{0}', space=vmem, size = 0x400, scoped, tag = 'input window, operand 11, single buffered']
    #allocation22 [shape = 's32[1]{0}', space=sflag, size = 0x4, scoped, tag = 'scoped memory for temporal_transformer_forward.3']
    #allocation23 [shape = 'u8[16384]{0}', space=vmem, size = 0x4000, scoped, tag = 'input window, operand 12, single buffered']
    #allocation24 [shape = 'u8[512]{0}', space=vmem, size = 0x400, scoped, tag = 'input window, operand 13, single buffered']
    #allocation25 [shape = 's32[1]{0}', space=sflag, size = 0x4, scoped, tag = 'scoped memory for temporal_transformer_forward.3']
    #allocation26 [shape = 'u8[512]{0}', space=vmem, size = 0x400, scoped, tag = 'input window, operand 14, single buffered']
    #allocation27 [shape = 'u8[512]{0}', space=vmem, size = 0x400, scoped, tag = 'input window, operand 15, single buffered']
    #allocation28 [shape = 's32[1]{0}', space=sflag, size = 0x4, scoped, tag = 'scoped memory for temporal_transformer_forward.3']
    #allocation29 [shape = 'u8[8192]{0}', space=vmem, size = 0x2000, scoped, tag = 'output window, operand 0']
    %21 = vsyncpa [#allocation4], 0
    %s22 = scalar_lea.sflag [#allocation4], 1
    %23 = vsyncpa %s22, 0
    %24 = vsyncpa [#allocation7], 0
    %s25 = scalar_lea.sflag [#allocation7], 1
    %26 = vsyncpa %s25, 0
    %27 = vsyncpa [#allocation10], 0
    %28 = vsyncpa [#allocation13], 0
    %29 = vsyncpa [#allocation16], 0
    %30 = vsyncpa [#allocation19], 0
    %31 = vsyncpa [#allocation22], 0
    %32 = vsyncpa [#allocation25], 0
    %33 = vsyncpa [#allocation28], 0
    %34 = vsyncpa [#allocation5], 0
    %s35 = scalar_lea.sflag [#allocation5], 1
    %36 = vsyncpa %s35, 0
    loop: start=0, step=1, limit=4
    $region2: #{temporal_transformer_forward.3} parent=1 // loop_pre_header
      _
    $region3: #{temporal_transformer_forward.3} parent=1 // loop_header
      %s38 = sphi 0, %s42
      %p39 = scmp.ge.s32.totalorder %s38, 4
      %s48 = sphi 0, %s50
      %s51 = sphi 0, %s48
      %s52 = sphi 0, %s51
      %s68 = sphi 0, %s52
      %s74 = sphi 0, %s76
      %s77 = sphi 0, %s74
      %s78 = sphi 0, %s77
      %s94 = sphi 0, %s78
      %s98 = sphi 0, %s98
      %s100 = sphi 0, %s98
      %s101 = sphi 0, %s100
      %s115 = sphi 0, %s101
      %s119 = sphi 0, %s119
      %s121 = sphi 0, %s119
      %s122 = sphi 0, %s121
      %s136 = sphi 0, %s122
      %s140 = sphi 0, %s140
      %s142 = sphi 0, %s140
      %s143 = sphi 0, %s142
      %s157 = sphi 0, %s143
      %s161 = sphi 0, %s161
      %s163 = sphi 0, %s161
      %s164 = sphi 0, %s163
      %s178 = sphi 0, %s164
      %s182 = sphi 0, %s182
      %s184 = sphi 0, %s182
      %s185 = sphi 0, %s184
      %s199 = sphi 0, %s185
      %s203 = sphi 0, %s203
      %s205 = sphi 0, %s203
      %s206 = sphi 0, %s205
      %s220 = sphi 0, %s206
      %s224 = sphi 0, %s224
      %s226 = sphi 0, %s224
      %s227 = sphi 0, %s226
      %s241 = sphi 0, %s227
      %s245 = sphi 0, %s245
      %s247 = sphi 0, %s245
      %s248 = sphi 0, %s247
      %s262 = sphi 0, %s248
      %s266 = sphi 0, %s266
      %s268 = sphi 0, %s266
      %s269 = sphi 0, %s268
      %s283 = sphi 0, %s269
      %s287 = sphi 0, %s287
      %s289 = sphi 0, %s287
      %s290 = sphi 0, %s289
      %s304 = sphi 0, %s290
      %s308 = sphi 0, %s308
      %s310 = sphi 0, %s308
      %s311 = sphi 0, %s310
      %s325 = sphi 0, %s311
      %s329 = sphi 0, %s329
      %s331 = sphi 0, %s329
      %s332 = sphi 0, %s331
      %s346 = sphi 0, %s332
      %s350 = sphi 0, %s350
      %s352 = sphi 0, %s350
      %s353 = sphi 0, %s352
      %s367 = sphi 0, %s353
      %s371 = sphi 0, %s371
      %s373 = sphi 0, %s371
      %s374 = sphi 0, %s373
      %s388 = sphi 0, %s374
      %s394 = sphi 0, %s396
      %s397 = sphi 0, %s394
      %s398 = sphi 0, %s397
      %s414 = sphi 0, %s398
    $region4: #{temporal_transformer_forward.3} parent=1 // loop_header_branch
      %41 = sbr.rel (%p39) target = $region8
    $region5: #{temporal_transformer_forward.3} parent=1 // loop_body
      %s43 = ssub.s32 %s38, 1
      %s44 = ssub.s32 %s38, 2
      %s45 = sadd.s32 %s38, 1
      %s46 = ssub.s32 %s38, %s45
      %p47 = scmp.eq.s32.totalorder %s46, 0
      %s49 = sadd.s32 %s48, 1
      %s50 = scalar_select %p47, %s48, %s49
      %p53 = pneg %p47
      %p54 = scmp.eq.s32.totalorder %s38, 1
      %p55 = por %p53, %p54
      %p56 = scmp.ne.s32.totalorder %s48, %s51
      %p57 = scmp.eq.s32.totalorder %s38, 0
      %p58 = por %p56, %p57
      %p59 = scmp.ne.s32.totalorder %s48, %s51
      %p60 = scmp.eq.s32.totalorder %s43, 1
      %p61 = por %p59, %p60
      %p62 = scmp.ne.s32.totalorder %s51, %s52
      %p63 = scmp.eq.s32.totalorder %s43, 0
      %p64 = por %p62, %p63
      %p65 = scmp.ne.s32.totalorder %s51, %s52
      %p66 = scmp.eq.s32.totalorder %s44, 1
      %p67 = por %p65, %p66
      %p69 = scmp.ne.s32.totalorder %s52, %s68
      %p70 = scmp.eq.s32.totalorder %s44, 0
      %p71 = por %p69, %p70
      %s72 = ssub.s32 %s38, %s45
      %p73 = scmp.eq.s32.totalorder %s72, 0
      %s75 = sadd.s32 %s74, 1
      %s76 = scalar_select %p73, %s74, %s75
      %p79 = pneg %p73
      %p80 = scmp.eq.s32.totalorder %s38, 1
      %p81 = por %p79, %p80
      %p82 = scmp.ne.s32.totalorder %s74, %s77
      %p83 = scmp.eq.s32.totalorder %s38, 0
      %p84 = por %p82, %p83
      %p85 = scmp.ne.s32.totalorder %s74, %s77
      %p86 = scmp.eq.s32.totalorder %s43, 1
      %p87 = por %p85, %p86
      %p88 = scmp.ne.s32.totalorder %s77, %s78
      %p89 = scmp.eq.s32.totalorder %s43, 0
      %p90 = por %p88, %p89
      %p91 = scmp.ne.s32.totalorder %s77, %s78
      %p92 = scmp.eq.s32.totalorder %s44, 1
      %p93 = por %p91, %p92
      %p95 = scmp.ne.s32.totalorder %s78, %s94
      %p96 = scmp.eq.s32.totalorder %s44, 0
      %p97 = por %p95, %p96
      %s99 = sadd.s32 %s98, 1
      %p102 = scmp.eq.s32.totalorder %s38, 1
      %p103 = scmp.ne.s32.totalorder %s98, %s100
      %p104 = scmp.eq.s32.totalorder %s38, 0
      %p105 = por %p103, %p104
      %p106 = scmp.ne.s32.totalorder %s98, %s100
      %p107 = scmp.eq.s32.totalorder %s43, 1
      %p108 = por %p106, %p107
      %p109 = scmp.ne.s32.totalorder %s100, %s101
      %p110 = scmp.eq.s32.totalorder %s43, 0
      %p111 = por %p109, %p110
      %p112 = scmp.ne.s32.totalorder %s100, %s101
      %p113 = scmp.eq.s32.totalorder %s44, 1
      %p114 = por %p112, %p113
      %p116 = scmp.ne.s32.totalorder %s101, %s115
      %p117 = scmp.eq.s32.totalorder %s44, 0
      %p118 = por %p116, %p117
      %s120 = sadd.s32 %s119, 1
      %p123 = scmp.eq.s32.totalorder %s38, 1
      %p124 = scmp.ne.s32.totalorder %s119, %s121
      %p125 = scmp.eq.s32.totalorder %s38, 0
      %p126 = por %p124, %p125
      %p127 = scmp.ne.s32.totalorder %s119, %s121
      %p128 = scmp.eq.s32.totalorder %s43, 1
      %p129 = por %p127, %p128
      %p130 = scmp.ne.s32.totalorder %s121, %s122
      %p131 = scmp.eq.s32.totalorder %s43, 0
      %p132 = por %p130, %p131
      %p133 = scmp.ne.s32.totalorder %s121, %s122
      %p134 = scmp.eq.s32.totalorder %s44, 1
      %p135 = por %p133, %p134
      %p137 = scmp.ne.s32.totalorder %s122, %s136
      %p138 = scmp.eq.s32.totalorder %s44, 0
      %p139 = por %p137, %p138
      %s141 = sadd.s32 %s140, 1
      %p144 = scmp.eq.s32.totalorder %s38, 1
      %p145 = scmp.ne.s32.totalorder %s140, %s142
      %p146 = scmp.eq.s32.totalorder %s38, 0
      %p147 = por %p145, %p146
      %p148 = scmp.ne.s32.totalorder %s140, %s142
      %p149 = scmp.eq.s32.totalorder %s43, 1
      %p150 = por %p148, %p149
      %p151 = scmp.ne.s32.totalorder %s142, %s143
      %p152 = scmp.eq.s32.totalorder %s43, 0
      %p153 = por %p151, %p152
      %p154 = scmp.ne.s32.totalorder %s142, %s143
      %p155 = scmp.eq.s32.totalorder %s44, 1
      %p156 = por %p154, %p155
      %p158 = scmp.ne.s32.totalorder %s143, %s157
      %p159 = scmp.eq.s32.totalorder %s44, 0
      %p160 = por %p158, %p159
      %s162 = sadd.s32 %s161, 1
      %p165 = scmp.eq.s32.totalorder %s38, 1
      %p166 = scmp.ne.s32.totalorder %s161, %s163
      %p167 = scmp.eq.s32.totalorder %s38, 0
      %p168 = por %p166, %p167
      %p169 = scmp.ne.s32.totalorder %s161, %s163
      %p170 = scmp.eq.s32.totalorder %s43, 1
      %p171 = por %p169, %p170
      %p172 = scmp.ne.s32.totalorder %s163, %s164
      %p173 = scmp.eq.s32.totalorder %s43, 0
      %p174 = por %p172, %p173
      %p175 = scmp.ne.s32.totalorder %s163, %s164
      %p176 = scmp.eq.s32.totalorder %s44, 1
      %p177 = por %p175, %p176
      %p179 = scmp.ne.s32.totalorder %s164, %s178
      %p180 = scmp.eq.s32.totalorder %s44, 0
      %p181 = por %p179, %p180
      %s183 = sadd.s32 %s182, 1
      %p186 = scmp.eq.s32.totalorder %s38, 1
      %p187 = scmp.ne.s32.totalorder %s182, %s184
      %p188 = scmp.eq.s32.totalorder %s38, 0
      %p189 = por %p187, %p188
      %p190 = scmp.ne.s32.totalorder %s182, %s184
      %p191 = scmp.eq.s32.totalorder %s43, 1
      %p192 = por %p190, %p191
      %p193 = scmp.ne.s32.totalorder %s184, %s185
      %p194 = scmp.eq.s32.totalorder %s43, 0
      %p195 = por %p193, %p194
      %p196 = scmp.ne.s32.totalorder %s184, %s185
      %p197 = scmp.eq.s32.totalorder %s44, 1
      %p198 = por %p196, %p197
      %p200 = scmp.ne.s32.totalorder %s185, %s199
      %p201 = scmp.eq.s32.totalorder %s44, 0
      %p202 = por %p200, %p201
      %s204 = sadd.s32 %s203, 1
      %p207 = scmp.eq.s32.totalorder %s38, 1
      %p208 = scmp.ne.s32.totalorder %s203, %s205
      %p209 = scmp.eq.s32.totalorder %s38, 0
      %p210 = por %p208, %p209
      %p211 = scmp.ne.s32.totalorder %s203, %s205
      %p212 = scmp.eq.s32.totalorder %s43, 1
      %p213 = por %p211, %p212
      %p214 = scmp.ne.s32.totalorder %s205, %s206
      %p215 = scmp.eq.s32.totalorder %s43, 0
      %p216 = por %p214, %p215
      %p217 = scmp.ne.s32.totalorder %s205, %s206
      %p218 = scmp.eq.s32.totalorder %s44, 1
      %p219 = por %p217, %p218
      %p221 = scmp.ne.s32.totalorder %s206, %s220
      %p222 = scmp.eq.s32.totalorder %s44, 0
      %p223 = por %p221, %p222
      %s225 = sadd.s32 %s224, 1
      %p228 = scmp.eq.s32.totalorder %s38, 1
      %p229 = scmp.ne.s32.totalorder %s224, %s226
      %p230 = scmp.eq.s32.totalorder %s38, 0
      %p231 = por %p229, %p230
      %p232 = scmp.ne.s32.totalorder %s224, %s226
      %p233 = scmp.eq.s32.totalorder %s43, 1
      %p234 = por %p232, %p233
      %p235 = scmp.ne.s32.totalorder %s226, %s227
      %p236 = scmp.eq.s32.totalorder %s43, 0
      %p237 = por %p235, %p236
      %p238 = scmp.ne.s32.totalorder %s226, %s227
      %p239 = scmp.eq.s32.totalorder %s44, 1
      %p240 = por %p238, %p239
      %p242 = scmp.ne.s32.totalorder %s227, %s241
      %p243 = scmp.eq.s32.totalorder %s44, 0
      %p244 = por %p242, %p243
      %s246 = sadd.s32 %s245, 1
      %p249 = scmp.eq.s32.totalorder %s38, 1
      %p250 = scmp.ne.s32.totalorder %s245, %s247
      %p251 = scmp.eq.s32.totalorder %s38, 0
      %p252 = por %p250, %p251
      %p253 = scmp.ne.s32.totalorder %s245, %s247
      %p254 = scmp.eq.s32.totalorder %s43, 1
      %p255 = por %p253, %p254
      %p256 = scmp.ne.s32.totalorder %s247, %s248
      %p257 = scmp.eq.s32.totalorder %s43, 0
      %p258 = por %p256, %p257
      %p259 = scmp.ne.s32.totalorder %s247, %s248
      %p260 = scmp.eq.s32.totalorder %s44, 1
      %p261 = por %p259, %p260
      %p263 = scmp.ne.s32.totalorder %s248, %s262
      %p264 = scmp.eq.s32.totalorder %s44, 0
      %p265 = por %p263, %p264
      %s267 = sadd.s32 %s266, 1
      %p270 = scmp.eq.s32.totalorder %s38, 1
      %p271 = scmp.ne.s32.totalorder %s266, %s268
      %p272 = scmp.eq.s32.totalorder %s38, 0
      %p273 = por %p271, %p272
      %p274 = scmp.ne.s32.totalorder %s266, %s268
      %p275 = scmp.eq.s32.totalorder %s43, 1
      %p276 = por %p274, %p275
      %p277 = scmp.ne.s32.totalorder %s268, %s269
      %p278 = scmp.eq.s32.totalorder %s43, 0
      %p279 = por %p277, %p278
      %p280 = scmp.ne.s32.totalorder %s268, %s269
      %p281 = scmp.eq.s32.totalorder %s44, 1
      %p282 = por %p280, %p281
      %p284 = scmp.ne.s32.totalorder %s269, %s283
      %p285 = scmp.eq.s32.totalorder %s44, 0
      %p286 = por %p284, %p285
      %s288 = sadd.s32 %s287, 1
      %p291 = scmp.eq.s32.totalorder %s38, 1
      %p292 = scmp.ne.s32.totalorder %s287, %s289
      %p293 = scmp.eq.s32.totalorder %s38, 0
      %p294 = por %p292, %p293
      %p295 = scmp.ne.s32.totalorder %s287, %s289
      %p296 = scmp.eq.s32.totalorder %s43, 1
      %p297 = por %p295, %p296
      %p298 = scmp.ne.s32.totalorder %s289, %s290
      %p299 = scmp.eq.s32.totalorder %s43, 0
      %p300 = por %p298, %p299
      %p301 = scmp.ne.s32.totalorder %s289, %s290
      %p302 = scmp.eq.s32.totalorder %s44, 1
      %p303 = por %p301, %p302
      %p305 = scmp.ne.s32.totalorder %s290, %s304
      %p306 = scmp.eq.s32.totalorder %s44, 0
      %p307 = por %p305, %p306
      %s309 = sadd.s32 %s308, 1
      %p312 = scmp.eq.s32.totalorder %s38, 1
      %p313 = scmp.ne.s32.totalorder %s308, %s310
      %p314 = scmp.eq.s32.totalorder %s38, 0
      %p315 = por %p313, %p314
      %p316 = scmp.ne.s32.totalorder %s308, %s310
      %p317 = scmp.eq.s32.totalorder %s43, 1
      %p318 = por %p316, %p317
      %p319 = scmp.ne.s32.totalorder %s310, %s311
      %p320 = scmp.eq.s32.totalorder %s43, 0
      %p321 = por %p319, %p320
      %p322 = scmp.ne.s32.totalorder %s310, %s311
      %p323 = scmp.eq.s32.totalorder %s44, 1
      %p324 = por %p322, %p323
      %p326 = scmp.ne.s32.totalorder %s311, %s325
      %p327 = scmp.eq.s32.totalorder %s44, 0
      %p328 = por %p326, %p327
      %s330 = sadd.s32 %s329, 1
      %p333 = scmp.eq.s32.totalorder %s38, 1
      %p334 = scmp.ne.s32.totalorder %s329, %s331
      %p335 = scmp.eq.s32.totalorder %s38, 0
      %p336 = por %p334, %p335
      %p337 = scmp.ne.s32.totalorder %s329, %s331
      %p338 = scmp.eq.s32.totalorder %s43, 1
      %p339 = por %p337, %p338
      %p340 = scmp.ne.s32.totalorder %s331, %s332
      %p341 = scmp.eq.s32.totalorder %s43, 0
      %p342 = por %p340, %p341
      %p343 = scmp.ne.s32.totalorder %s331, %s332
      %p344 = scmp.eq.s32.totalorder %s44, 1
      %p345 = por %p343, %p344
      %p347 = scmp.ne.s32.totalorder %s332, %s346
      %p348 = scmp.eq.s32.totalorder %s44, 0
      %p349 = por %p347, %p348
      %s351 = sadd.s32 %s350, 1
      %p354 = scmp.eq.s32.totalorder %s38, 1
      %p355 = scmp.ne.s32.totalorder %s350, %s352
      %p356 = scmp.eq.s32.totalorder %s38, 0
      %p357 = por %p355, %p356
      %p358 = scmp.ne.s32.totalorder %s350, %s352
      %p359 = scmp.eq.s32.totalorder %s43, 1
      %p360 = por %p358, %p359
      %p361 = scmp.ne.s32.totalorder %s352, %s353
      %p362 = scmp.eq.s32.totalorder %s43, 0
      %p363 = por %p361, %p362
      %p364 = scmp.ne.s32.totalorder %s352, %s353
      %p365 = scmp.eq.s32.totalorder %s44, 1
      %p366 = por %p364, %p365
      %p368 = scmp.ne.s32.totalorder %s353, %s367
      %p369 = scmp.eq.s32.totalorder %s44, 0
      %p370 = por %p368, %p369
      %s372 = sadd.s32 %s371, 1
      %p375 = scmp.eq.s32.totalorder %s38, 1
      %p376 = scmp.ne.s32.totalorder %s371, %s373
      %p377 = scmp.eq.s32.totalorder %s38, 0
      %p378 = por %p376, %p377
      %p379 = scmp.ne.s32.totalorder %s371, %s373
      %p380 = scmp.eq.s32.totalorder %s43, 1
      %p381 = por %p379, %p380
      %p382 = scmp.ne.s32.totalorder %s373, %s374
      %p383 = scmp.eq.s32.totalorder %s43, 0
      %p384 = por %p382, %p383
      %p385 = scmp.ne.s32.totalorder %s373, %s374
      %p386 = scmp.eq.s32.totalorder %s44, 1
      %p387 = por %p385, %p386
      %p389 = scmp.ne.s32.totalorder %s374, %s388
      %p390 = scmp.eq.s32.totalorder %s44, 0
      %p391 = por %p389, %p390
      %s392 = ssub.s32 %s38, %s45
      %p393 = scmp.eq.s32.totalorder %s392, 0
      %s395 = sadd.s32 %s394, 1
      %s396 = scalar_select %p393, %s394, %s395
      %p399 = pneg %p393
      %p400 = scmp.eq.s32.totalorder %s38, 1
      %p401 = por %p399, %p400
      %p402 = scmp.ne.s32.totalorder %s394, %s397
      %p403 = scmp.eq.s32.totalorder %s38, 0
      %p404 = por %p402, %p403
      %p405 = scmp.ne.s32.totalorder %s394, %s397
      %p406 = scmp.eq.s32.totalorder %s43, 1
      %p407 = por %p405, %p406
      %p408 = scmp.ne.s32.totalorder %s397, %s398
      %p409 = scmp.eq.s32.totalorder %s43, 0
      %p410 = por %p408, %p409
      %p411 = scmp.ne.s32.totalorder %s397, %s398
      %p412 = scmp.eq.s32.totalorder %s44, 1
      %p413 = por %p411, %p412
      %p415 = scmp.ne.s32.totalorder %s398, %s414
      %p416 = scmp.eq.s32.totalorder %s44, 0
      %p417 = por %p415, %p416
      %p418 = scmp.le.s32.totalorder 1, %s38
      %p419 = scmp.lt.s32.totalorder %s38, 3
      %p420 = pnand %p418, %p419
      %p421 = pneg %p420
      // Predicated region
      $region9: #{temporal_transformer_forward.3} parent=5 // pred_check
        _
      $region10: #{temporal_transformer_forward.3} parent=5 // pred_check_branch
        %423 = sbr.rel (%p420) target = $region12
      $region11: #{temporal_transformer_forward.3} parent=5 // pred_region
        %s424 = ssub.s32 %s38, 1
        // Predicated region
        $region13: #{temporal_transformer_forward.3} parent=11 // pred_check
          %p425 = pneg %p111
        $region14: #{temporal_transformer_forward.3} parent=11 // pred_check_branch
          %427 = sbr.rel (%p425) target = $region16
        $region15: #{temporal_transformer_forward.3} parent=11 // pred_region
          %s429 = ssub.s32 16, 16
          %430 = vsyncadd [#allocation7], %s429
          %s432 = sshll.u32 [#allocation8], 4
          %s433 = int_to_ptr.vmem [resolvable:$true] %s432
          %435 = dma.hbm_to_vmem [thread:$0]  %s2, 16, %s433, [#allocation7]
        $region16: #{temporal_transformer_forward.3} parent=11 // pred_fallthru
          _
        // Predicated region
        $region17: #{temporal_transformer_forward.3} parent=11 // pred_check
          %p436 = pneg %p132
        $region18: #{temporal_transformer_forward.3} parent=11 // pred_check_branch
          %438 = sbr.rel (%p436) target = $region20
        $region19: #{temporal_transformer_forward.3} parent=11 // pred_region
          %s440 = ssub.s32 16, 16
          %441 = vsyncadd [#allocation10], %s440
          %s443 = sshll.u32 [#allocation9], 4
          %s444 = int_to_ptr.vmem [resolvable:$true] %s443
          %446 = dma.hbm_to_vmem [thread:$0]  %s3, 16, %s444, [#allocation10]
        $region20: #{temporal_transformer_forward.3} parent=11 // pred_fallthru
          _
        // Predicated region
        $region21: #{temporal_transformer_forward.3} parent=11 // pred_check
          %p447 = pneg %p153
        $region22: #{temporal_transformer_forward.3} parent=11 // pred_check_branch
          %449 = sbr.rel (%p447) target = $region24
        $region23: #{temporal_transformer_forward.3} parent=11 // pred_region
          %s451 = ssub.s32 256, 256
          %452 = vsyncadd [#allocation10], %s451
          %s453 = sshll.u32 [#allocation11], 4
          %s454 = int_to_ptr.vmem [resolvable:$true] %s453
          %459 = dma.hbm_to_vmem [thread:$0]  %s4, 256, %s454, [#allocation10], 64, 64, 4
        $region24: #{temporal_transformer_forward.3} parent=11 // pred_fallthru
          _
        // Predicated region
        $region25: #{temporal_transformer_forward.3} parent=11 // pred_check
          %p460 = pneg %p174
        $region26: #{temporal_transformer_forward.3} parent=11 // pred_check_branch
          %462 = sbr.rel (%p460) target = $region28
        $region27: #{temporal_transformer_forward.3} parent=11 // pred_region
          %s464 = ssub.s32 16, 16
          %465 = vsyncadd [#allocation13], %s464
          %s467 = sshll.u32 [#allocation12], 4
          %s468 = int_to_ptr.vmem [resolvable:$true] %s467
          %470 = dma.hbm_to_vmem [thread:$0]  %s5, 16, %s468, [#allocation13]
        $region28: #{temporal_transformer_forward.3} parent=11 // pred_fallthru
          _
        // Predicated region
        $region29: #{temporal_transformer_forward.3} parent=11 // pred_check
          %p471 = pneg %p195
        $region30: #{temporal_transformer_forward.3} parent=11 // pred_check_branch
          %473 = sbr.rel (%p471) target = $region32
        $region31: #{temporal_transformer_forward.3} parent=11 // pred_region
          %s475 = ssub.s32 256, 256
          %476 = vsyncadd [#allocation13], %s475
          %s477 = sshll.u32 [#allocation14], 4
          %s478 = int_to_ptr.vmem [resolvable:$true] %s477
          %483 = dma.hbm_to_vmem [thread:$0]  %s6, 256, %s478, [#allocation13], 64, 64, 4
        $region32: #{temporal_transformer_forward.3} parent=11 // pred_fallthru
          _
        // Predicated region
        $region33: #{temporal_transformer_forward.3} parent=11 // pred_check
          %p484 = pneg %p216
        $region34: #{temporal_transformer_forward.3} parent=11 // pred_check_branch
          %486 = sbr.rel (%p484) target = $region36
        $region35: #{temporal_transformer_forward.3} parent=11 // pred_region
          %s488 = ssub.s32 16, 16
          %489 = vsyncadd [#allocation16], %s488
          %s491 = sshll.u32 [#allocation15], 4
          %s492 = int_to_ptr.vmem [resolvable:$true] %s491
          %494 = dma.hbm_to_vmem [thread:$0]  %s7, 16, %s492, [#allocation16]
        $region36: #{temporal_transformer_forward.3} parent=11 // pred_fallthru
          _
        // Predicated region
        $region37: #{temporal_transformer_forward.3} parent=11 // pred_check
          %p495 = pneg %p237
        $region38: #{temporal_transformer_forward.3} parent=11 // pred_check_branch
          %497 = sbr.rel (%p495) target = $region40
        $region39: #{temporal_transformer_forward.3} parent=11 // pred_region
          %s499 = ssub.s32 16, 16
          %500 = vsyncadd [#allocation16], %s499
          %s502 = sshll.u32 [#allocation17], 4
          %s503 = int_to_ptr.vmem [resolvable:$true] %s502
          %505 = dma.hbm_to_vmem [thread:$0]  %s8, 16, %s503, [#allocation16]
        $region40: #{temporal_transformer_forward.3} parent=11 // pred_fallthru
          _
        // Predicated region
        $region41: #{temporal_transformer_forward.3} parent=11 // pred_check
          %p506 = pneg %p258
        $region42: #{temporal_transformer_forward.3} parent=11 // pred_check_branch
          %508 = sbr.rel (%p506) target = $region44
        $region43: #{temporal_transformer_forward.3} parent=11 // pred_region
          %s510 = ssub.s32 16, 16
          %511 = vsyncadd [#allocation19], %s510
          %s513 = sshll.u32 [#allocation18], 4
          %s514 = int_to_ptr.vmem [resolvable:$true] %s513
          %516 = dma.hbm_to_vmem [thread:$0]  %s9, 16, %s514, [#allocation19]
        $region44: #{temporal_transformer_forward.3} parent=11 // pred_fallthru
          _
        // Predicated region
        $region45: #{temporal_transformer_forward.3} parent=11 // pred_check
          %p517 = pneg %p279
        $region46: #{temporal_transformer_forward.3} parent=11 // pred_check_branch
          %519 = sbr.rel (%p517) target = $region48
        $region47: #{temporal_transformer_forward.3} parent=11 // pred_region
          %s521 = ssub.s32 256, 256
          %522 = vsyncadd [#allocation19], %s521
          %s523 = sshll.u32 [#allocation20], 4
          %s524 = int_to_ptr.vmem [resolvable:$true] %s523
          %529 = dma.hbm_to_vmem [thread:$0]  %s10, 256, %s524, [#allocation19], 64, 64, 4
        $region48: #{temporal_transformer_forward.3} parent=11 // pred_fallthru
          _
        // Predicated region
        $region49: #{temporal_transformer_forward.3} parent=11 // pred_check
          %p530 = pneg %p300
        $region50: #{temporal_transformer_forward.3} parent=11 // pred_check_branch
          %532 = sbr.rel (%p530) target = $region52
        $region51: #{temporal_transformer_forward.3} parent=11 // pred_region
          %s534 = ssub.s32 16, 16
          %535 = vsyncadd [#allocation22], %s534
          %s537 = sshll.u32 [#allocation21], 4
          %s538 = int_to_ptr.vmem [resolvable:$true] %s537
          %540 = dma.hbm_to_vmem [thread:$0]  %s11, 16, %s538, [#allocation22]
        $region52: #{temporal_transformer_forward.3} parent=11 // pred_fallthru
          _
        // Predicated region
        $region53: #{temporal_transformer_forward.3} parent=11 // pred_check
          %p541 = pneg %p321
        $region54: #{temporal_transformer_forward.3} parent=11 // pred_check_branch
          %543 = sbr.rel (%p541) target = $region56
        $region55: #{temporal_transformer_forward.3} parent=11 // pred_region
          %s545 = ssub.s32 512, 512
          %546 = vsyncadd [#allocation22], %s545
          %s547 = sshll.u32 [#allocation23], 4
          %s548 = int_to_ptr.vmem [resolvable:$true] %s547
          %553 = dma.hbm_to_vmem [thread:$0]  %s12, 512, %s548, [#allocation22], 64, 64, 4
        $region56: #{temporal_transformer_forward.3} parent=11 // pred_fallthru
          _
        // Predicated region
        $region57: #{temporal_transformer_forward.3} parent=11 // pred_check
          %p554 = pneg %p342
        $region58: #{temporal_transformer_forward.3} parent=11 // pred_check_branch
          %556 = sbr.rel (%p554) target = $region60
        $region59: #{temporal_transformer_forward.3} parent=11 // pred_region
          %s558 = ssub.s32 16, 16
          %559 = vsyncadd [#allocation25], %s558
          %s561 = sshll.u32 [#allocation24], 4
          %s562 = int_to_ptr.vmem [resolvable:$true] %s561
          %564 = dma.hbm_to_vmem [thread:$0]  %s13, 16, %s562, [#allocation25]
        $region60: #{temporal_transformer_forward.3} parent=11 // pred_fallthru
          _
        // Predicated region
        $region61: #{temporal_transformer_forward.3} parent=11 // pred_check
          %p565 = pneg %p363
        $region62: #{temporal_transformer_forward.3} parent=11 // pred_check_branch
          %567 = sbr.rel (%p565) target = $region64
        $region63: #{temporal_transformer_forward.3} parent=11 // pred_region
          %s569 = ssub.s32 16, 16
          %570 = vsyncadd [#allocation25], %s569
          %s572 = sshll.u32 [#allocation26], 4
          %s573 = int_to_ptr.vmem [resolvable:$true] %s572
          %575 = dma.hbm_to_vmem [thread:$0]  %s14, 16, %s573, [#allocation25]
        $region64: #{temporal_transformer_forward.3} parent=11 // pred_fallthru
          _
        // Predicated region
        $region65: #{temporal_transformer_forward.3} parent=11 // pred_check
          %p576 = pneg %p384
        $region66: #{temporal_transformer_forward.3} parent=11 // pred_check_branch
          %578 = sbr.rel (%p576) target = $region68
        $region67: #{temporal_transformer_forward.3} parent=11 // pred_region
          %s580 = ssub.s32 16, 16
          %581 = vsyncadd [#allocation28], %s580
          %s583 = sshll.u32 [#allocation27], 4
          %s584 = int_to_ptr.vmem [resolvable:$true] %s583
          %586 = dma.hbm_to_vmem [thread:$0]  %s15, 16, %s584, [#allocation28]
        $region68: #{temporal_transformer_forward.3} parent=11 // pred_fallthru
          _
      $region12: #{temporal_transformer_forward.3} parent=5 // pred_fallthru
        _
      %p587 = scmp.lt.s32.totalorder %s38, 2
      // Predicated region
      $region69: #{temporal_transformer_forward.3} parent=5 // pred_check
        %p588 = pneg %p587
      $region70: #{temporal_transformer_forward.3} parent=5 // pred_check_branch
        %590 = sbr.rel (%p588) target = $region72
      $region71: #{temporal_transformer_forward.3} parent=5 // pred_region
        // Predicated region
        $region73: #{temporal_transformer_forward.3} parent=71 // pred_check
          %p591 = pneg %p58
        $region74: #{temporal_transformer_forward.3} parent=71 // pred_check_branch
          %593 = sbr.rel (%p591) target = $region76
        $region75: #{temporal_transformer_forward.3} parent=71 // pred_region
          %s594 = sand.u32 %s48, 1
          %s595 = scalar_lea.sflag [#allocation4], %s594
          %s596 = sand.u32 %s48, 1
          %s597 = smul.addr %s596, 8
          %s598 = scalar_lea.vmem [#allocation3], %s597
          %s600 = ssub.s32 128, 128
          %601 = vsyncadd %s595, %s600
          %s602 = smul.addr %s38, 128
          %s603 = scalar_lea.hbm %s0, %s602
          %s605 = sshll.u32 %s598, 4
          %s606 = int_to_ptr.vmem [resolvable:$true] %s605
          %608 = dma.hbm_to_vmem [thread:$0]  %s603, 128, %s606, %s595
        $region76: #{temporal_transformer_forward.3} parent=71 // pred_fallthru
          _
        // Predicated region
        $region77: #{temporal_transformer_forward.3} parent=71 // pred_check
          %p609 = pneg %p84
        $region78: #{temporal_transformer_forward.3} parent=71 // pred_check_branch
          %611 = sbr.rel (%p609) target = $region80
        $region79: #{temporal_transformer_forward.3} parent=71 // pred_region
          %s612 = sand.u32 %s38, 1
          %s613 = scalar_lea.sflag [#allocation7], %s612
          %s614 = sand.u32 %s74, 1
          %s615 = scalar_lea.vmem [#allocation6], %s614
          %s617 = ssub.s32 16, 16
          %618 = vsyncadd %s613, %s617
          %s619 = smul.addr %s38, 16
          %s620 = scalar_lea.hbm %s1, %s619
          %s622 = sshll.u32 %s615, 4
          %s623 = int_to_ptr.vmem [resolvable:$true] %s622
          %625 = dma.hbm_to_vmem [thread:$0]  %s620, 16, %s623, %s613
        $region80: #{temporal_transformer_forward.3} parent=71 // pred_fallthru
          _
      $region72: #{temporal_transformer_forward.3} parent=5 // pred_fallthru
        _
      %p626 = scmp.le.s32.totalorder 1, %s38
      %p627 = scmp.lt.s32.totalorder %s38, 3
      %p628 = pnand %p626, %p627
      %p629 = pneg %p628
      // Predicated region
      $region81: #{temporal_transformer_forward.3} parent=5 // pred_check
        _
      $region82: #{temporal_transformer_forward.3} parent=5 // pred_check_branch
        %631 = sbr.rel (%p628) target = $region84
      $region83: #{temporal_transformer_forward.3} parent=5 // pred_region
        %s632 = ssub.s32 %s38, 1
        %s633 = sand.u32 %s51, 1
        %s634 = scalar_lea.sflag [#allocation4], %s633
        %s635 = sand.u32 %s51, 1
        %s636 = smul.addr %s635, 8
        %s637 = scalar_lea.vmem [#allocation3], %s636
        // Predicated region
        $region85: #{temporal_transformer_forward.3} parent=83 // pred_check
          %p638 = pneg %p64
        $region86: #{temporal_transformer_forward.3} parent=83 // pred_check_branch
          %640 = sbr.rel (%p638) target = $region88
        $region87: #{temporal_transformer_forward.3} parent=83 // pred_region
          %641 = dma.done %s634, 128
        $region88: #{temporal_transformer_forward.3} parent=83 // pred_fallthru
          _
        %s642 = sand.u32 %s43, 1
        %s643 = scalar_lea.sflag [#allocation7], %s642
        %s644 = sand.u32 %s77, 1
        %s645 = scalar_lea.vmem [#allocation6], %s644
        // Predicated region
        $region89: #{temporal_transformer_forward.3} parent=83 // pred_check
          %p646 = pneg %p90
        $region90: #{temporal_transformer_forward.3} parent=83 // pred_check_branch
          %648 = sbr.rel (%p646) target = $region92
        $region91: #{temporal_transformer_forward.3} parent=83 // pred_region
          %649 = dma.done %s643, 16
        $region92: #{temporal_transformer_forward.3} parent=83 // pred_fallthru
          _
        // Predicated region
        $region93: #{temporal_transformer_forward.3} parent=83 // pred_check
          %p650 = pneg %p111
        $region94: #{temporal_transformer_forward.3} parent=83 // pred_check_branch
          %652 = sbr.rel (%p650) target = $region96
        $region95: #{temporal_transformer_forward.3} parent=83 // pred_region
          %653 = dma.done [#allocation7], 16
        $region96: #{temporal_transformer_forward.3} parent=83 // pred_fallthru
          _
        // Predicated region
        $region97: #{temporal_transformer_forward.3} parent=83 // pred_check
          %p654 = pneg %p132
        $region98: #{temporal_transformer_forward.3} parent=83 // pred_check_branch
          %656 = sbr.rel (%p654) target = $region100
        $region99: #{temporal_transformer_forward.3} parent=83 // pred_region
          %657 = dma.done [#allocation10], 16
        $region100: #{temporal_transformer_forward.3} parent=83 // pred_fallthru
          _
        // Predicated region
        $region101: #{temporal_transformer_forward.3} parent=83 // pred_check
          %p658 = pneg %p153
        $region102: #{temporal_transformer_forward.3} parent=83 // pred_check_branch
          %660 = sbr.rel (%p658) target = $region104
        $region103: #{temporal_transformer_forward.3} parent=83 // pred_region
          %661 = dma.done [#allocation10], 256
        $region104: #{temporal_transformer_forward.3} parent=83 // pred_fallthru
          _
        // Predicated region
        $region105: #{temporal_transformer_forward.3} parent=83 // pred_check
          %p662 = pneg %p174
        $region106: #{temporal_transformer_forward.3} parent=83 // pred_check_branch
          %664 = sbr.rel (%p662) target = $region108
        $region107: #{temporal_transformer_forward.3} parent=83 // pred_region
          %665 = dma.done [#allocation13], 16
        $region108: #{temporal_transformer_forward.3} parent=83 // pred_fallthru
          _
        // Predicated region
        $region109: #{temporal_transformer_forward.3} parent=83 // pred_check
          %p666 = pneg %p195
        $region110: #{temporal_transformer_forward.3} parent=83 // pred_check_branch
          %668 = sbr.rel (%p666) target = $region112
        $region111: #{temporal_transformer_forward.3} parent=83 // pred_region
          %669 = dma.done [#allocation13], 256
        $region112: #{temporal_transformer_forward.3} parent=83 // pred_fallthru
          _
        // Predicated region
        $region113: #{temporal_transformer_forward.3} parent=83 // pred_check
          %p670 = pneg %p216
        $region114: #{temporal_transformer_forward.3} parent=83 // pred_check_branch
          %672 = sbr.rel (%p670) target = $region116
        $region115: #{temporal_transformer_forward.3} parent=83 // pred_region
          %673 = dma.done [#allocation16], 16
        $region116: #{temporal_transformer_forward.3} parent=83 // pred_fallthru
          _
        // Predicated region
        $region117: #{temporal_transformer_forward.3} parent=83 // pred_check
          %p674 = pneg %p237
        $region118: #{temporal_transformer_forward.3} parent=83 // pred_check_branch
          %676 = sbr.rel (%p674) target = $region120
        $region119: #{temporal_transformer_forward.3} parent=83 // pred_region
          %677 = dma.done [#allocation16], 16
        $region120: #{temporal_transformer_forward.3} parent=83 // pred_fallthru
          _
        // Predicated region
        $region121: #{temporal_transformer_forward.3} parent=83 // pred_check
          %p678 = pneg %p258
        $region122: #{temporal_transformer_forward.3} parent=83 // pred_check_branch
          %680 = sbr.rel (%p678) target = $region124
        $region123: #{temporal_transformer_forward.3} parent=83 // pred_region
          %681 = dma.done [#allocation19], 16
        $region124: #{temporal_transformer_forward.3} parent=83 // pred_fallthru
          _
        // Predicated region
        $region125: #{temporal_transformer_forward.3} parent=83 // pred_check
          %p682 = pneg %p279
        $region126: #{temporal_transformer_forward.3} parent=83 // pred_check_branch
          %684 = sbr.rel (%p682) target = $region128
        $region127: #{temporal_transformer_forward.3} parent=83 // pred_region
          %685 = dma.done [#allocation19], 256
        $region128: #{temporal_transformer_forward.3} parent=83 // pred_fallthru
          _
        // Predicated region
        $region129: #{temporal_transformer_forward.3} parent=83 // pred_check
          %p686 = pneg %p300
        $region130: #{temporal_transformer_forward.3} parent=83 // pred_check_branch
          %688 = sbr.rel (%p686) target = $region132
        $region131: #{temporal_transformer_forward.3} parent=83 // pred_region
          %689 = dma.done [#allocation22], 16
        $region132: #{temporal_transformer_forward.3} parent=83 // pred_fallthru
          _
        // Predicated region
        $region133: #{temporal_transformer_forward.3} parent=83 // pred_check
          %p690 = pneg %p321
        $region134: #{temporal_transformer_forward.3} parent=83 // pred_check_branch
          %692 = sbr.rel (%p690) target = $region136
        $region135: #{temporal_transformer_forward.3} parent=83 // pred_region
          %693 = dma.done [#allocation22], 512
        $region136: #{temporal_transformer_forward.3} parent=83 // pred_fallthru
          _
        // Predicated region
        $region137: #{temporal_transformer_forward.3} parent=83 // pred_check
          %p694 = pneg %p342
        $region138: #{temporal_transformer_forward.3} parent=83 // pred_check_branch
          %696 = sbr.rel (%p694) target = $region140
        $region139: #{temporal_transformer_forward.3} parent=83 // pred_region
          %697 = dma.done [#allocation25], 16
        $region140: #{temporal_transformer_forward.3} parent=83 // pred_fallthru
          _
        // Predicated region
        $region141: #{temporal_transformer_forward.3} parent=83 // pred_check
          %p698 = pneg %p363
        $region142: #{temporal_transformer_forward.3} parent=83 // pred_check_branch
          %700 = sbr.rel (%p698) target = $region144
        $region143: #{temporal_transformer_forward.3} parent=83 // pred_region
          %701 = dma.done [#allocation25], 16
        $region144: #{temporal_transformer_forward.3} parent=83 // pred_fallthru
          _
        // Predicated region
        $region145: #{temporal_transformer_forward.3} parent=83 // pred_check
          %p702 = pneg %p384
        $region146: #{temporal_transformer_forward.3} parent=83 // pred_check_branch
          %704 = sbr.rel (%p702) target = $region148
        $region147: #{temporal_transformer_forward.3} parent=83 // pred_region
          %705 = dma.done [#allocation28], 16
        $region148: #{temporal_transformer_forward.3} parent=83 // pred_fallthru
          _
        %s706 = sand.u32 %s51, 1
        %s707 = scalar_lea.sflag [#allocation4], %s706
        %s708 = sand.u32 %s51, 1
        %s709 = smul.addr %s708, 8
        %s710 = scalar_lea.vmem [#allocation3], %s709
        %p711 = pneg %p64
        %p712 = pneg %p61
        %s713 = sand.u32 %s43, 1
        %s714 = scalar_lea.sflag [#allocation7], %s713
        %s715 = sand.u32 %s77, 1
        %s716 = scalar_lea.vmem [#allocation6], %s715
        %p717 = pneg %p90
        %p718 = pneg %p87
        %p719 = pneg %p111
        %p720 = pneg %p108
        %p721 = pneg %p132
        %p722 = pneg %p129
        %p723 = pneg %p153
        %p724 = pneg %p150
        %p725 = pneg %p174
        %p726 = pneg %p171
        %p727 = pneg %p195
        %p728 = pneg %p192
        %p729 = pneg %p216
        %p730 = pneg %p213
        %p731 = pneg %p237
        %p732 = pneg %p234
        %p733 = pneg %p258
        %p734 = pneg %p255
        %p735 = pneg %p279
        %p736 = pneg %p276
        %p737 = pneg %p300
        %p738 = pneg %p297
        %p739 = pneg %p321
        %p740 = pneg %p318
        %p741 = pneg %p342
        %p742 = pneg %p339
        %p743 = pneg %p363
        %p744 = pneg %p360
        %p745 = pneg %p384
        %p746 = pneg %p381
        %p747 = pneg %p410
        %p748 = pneg %p407
        %s749 = sand.u32 %s397, 1
        %s750 = scalar_lea.sflag [#allocation5], %s749
        %s751 = sand.u32 %s397, 1
        %s752 = smul.addr %s751, 8
        %s753 = scalar_lea.vmem [#allocation29], %s752
        %v755 = vld [vmem:[%s637] sm:$0xff]
        %v756 = vld [vmem:[%s645] sm:$0x1]
        %v757 = vlaneseq
        %v758 = vshrl.u32 %v757, 7
        %v759 = vlaneseq
        %v760 = vand.u32 %v759, 127
        %vm761 = vcmp.gt.s32.totalorder %v760, %v758
        %v762 = vsel %vm761, -1e+09, 0.0
        %v764 = vlaneseq
        %v765 = vshrl.u32 %v764, 7
        %v766 = vsub.s32 0, %v765
        %v767 = vrot.slane %v756, %v766
        %v769 = vadd.f32 %v762, %v767
        %v770 = vld [vmem:[#allocation8] sm:$0x1]
        %v771 = vld [vmem:[#allocation9] sm:$0x1]
        %vm772 = vcmask 261120
        %v773 = vsel %vm772, %v755, 0.0
        %774 = vadd.xlane.f32.xlu0 %v773
        %v775 = vpop.xlane.xlu0 %774
        %v776 = vrcp.pop 32.0
        %v777 = vmul.f32 %v775, %v776
        %v778 = vsub.f32 %v755, %v777
        %v779 = vmul.f32 %v778, %v778
        %v780 = vsel %vm772, %v779, 0.0
        %781 = vadd.xlane.f32.xlu0 %v780
        %v782 = vpop.xlane.xlu0 %781
        %v783 = vmul.f32 %v782, %v776
        %v784 = vadd.f32 %v783, 1e-05
        %v785 = vrsqrt.pop %v784
        %v786 = vmul.f32 %v778, %v785
        %v788 = vlaneseq
        %v789 = vshrl.u32 %v788, 7
        %v790 = vsub.s32 0, %v789
        %v791 = vrot.slane %v770, %v790
        %v793 = vmul.f32 %v786, %v791
        %v795 = vlaneseq
        %v796 = vshrl.u32 %v795, 7
        %v797 = vsub.s32 0, %v796
        %v798 = vrot.slane %v771, %v797
        %v800 = vadd.f32 %v793, %v798
        %v801 = vpack.c.bf16 %v800, %v800
        %v802 = vld [vmem:[#allocation11] sm:$0xf]
        %v803 = vld [vmem:[#allocation11 + $0x4] sm:$0xf]
        %v804 = vld [vmem:[#allocation11 + $0x8] sm:$0xf]
        %v805 = vld [vmem:[#allocation11 + $0xc] sm:$0xf]
        %v806 = vld [vmem:[#allocation12] sm:$0x1]
        %v808 = vlaneseq
        %v809 = vshrl.u32 %v808, 7
        %v810 = vsub.s32 0, %v809
        %v811 = vrot.slane %v806, %v810
        %v817 = vunpack.c.l.b16 %v802
        %v818 = vunpack.c.l.b16 %v803
        %v819 = vunpack.c.l.b16 %v804
        %v820 = vunpack.c.l.b16 %v805
        %v821 = vpack.c.b16 %v818, %v817
        %v822 = vpack.c.b16 %v820, %v819
        %v826 = vsel %vm772, %v801, 0
        %828 = vmatprep.subr.bf16.mxu0 0
        %829 = vmatpush1.bf16.msra.mxu0 %v821
        %830 = vmatprep.subr.bf16.mxu0 0
        %831 = vmatpush1.bf16.msra.mxu0 %v822
        %832 = vmatprep.subr.bf16.mxu0 0
        %833 = vmatpush1.bf16.msra.mxu0 0
        %834 = vmatprep.subr.bf16.mxu0 0
        %835 = vmatpush1.bf16.msra.mxu0 0
        %836 = vmatprep.subr.bf16.mxu0 0
        %837 = vmatpush1.bf16.msra.mxu0 0
        %838 = vmatprep.subr.bf16.mxu0 0
        %839 = vmatpush1.bf16.msra.mxu0 0
        %840 = vmatprep.subr.bf16.mxu0 0
        %841 = vmatpush1.bf16.msra.mxu0 0
        %842 = vmatprep.subr.bf16.mxu0 0
        %843 = vmatpush1.bf16.msra.mxu0 0
        %844 = vmatprep.subr.bf16.mxu0 0
        %845 = vmatpush1.bf16.msra.mxu0 0
        %846 = vmatprep.subr.bf16.mxu0 0
        %847 = vmatpush1.bf16.msra.mxu0 0
        %848 = vmatprep.subr.bf16.mxu0 0
        %849 = vmatpush1.bf16.msra.mxu0 0
        %850 = vmatprep.subr.bf16.mxu0 0
        %851 = vmatpush1.bf16.msra.mxu0 0
        %852 = vmatprep.subr.bf16.mxu0 0
        %853 = vmatpush1.bf16.msra.mxu0 0
        %854 = vmatprep.subr.bf16.mxu0 0
        %855 = vmatpush1.bf16.msra.mxu0 0
        %856 = vmatprep.subr.bf16.mxu0 0
        %857 = vmatpush1.bf16.msra.mxu0 0
        %858 = vmatprep.subr.bf16.mxu0 0
        %859 = vmatpush1.bf16.msra.mxu0 0
        %860 = vmatprep.mubr.bf16.mxu0 0
        %861 = vmatmul.mubr.bf16.gmra.mrb[0].mxu0 %v826
        %v862 = vpop.f32.mrb[0].mxu0
        %v863 = vadd.f32 %v811, %v862
        %v864 = vpop.f32.mrb[0].mxu0
        %v865 = vpop.f32.mrb[0].mxu0
        %v866 = vpop.f32.mrb[0].mxu0
        %867 = vdwg.mxu0
        %v868 = vpack.c.bf16 %v863, %v863
        %870 = vrot.lane.b32.xlu0 %v868, 96
        %v871 = vpop.permute.xlu0 %870
        %vm872 = vcmask 64512
        %v874 = vsel %vm872, %v868, 0
        %v877 = vsel %vm872, %v871, 0
        %879 = vmatprep.subr.bf16.mxu0 0
        %880 = vmatpush1.bf16.xpose.msra.mxu0 %v877
        %881 = vmatprep.subr.bf16.mxu0 0
        %882 = vmatpush1.bf16.xpose.msra.mxu0 0
        %883 = vmatprep.subr.bf16.mxu0 0
        %884 = vmatpush1.bf16.xpose.msra.mxu0 0
        %885 = vmatprep.subr.bf16.mxu0 0
        %886 = vmatpush1.bf16.xpose.msra.mxu0 0
        %887 = vmatprep.subr.bf16.mxu0 0
        %888 = vmatpush1.bf16.xpose.msra.mxu0 0
        %889 = vmatprep.subr.bf16.mxu0 0
        %890 = vmatpush1.bf16.xpose.msra.mxu0 0
        %891 = vmatprep.subr.bf16.mxu0 0
        %892 = vmatpush1.bf16.xpose.msra.mxu0 0
        %893 = vmatprep.subr.bf16.mxu0 0
        %894 = vmatpush1.bf16.xpose.msra.mxu0 0
        %895 = vmatprep.subr.bf16.mxu0 0
        %896 = vmatpush1.bf16.xpose.msra.mxu0 0
        %897 = vmatprep.subr.bf16.mxu0 0
        %898 = vmatpush1.bf16.xpose.msra.mxu0 0
        %899 = vmatprep.subr.bf16.mxu0 0
        %900 = vmatpush1.bf16.xpose.msra.mxu0 0
        %901 = vmatprep.subr.bf16.mxu0 0
        %902 = vmatpush1.bf16.xpose.msra.mxu0 0
        %903 = vmatprep.subr.bf16.mxu0 0
        %904 = vmatpush1.bf16.xpose.msra.mxu0 0
        %905 = vmatprep.subr.bf16.mxu0 0
        %906 = vmatpush1.bf16.xpose.msra.mxu0 0
        %907 = vmatprep.subr.bf16.mxu0 0
        %908 = vmatpush1.bf16.xpose.msra.mxu0 0
        %909 = vmatprep.subr.bf16.mxu0 0
        %910 = vmatpush1.bf16.xpose.msra.mxu0 0
        %911 = vmatprep.mubr.bf16.mxu0 0
        %912 = vmatmul.mubr.bf16.gmra.mrb[0].mxu0 %v874
        %v913 = vpop.f32.mrb[0].mxu0
        %v914 = vadd.f32 %v769, %v913
        %v915 = vpop.f32.mrb[0].mxu0
        %v916 = vpop.f32.mrb[0].mxu0
        %v917 = vpop.f32.mrb[0].mxu0
        %918 = vdwg.mxu0
        %v919 = vsel %vm872, %v914, -inf
        %920 = vmax.xlane.f32.xlu0 %v919
        %v921 = vpop.xlane.xlu0 %920
        %v922 = vsub.f32 %v914, %v921
        %v923 = vmul.f32 %v922, 1.442695
        %v924 = vpow.pop %v923
        %v925 = vsel %vm872, %v924, 0.0
        %926 = vadd.xlane.f32.xlu0 %v925
        %v927 = vpop.xlane.xlu0 %926
        %v928 = vrcp.pop %v927
        %v929 = vmul.f32 %v924, %v928
        %v930 = vpack.c.bf16 %v929, %v929
        %931 = vrot.lane.b32.xlu0 %v868, 64
        %v932 = vpop.permute.xlu0 %931
        %v934 = vsel %vm872, %v930, 0
        %vm936 = vcmask 1043456
        %v938 = vsel %vm936, %v932, 0
        %940 = vmatprep.subr.bf16.mxu0 0
        %941 = vmatpush1.bf16.msra.mxu0 %v938
        %942 = vmatprep.subr.bf16.mxu0 0
        %943 = vmatpush1.bf16.msra.mxu0 0
        %944 = vmatprep.subr.bf16.mxu0 0
        %945 = vmatpush1.bf16.msra.mxu0 0
        %946 = vmatprep.subr.bf16.mxu0 0
        %947 = vmatpush1.bf16.msra.mxu0 0
        %948 = vmatprep.subr.bf16.mxu0 0
        %949 = vmatpush1.bf16.msra.mxu0 0
        %950 = vmatprep.subr.bf16.mxu0 0
        %951 = vmatpush1.bf16.msra.mxu0 0
        %952 = vmatprep.subr.bf16.mxu0 0
        %953 = vmatpush1.bf16.msra.mxu0 0
        %954 = vmatprep.subr.bf16.mxu0 0
        %955 = vmatpush1.bf16.msra.mxu0 0
        %956 = vmatprep.subr.bf16.mxu0 0
        %957 = vmatpush1.bf16.msra.mxu0 0
        %958 = vmatprep.subr.bf16.mxu0 0
        %959 = vmatpush1.bf16.msra.mxu0 0
        %960 = vmatprep.subr.bf16.mxu0 0
        %961 = vmatpush1.bf16.msra.mxu0 0
        %962 = vmatprep.subr.bf16.mxu0 0
        %963 = vmatpush1.bf16.msra.mxu0 0
        %964 = vmatprep.subr.bf16.mxu0 0
        %965 = vmatpush1.bf16.msra.mxu0 0
        %966 = vmatprep.subr.bf16.mxu0 0
        %967 = vmatpush1.bf16.msra.mxu0 0
        %968 = vmatprep.subr.bf16.mxu0 0
        %969 = vmatpush1.bf16.msra.mxu0 0
        %970 = vmatprep.subr.bf16.mxu0 0
        %971 = vmatpush1.bf16.msra.mxu0 0
        %972 = vmatprep.mubr.bf16.mxu0 0
        %973 = vmatmul.mubr.bf16.gmra.mrb[0].mxu0 %v934
        %v974 = vpop.f32.mrb[0].mxu0
        %v975 = vadd.f32 0.0, %v974
        %v976 = vpop.f32.mrb[0].mxu0
        %v977 = vpop.f32.mrb[0].mxu0
        %v978 = vpop.f32.mrb[0].mxu0
        %979 = vdwg.mxu0
        %980 = vst.msk [vmem:[#allocation2] sm:$0xff] %vm872, %v975
        %981 = vrot.lane.b32.xlu0 %v868, 120
        %v982 = vpop.permute.xlu0 %981
        %983 = vrot.lane.b32.xlu0 %v868, 88
        %v984 = vpop.permute.xlu0 %983
        %v986 = vsel %vm872, %v982, 0
        %v989 = vsel %vm872, %v984, 0
        %991 = vmatprep.subr.bf16.mxu0 0
        %992 = vmatpush1.bf16.xpose.msra.mxu0 %v989
        %993 = vmatprep.subr.bf16.mxu0 0
        %994 = vmatpush1.bf16.xpose.msra.mxu0 0
        %995 = vmatprep.subr.bf16.mxu0 0
        %996 = vmatpush1.bf16.xpose.msra.mxu0 0
        %997 = vmatprep.subr.bf16.mxu0 0
        %998 = vmatpush1.bf16.xpose.msra.mxu0 0
        %999 = vmatprep.subr.bf16.mxu0 0
        %1000 = vmatpush1.bf16.xpose.msra.mxu0 0
        %1001 = vmatprep.subr.bf16.mxu0 0
        %1002 = vmatpush1.bf16.xpose.msra.mxu0 0
        %1003 = vmatprep.subr.bf16.mxu0 0
        %1004 = vmatpush1.bf16.xpose.msra.mxu0 0
        %1005 = vmatprep.subr.bf16.mxu0 0
        %1006 = vmatpush1.bf16.xpose.msra.mxu0 0
        %1007 = vmatprep.subr.bf16.mxu0 0
        %1008 = vmatpush1.bf16.xpose.msra.mxu0 0
        %1009 = vmatprep.subr.bf16.mxu0 0
        %1010 = vmatpush1.bf16.xpose.msra.mxu0 0
        %1011 = vmatprep.subr.bf16.mxu0 0
        %1012 = vmatpush1.bf16.xpose.msra.mxu0 0
        %1013 = vmatprep.subr.bf16.mxu0 0
        %1014 = vmatpush1.bf16.xpose.msra.mxu0 0
        %1015 = vmatprep.subr.bf16.mxu0 0
        %1016 = vmatpush1.bf16.xpose.msra.mxu0 0
        %1017 = vmatprep.subr.bf16.mxu0 0
        %1018 = vmatpush1.bf16.xpose.msra.mxu0 0
        %1019 = vmatprep.subr.bf16.mxu0 0
        %1020 = vmatpush1.bf16.xpose.msra.mxu0 0
        %1021 = vmatprep.subr.bf16.mxu0 0
        %1022 = vmatpush1.bf16.xpose.msra.mxu0 0
        %1023 = vmatprep.mubr.bf16.mxu0 0
        %1024 = vmatmul.mubr.bf16.gmra.mrb[0].mxu0 %v986
        %v1025 = vpop.f32.mrb[0].mxu0
        %v1026 = vadd.f32 %v769, %v1025
        %v1027 = vpop.f32.mrb[0].mxu0
        %v1028 = vpop.f32.mrb[0].mxu0
        %v1029 = vpop.f32.mrb[0].mxu0
        %1030 = vdwg.mxu0
        %v1031 = vsel %vm872, %v1026, -inf
        %1032 = vmax.xlane.f32.xlu0 %v1031
        %v1033 = vpop.xlane.xlu0 %1032
        %v1034 = vsub.f32 %v1026, %v1033
        %v1035 = vmul.f32 %v1034, 1.442695
        %v1036 = vpow.pop %v1035
        %v1037 = vsel %vm872, %v1036, 0.0
        %1038 = vadd.xlane.f32.xlu0 %v1037
        %v1039 = vpop.xlane.xlu0 %1038
        %v1040 = vrcp.pop %v1039
        %v1041 = vmul.f32 %v1036, %v1040
        %v1042 = vpack.c.bf16 %v1041, %v1041
        %1043 = vrot.lane.b32.xlu0 %v868, 56
        %v1044 = vpop.permute.xlu0 %1043
        %v1046 = vsel %vm872, %v1042, 0
        %v1049 = vsel %vm936, %v1044, 0
        %1051 = vmatprep.subr.bf16.mxu0 0
        %1052 = vmatpush1.bf16.msra.mxu0 %v1049
        %1053 = vmatprep.subr.bf16.mxu0 0
        %1054 = vmatpush1.bf16.msra.mxu0 0
        %1055 = vmatprep.subr.bf16.mxu0 0
        %1056 = vmatpush1.bf16.msra.mxu0 0
        %1057 = vmatprep.subr.bf16.mxu0 0
        %1058 = vmatpush1.bf16.msra.mxu0 0
        %1059 = vmatprep.subr.bf16.mxu0 0
        %1060 = vmatpush1.bf16.msra.mxu0 0
        %1061 = vmatprep.subr.bf16.mxu0 0
        %1062 = vmatpush1.bf16.msra.mxu0 0
        %1063 = vmatprep.subr.bf16.mxu0 0
        %1064 = vmatpush1.bf16.msra.mxu0 0
        %1065 = vmatprep.subr.bf16.mxu0 0
        %1066 = vmatpush1.bf16.msra.mxu0 0
        %1067 = vmatprep.subr.bf16.mxu0 0
        %1068 = vmatpush1.bf16.msra.mxu0 0
        %1069 = vmatprep.subr.bf16.mxu0 0
        %1070 = vmatpush1.bf16.msra.mxu0 0
        %1071 = vmatprep.subr.bf16.mxu0 0
        %1072 = vmatpush1.bf16.msra.mxu0 0
        %1073 = vmatprep.subr.bf16.mxu0 0
        %1074 = vmatpush1.bf16.msra.mxu0 0
        %1075 = vmatprep.subr.bf16.mxu0 0
        %1076 = vmatpush1.bf16.msra.mxu0 0
        %1077 = vmatprep.subr.bf16.mxu0 0
        %1078 = vmatpush1.bf16.msra.mxu0 0
        %1079 = vmatprep.subr.bf16.mxu0 0
        %1080 = vmatpush1.bf16.msra.mxu0 0
        %1081 = vmatprep.subr.bf16.mxu0 0
        %1082 = vmatpush1.bf16.msra.mxu0 0
        %1083 = vmatprep.mubr.bf16.mxu0 0
        %1084 = vmatmul.mubr.bf16.gmra.mrb[0].mxu0 %v1046
        %v1085 = vpop.f32.mrb[0].mxu0
        %v1086 = vadd.f32 0.0, %v1085
        %v1087 = vpop.f32.mrb[0].mxu0
        %v1088 = vpop.f32.mrb[0].mxu0
        %v1089 = vpop.f32.mrb[0].mxu0
        %1090 = vdwg.mxu0
        %1092 = vrot.lane.b32.xlu0 %v1086, 8
        %v1093 = vpop.permute.xlu0 %1092
        %vm1095 = vcmask 130112
        %1096 = vst.msk [vmem:[#allocation2] sm:$0xff] %vm1095, %v1093
        %1097 = vrot.lane.b32.xlu0 %v868, 112
        %v1098 = vpop.permute.xlu0 %1097
        %1099 = vrot.lane.b32.xlu0 %v868, 80
        %v1100 = vpop.permute.xlu0 %1099
        %v1102 = vsel %vm872, %v1098, 0
        %v1105 = vsel %vm872, %v1100, 0
        %1107 = vmatprep.subr.bf16.mxu0 0
        %1108 = vmatpush1.bf16.xpose.msra.mxu0 %v1105
        %1109 = vmatprep.subr.bf16.mxu0 0
        %1110 = vmatpush1.bf16.xpose.msra.mxu0 0
        %1111 = vmatprep.subr.bf16.mxu0 0
        %1112 = vmatpush1.bf16.xpose.msra.mxu0 0
        %1113 = vmatprep.subr.bf16.mxu0 0
        %1114 = vmatpush1.bf16.xpose.msra.mxu0 0
        %1115 = vmatprep.subr.bf16.mxu0 0
        %1116 = vmatpush1.bf16.xpose.msra.mxu0 0
        %1117 = vmatprep.subr.bf16.mxu0 0
        %1118 = vmatpush1.bf16.xpose.msra.mxu0 0
        %1119 = vmatprep.subr.bf16.mxu0 0
        %1120 = vmatpush1.bf16.xpose.msra.mxu0 0
        %1121 = vmatprep.subr.bf16.mxu0 0
        %1122 = vmatpush1.bf16.xpose.msra.mxu0 0
        %1123 = vmatprep.subr.bf16.mxu0 0
        %1124 = vmatpush1.bf16.xpose.msra.mxu0 0
        %1125 = vmatprep.subr.bf16.mxu0 0
        %1126 = vmatpush1.bf16.xpose.msra.mxu0 0
        %1127 = vmatprep.subr.bf16.mxu0 0
        %1128 = vmatpush1.bf16.xpose.msra.mxu0 0
        %1129 = vmatprep.subr.bf16.mxu0 0
        %1130 = vmatpush1.bf16.xpose.msra.mxu0 0
        %1131 = vmatprep.subr.bf16.mxu0 0
        %1132 = vmatpush1.bf16.xpose.msra.mxu0 0
        %1133 = vmatprep.subr.bf16.mxu0 0
        %1134 = vmatpush1.bf16.xpose.msra.mxu0 0
        %1135 = vmatprep.subr.bf16.mxu0 0
        %1136 = vmatpush1.bf16.xpose.msra.mxu0 0
        %1137 = vmatprep.subr.bf16.mxu0 0
        %1138 = vmatpush1.bf16.xpose.msra.mxu0 0
        %1139 = vmatprep.mubr.bf16.mxu0 0
        %1140 = vmatmul.mubr.bf16.gmra.mrb[0].mxu0 %v1102
        %v1141 = vpop.f32.mrb[0].mxu0
        %v1142 = vadd.f32 %v769, %v1141
        %v1143 = vpop.f32.mrb[0].mxu0
        %v1144 = vpop.f32.mrb[0].mxu0
        %v1145 = vpop.f32.mrb[0].mxu0
        %1146 = vdwg.mxu0
        %v1147 = vsel %vm872, %v1142, -inf
        %1148 = vmax.xlane.f32.xlu0 %v1147
        %v1149 = vpop.xlane.xlu0 %1148
        %v1150 = vsub.f32 %v1142, %v1149
        %v1151 = vmul.f32 %v1150, 1.442695
        %v1152 = vpow.pop %v1151
        %v1153 = vsel %vm872, %v1152, 0.0
        %1154 = vadd.xlane.f32.xlu0 %v1153
        %v1155 = vpop.xlane.xlu0 %1154
        %v1156 = vrcp.pop %v1155
        %v1157 = vmul.f32 %v1152, %v1156
        %v1158 = vpack.c.bf16 %v1157, %v1157
        %1159 = vrot.lane.b32.xlu0 %v868, 48
        %v1160 = vpop.permute.xlu0 %1159
        %v1162 = vsel %vm872, %v1158, 0
        %v1165 = vsel %vm936, %v1160, 0
        %1167 = vmatprep.subr.bf16.mxu0 0
        %1168 = vmatpush1.bf16.msra.mxu0 %v1165
        %1169 = vmatprep.subr.bf16.mxu0 0
        %1170 = vmatpush1.bf16.msra.mxu0 0
        %1171 = vmatprep.subr.bf16.mxu0 0
        %1172 = vmatpush1.bf16.msra.mxu0 0
        %1173 = vmatprep.subr.bf16.mxu0 0
        %1174 = vmatpush1.bf16.msra.mxu0 0
        %1175 = vmatprep.subr.bf16.mxu0 0
        %1176 = vmatpush1.bf16.msra.mxu0 0
        %1177 = vmatprep.subr.bf16.mxu0 0
        %1178 = vmatpush1.bf16.msra.mxu0 0
        %1179 = vmatprep.subr.bf16.mxu0 0
        %1180 = vmatpush1.bf16.msra.mxu0 0
        %1181 = vmatprep.subr.bf16.mxu0 0
        %1182 = vmatpush1.bf16.msra.mxu0 0
        %1183 = vmatprep.subr.bf16.mxu0 0
        %1184 = vmatpush1.bf16.msra.mxu0 0
        %1185 = vmatprep.subr.bf16.mxu0 0
        %1186 = vmatpush1.bf16.msra.mxu0 0
        %1187 = vmatprep.subr.bf16.mxu0 0
        %1188 = vmatpush1.bf16.msra.mxu0 0
        %1189 = vmatprep.subr.bf16.mxu0 0
        %1190 = vmatpush1.bf16.msra.mxu0 0
        %1191 = vmatprep.subr.bf16.mxu0 0
        %1192 = vmatpush1.bf16.msra.mxu0 0
        %1193 = vmatprep.subr.bf16.mxu0 0
        %1194 = vmatpush1.bf16.msra.mxu0 0
        %1195 = vmatprep.subr.bf16.mxu0 0
        %1196 = vmatpush1.bf16.msra.mxu0 0
        %1197 = vmatprep.subr.bf16.mxu0 0
        %1198 = vmatpush1.bf16.msra.mxu0 0
        %1199 = vmatprep.mubr.bf16.mxu0 0
        %1200 = vmatmul.mubr.bf16.gmra.mrb[0].mxu0 %v1162
        %v1201 = vpop.f32.mrb[0].mxu0
        %v1202 = vadd.f32 0.0, %v1201
        %v1203 = vpop.f32.mrb[0].mxu0
        %v1204 = vpop.f32.mrb[0].mxu0
        %v1205 = vpop.f32.mrb[0].mxu0
        %1206 = vdwg.mxu0
        %1208 = vrot.lane.b32.xlu0 %v1202, 16
        %v1209 = vpop.permute.xlu0 %1208
        %vm1211 = vcmask 195712
        %1212 = vst.msk [vmem:[#allocation2] sm:$0xff] %vm1211, %v1209
        %1213 = vrot.lane.b32.xlu0 %v868, 104
        %v1214 = vpop.permute.xlu0 %1213
        %1215 = vrot.lane.b32.xlu0 %v868, 72
        %v1216 = vpop.permute.xlu0 %1215
        %v1218 = vsel %vm872, %v1214, 0
        %v1221 = vsel %vm872, %v1216, 0
        %1223 = vmatprep.subr.bf16.mxu0 0
        %1224 = vmatpush1.bf16.xpose.msra.mxu0 %v1221
        %1225 = vmatprep.subr.bf16.mxu0 0
        %1226 = vmatpush1.bf16.xpose.msra.mxu0 0
        %1227 = vmatprep.subr.bf16.mxu0 0
        %1228 = vmatpush1.bf16.xpose.msra.mxu0 0
        %1229 = vmatprep.subr.bf16.mxu0 0
        %1230 = vmatpush1.bf16.xpose.msra.mxu0 0
        %1231 = vmatprep.subr.bf16.mxu0 0
        %1232 = vmatpush1.bf16.xpose.msra.mxu0 0
        %1233 = vmatprep.subr.bf16.mxu0 0
        %1234 = vmatpush1.bf16.xpose.msra.mxu0 0
        %1235 = vmatprep.subr.bf16.mxu0 0
        %1236 = vmatpush1.bf16.xpose.msra.mxu0 0
        %1237 = vmatprep.subr.bf16.mxu0 0
        %1238 = vmatpush1.bf16.xpose.msra.mxu0 0
        %1239 = vmatprep.subr.bf16.mxu0 0
        %1240 = vmatpush1.bf16.xpose.msra.mxu0 0
        %1241 = vmatprep.subr.bf16.mxu0 0
        %1242 = vmatpush1.bf16.xpose.msra.mxu0 0
        %1243 = vmatprep.subr.bf16.mxu0 0
        %1244 = vmatpush1.bf16.xpose.msra.mxu0 0
        %1245 = vmatprep.subr.bf16.mxu0 0
        %1246 = vmatpush1.bf16.xpose.msra.mxu0 0
        %1247 = vmatprep.subr.bf16.mxu0 0
        %1248 = vmatpush1.bf16.xpose.msra.mxu0 0
        %1249 = vmatprep.subr.bf16.mxu0 0
        %1250 = vmatpush1.bf16.xpose.msra.mxu0 0
        %1251 = vmatprep.subr.bf16.mxu0 0
        %1252 = vmatpush1.bf16.xpose.msra.mxu0 0
        %1253 = vmatprep.subr.bf16.mxu0 0
        %1254 = vmatpush1.bf16.xpose.msra.mxu0 0
        %1255 = vmatprep.mubr.bf16.mxu0 0
        %1256 = vmatmul.mubr.bf16.gmra.mrb[0].mxu0 %v1218
        %v1257 = vpop.f32.mrb[0].mxu0
        %v1258 = vadd.f32 %v769, %v1257
        %v1259 = vpop.f32.mrb[0].mxu0
        %v1260 = vpop.f32.mrb[0].mxu0
        %v1261 = vpop.f32.mrb[0].mxu0
        %1262 = vdwg.mxu0
        %v1263 = vsel %vm872, %v1258, -inf
        %1264 = vmax.xlane.f32.xlu0 %v1263
        %v1265 = vpop.xlane.xlu0 %1264
        %v1266 = vsub.f32 %v1258, %v1265
        %v1267 = vmul.f32 %v1266, 1.442695
        %v1268 = vpow.pop %v1267
        %v1269 = vsel %vm872, %v1268, 0.0
        %1270 = vadd.xlane.f32.xlu0 %v1269
        %v1271 = vpop.xlane.xlu0 %1270
        %v1272 = vrcp.pop %v1271
        %v1273 = vmul.f32 %v1268, %v1272
        %v1274 = vpack.c.bf16 %v1273, %v1273
        %1275 = vrot.lane.b32.xlu0 %v868, 40
        %v1276 = vpop.permute.xlu0 %1275
        %v1278 = vsel %vm872, %v1274, 0
        %v1281 = vsel %vm936, %v1276, 0
        %1283 = vmatprep.subr.bf16.mxu0 0
        %1284 = vmatpush1.bf16.msra.mxu0 %v1281
        %1285 = vmatprep.subr.bf16.mxu0 0
        %1286 = vmatpush1.bf16.msra.mxu0 0
        %1287 = vmatprep.subr.bf16.mxu0 0
        %1288 = vmatpush1.bf16.msra.mxu0 0
        %1289 = vmatprep.subr.bf16.mxu0 0
        %1290 = vmatpush1.bf16.msra.mxu0 0
        %1291 = vmatprep.subr.bf16.mxu0 0
        %1292 = vmatpush1.bf16.msra.mxu0 0
        %1293 = vmatprep.subr.bf16.mxu0 0
        %1294 = vmatpush1.bf16.msra.mxu0 0
        %1295 = vmatprep.subr.bf16.mxu0 0
        %1296 = vmatpush1.bf16.msra.mxu0 0
        %1297 = vmatprep.subr.bf16.mxu0 0
        %1298 = vmatpush1.bf16.msra.mxu0 0
        %1299 = vmatprep.subr.bf16.mxu0 0
        %1300 = vmatpush1.bf16.msra.mxu0 0
        %1301 = vmatprep.subr.bf16.mxu0 0
        %1302 = vmatpush1.bf16.msra.mxu0 0
        %1303 = vmatprep.subr.bf16.mxu0 0
        %1304 = vmatpush1.bf16.msra.mxu0 0
        %1305 = vmatprep.subr.bf16.mxu0 0
        %1306 = vmatpush1.bf16.msra.mxu0 0
        %1307 = vmatprep.subr.bf16.mxu0 0
        %1308 = vmatpush1.bf16.msra.mxu0 0
        %1309 = vmatprep.subr.bf16.mxu0 0
        %1310 = vmatpush1.bf16.msra.mxu0 0
        %1311 = vmatprep.subr.bf16.mxu0 0
        %1312 = vmatpush1.bf16.msra.mxu0 0
        %1313 = vmatprep.subr.bf16.mxu0 0
        %1314 = vmatpush1.bf16.msra.mxu0 0
        %1315 = vmatprep.mubr.bf16.mxu0 0
        %1316 = vmatmul.mubr.bf16.gmra.mrb[0].mxu0 %v1278
        %v1317 = vpop.f32.mrb[0].mxu0
        %v1318 = vadd.f32 0.0, %v1317
        %v1319 = vpop.f32.mrb[0].mxu0
        %v1320 = vpop.f32.mrb[0].mxu0
        %v1321 = vpop.f32.mrb[0].mxu0
        %1322 = vdwg.mxu0
        %1324 = vrot.lane.b32.xlu0 %v1318, 24
        %v1325 = vpop.permute.xlu0 %1324
        %vm1327 = vcmask 261312
        %1328 = vst.msk [vmem:[#allocation2] sm:$0xff] %vm1327, %v1325
        %v1329 = vld [vmem:[#allocation2] sm:$0xff]
        %v1330 = vpack.c.bf16 %v1329, %v1329
        %v1331 = vld [vmem:[#allocation14] sm:$0xf]
        %v1332 = vld [vmem:[#allocation14 + $0x4] sm:$0xf]
        %v1333 = vld [vmem:[#allocation14 + $0x8] sm:$0xf]
        %v1334 = vld [vmem:[#allocation14 + $0xc] sm:$0xf]
        %v1335 = vld [vmem:[#allocation15] sm:$0x1]
        %v1337 = vlaneseq
        %v1338 = vshrl.u32 %v1337, 7
        %v1339 = vsub.s32 0, %v1338
        %v1340 = vrot.slane %v1335, %v1339
        %v1346 = vunpack.c.l.b16 %v1331
        %v1347 = vunpack.c.l.b16 %v1332
        %v1348 = vunpack.c.l.b16 %v1333
        %v1349 = vunpack.c.l.b16 %v1334
        %v1350 = vpack.c.b16 %v1347, %v1346
        %v1351 = vpack.c.b16 %v1349, %v1348
        %v1355 = vsel %vm772, %v1330, 0
        %1357 = vmatprep.subr.bf16.mxu0 0
        %1358 = vmatpush1.bf16.msra.mxu0 %v1350
        %1359 = vmatprep.subr.bf16.mxu0 0
        %1360 = vmatpush1.bf16.msra.mxu0 %v1351
        %1361 = vmatprep.subr.bf16.mxu0 0
        %1362 = vmatpush1.bf16.msra.mxu0 0
        %1363 = vmatprep.subr.bf16.mxu0 0
        %1364 = vmatpush1.bf16.msra.mxu0 0
        %1365 = vmatprep.subr.bf16.mxu0 0
        %1366 = vmatpush1.bf16.msra.mxu0 0
        %1367 = vmatprep.subr.bf16.mxu0 0
        %1368 = vmatpush1.bf16.msra.mxu0 0
        %1369 = vmatprep.subr.bf16.mxu0 0
        %1370 = vmatpush1.bf16.msra.mxu0 0
        %1371 = vmatprep.subr.bf16.mxu0 0
        %1372 = vmatpush1.bf16.msra.mxu0 0
        %1373 = vmatprep.subr.bf16.mxu0 0
        %1374 = vmatpush1.bf16.msra.mxu0 0
        %1375 = vmatprep.subr.bf16.mxu0 0
        %1376 = vmatpush1.bf16.msra.mxu0 0
        %1377 = vmatprep.subr.bf16.mxu0 0
        %1378 = vmatpush1.bf16.msra.mxu0 0
        %1379 = vmatprep.subr.bf16.mxu0 0
        %1380 = vmatpush1.bf16.msra.mxu0 0
        %1381 = vmatprep.subr.bf16.mxu0 0
        %1382 = vmatpush1.bf16.msra.mxu0 0
        %1383 = vmatprep.subr.bf16.mxu0 0
        %1384 = vmatpush1.bf16.msra.mxu0 0
        %1385 = vmatprep.subr.bf16.mxu0 0
        %1386 = vmatpush1.bf16.msra.mxu0 0
        %1387 = vmatprep.subr.bf16.mxu0 0
        %1388 = vmatpush1.bf16.msra.mxu0 0
        %1389 = vmatprep.mubr.bf16.mxu0 0
        %1390 = vmatmul.mubr.bf16.gmra.mrb[0].mxu0 %v1355
        %v1391 = vpop.f32.mrb[0].mxu0
        %v1392 = vadd.f32 %v1340, %v1391
        %v1393 = vpop.f32.mrb[0].mxu0
        %v1394 = vpop.f32.mrb[0].mxu0
        %v1395 = vpop.f32.mrb[0].mxu0
        %1396 = vdwg.mxu0
        %v1397 = vadd.f32 %v755, %v1392
        %v1398 = vld [vmem:[#allocation17] sm:$0x1]
        %v1399 = vld [vmem:[#allocation18] sm:$0x1]
        %v1400 = vsel %vm772, %v1397, 0.0
        %1401 = vadd.xlane.f32.xlu0 %v1400
        %v1402 = vpop.xlane.xlu0 %1401
        %v1403 = vmul.f32 %v1402, %v776
        %v1404 = vsub.f32 %v1397, %v1403
        %v1405 = vmul.f32 %v1404, %v1404
        %v1406 = vsel %vm772, %v1405, 0.0
        %1407 = vadd.xlane.f32.xlu0 %v1406
        %v1408 = vpop.xlane.xlu0 %1407
        %v1409 = vmul.f32 %v1408, %v776
        %v1410 = vadd.f32 %v1409, 1e-05
        %v1411 = vrsqrt.pop %v1410
        %v1412 = vmul.f32 %v1404, %v1411
        %v1414 = vlaneseq
        %v1415 = vshrl.u32 %v1414, 7
        %v1416 = vsub.s32 0, %v1415
        %v1417 = vrot.slane %v1398, %v1416
        %v1419 = vmul.f32 %v1412, %v1417
        %v1421 = vlaneseq
        %v1422 = vshrl.u32 %v1421, 7
        %v1423 = vsub.s32 0, %v1422
        %v1424 = vrot.slane %v1399, %v1423
        %v1426 = vadd.f32 %v1419, %v1424
        %v1427 = vpack.c.bf16 %v1426, %v1426
        %v1428 = vld [vmem:[#allocation20] sm:$0xf]
        %v1429 = vld [vmem:[#allocation20 + $0x4] sm:$0xf]
        %v1430 = vld [vmem:[#allocation20 + $0x8] sm:$0xf]
        %v1431 = vld [vmem:[#allocation20 + $0xc] sm:$0xf]
        %v1432 = vld [vmem:[#allocation21] sm:$0x1]
        %v1434 = vlaneseq
        %v1435 = vshrl.u32 %v1434, 7
        %v1436 = vsub.s32 0, %v1435
        %v1437 = vrot.slane %v1432, %v1436
        %v1443 = vunpack.c.l.b16 %v1428
        %v1444 = vunpack.c.l.b16 %v1429
        %v1445 = vunpack.c.l.b16 %v1430
        %v1446 = vunpack.c.l.b16 %v1431
        %v1447 = vpack.c.b16 %v1444, %v1443
        %v1448 = vpack.c.b16 %v1446, %v1445
        %v1452 = vsel %vm772, %v1427, 0
        %1454 = vmatprep.subr.bf16.mxu0 0
        %1455 = vmatpush1.bf16.msra.mxu0 %v1447
        %1456 = vmatprep.subr.bf16.mxu0 0
        %1457 = vmatpush1.bf16.msra.mxu0 %v1448
        %1458 = vmatprep.subr.bf16.mxu0 0
        %1459 = vmatpush1.bf16.msra.mxu0 0
        %1460 = vmatprep.subr.bf16.mxu0 0
        %1461 = vmatpush1.bf16.msra.mxu0 0
        %1462 = vmatprep.subr.bf16.mxu0 0
        %1463 = vmatpush1.bf16.msra.mxu0 0
        %1464 = vmatprep.subr.bf16.mxu0 0
        %1465 = vmatpush1.bf16.msra.mxu0 0
        %1466 = vmatprep.subr.bf16.mxu0 0
        %1467 = vmatpush1.bf16.msra.mxu0 0
        %1468 = vmatprep.subr.bf16.mxu0 0
        %1469 = vmatpush1.bf16.msra.mxu0 0
        %1470 = vmatprep.subr.bf16.mxu0 0
        %1471 = vmatpush1.bf16.msra.mxu0 0
        %1472 = vmatprep.subr.bf16.mxu0 0
        %1473 = vmatpush1.bf16.msra.mxu0 0
        %1474 = vmatprep.subr.bf16.mxu0 0
        %1475 = vmatpush1.bf16.msra.mxu0 0
        %1476 = vmatprep.subr.bf16.mxu0 0
        %1477 = vmatpush1.bf16.msra.mxu0 0
        %1478 = vmatprep.subr.bf16.mxu0 0
        %1479 = vmatpush1.bf16.msra.mxu0 0
        %1480 = vmatprep.subr.bf16.mxu0 0
        %1481 = vmatpush1.bf16.msra.mxu0 0
        %1482 = vmatprep.subr.bf16.mxu0 0
        %1483 = vmatpush1.bf16.msra.mxu0 0
        %1484 = vmatprep.subr.bf16.mxu0 0
        %1485 = vmatpush1.bf16.msra.mxu0 0
        %1486 = vmatprep.mubr.bf16.mxu0 0
        %1487 = vmatmul.mubr.bf16.gmra.mrb[0].mxu0 %v1452
        %v1488 = vpop.f32.mrb[0].mxu0
        %v1489 = vadd.f32 %v1437, %v1488
        %v1490 = vpop.f32.mrb[0].mxu0
        %v1491 = vpop.f32.mrb[0].mxu0
        %v1492 = vpop.f32.mrb[0].mxu0
        %1493 = vdwg.mxu0
        %v1494 = vmax.f32 %v1489, 0.0
        %v1495 = vpack.c.bf16 %v1494, %v1494
        %v1496 = vld [vmem:[#allocation23] sm:$0xf]
        %v1497 = vld [vmem:[#allocation23 + $0x4] sm:$0xf]
        %v1498 = vld [vmem:[#allocation23 + $0x8] sm:$0xf]
        %v1499 = vld [vmem:[#allocation23 + $0xc] sm:$0xf]
        %v1500 = vld [vmem:[#allocation23 + $0x10] sm:$0xf]
        %v1501 = vld [vmem:[#allocation23 + $0x14] sm:$0xf]
        %v1502 = vld [vmem:[#allocation23 + $0x18] sm:$0xf]
        %v1503 = vld [vmem:[#allocation23 + $0x1c] sm:$0xf]
        %v1504 = vld [vmem:[#allocation24] sm:$0x1]
        %v1506 = vlaneseq
        %v1507 = vshrl.u32 %v1506, 7
        %v1508 = vsub.s32 0, %v1507
        %v1509 = vrot.slane %v1504, %v1508
        %v1519 = vunpack.c.l.b16 %v1496
        %v1520 = vunpack.c.l.b16 %v1497
        %v1521 = vunpack.c.l.b16 %v1498
        %v1522 = vunpack.c.l.b16 %v1499
        %v1523 = vunpack.c.l.b16 %v1500
        %v1524 = vunpack.c.l.b16 %v1501
        %v1525 = vunpack.c.l.b16 %v1502
        %v1526 = vunpack.c.l.b16 %v1503
        %v1527 = vpack.c.b16 %v1520, %v1519
        %v1528 = vpack.c.b16 %v1522, %v1521
        %v1529 = vpack.c.b16 %v1524, %v1523
        %v1530 = vpack.c.b16 %v1526, %v1525
        %vm1535 = vcmask 523264
        %v1537 = vsel %vm1535, %v1495, 0
        %1539 = vmatprep.subr.bf16.mxu0 0
        %1540 = vmatpush1.bf16.msra.mxu0 %v1527
        %1541 = vmatprep.subr.bf16.mxu0 0
        %1542 = vmatpush1.bf16.msra.mxu0 %v1528
        %1543 = vmatprep.subr.bf16.mxu0 0
        %1544 = vmatpush1.bf16.msra.mxu0 %v1529
        %1545 = vmatprep.subr.bf16.mxu0 0
        %1546 = vmatpush1.bf16.msra.mxu0 %v1530
        %1547 = vmatprep.subr.bf16.mxu0 0
        %1548 = vmatpush1.bf16.msra.mxu0 0
        %1549 = vmatprep.subr.bf16.mxu0 0
        %1550 = vmatpush1.bf16.msra.mxu0 0
        %1551 = vmatprep.subr.bf16.mxu0 0
        %1552 = vmatpush1.bf16.msra.mxu0 0
        %1553 = vmatprep.subr.bf16.mxu0 0
        %1554 = vmatpush1.bf16.msra.mxu0 0
        %1555 = vmatprep.subr.bf16.mxu0 0
        %1556 = vmatpush1.bf16.msra.mxu0 0
        %1557 = vmatprep.subr.bf16.mxu0 0
        %1558 = vmatpush1.bf16.msra.mxu0 0
        %1559 = vmatprep.subr.bf16.mxu0 0
        %1560 = vmatpush1.bf16.msra.mxu0 0
        %1561 = vmatprep.subr.bf16.mxu0 0
        %1562 = vmatpush1.bf16.msra.mxu0 0
        %1563 = vmatprep.subr.bf16.mxu0 0
        %1564 = vmatpush1.bf16.msra.mxu0 0
        %1565 = vmatprep.subr.bf16.mxu0 0
        %1566 = vmatpush1.bf16.msra.mxu0 0
        %1567 = vmatprep.subr.bf16.mxu0 0
        %1568 = vmatpush1.bf16.msra.mxu0 0
        %1569 = vmatprep.subr.bf16.mxu0 0
        %1570 = vmatpush1.bf16.msra.mxu0 0
        %1571 = vmatprep.mubr.bf16.mxu0 0
        %1572 = vmatmul.mubr.bf16.gmra.mrb[0].mxu0 %v1537
        %v1573 = vpop.f32.mrb[0].mxu0
        %v1574 = vadd.f32 %v1509, %v1573
        %v1575 = vpop.f32.mrb[0].mxu0
        %v1576 = vpop.f32.mrb[0].mxu0
        %v1577 = vpop.f32.mrb[0].mxu0
        %1578 = vdwg.mxu0
        %v1579 = vadd.f32 %v1397, %v1574
        %v1580 = vld [vmem:[#allocation26] sm:$0x1]
        %v1581 = vld [vmem:[#allocation27] sm:$0x1]
        %v1582 = vsel %vm772, %v1579, 0.0
        %1583 = vadd.xlane.f32.xlu0 %v1582
        %v1584 = vpop.xlane.xlu0 %1583
        %v1585 = vmul.f32 %v1584, %v776
        %v1586 = vsub.f32 %v1579, %v1585
        %v1587 = vmul.f32 %v1586, %v1586
        %v1588 = vsel %vm772, %v1587, 0.0
        %1589 = vadd.xlane.f32.xlu0 %v1588
        %v1590 = vpop.xlane.xlu0 %1589
        %v1591 = vmul.f32 %v1590, %v776
        %v1592 = vadd.f32 %v1591, 1e-05
        %v1593 = vrsqrt.pop %v1592
        %v1594 = vmul.f32 %v1586, %v1593
        %v1596 = vlaneseq
        %v1597 = vshrl.u32 %v1596, 7
        %v1598 = vsub.s32 0, %v1597
        %v1599 = vrot.slane %v1580, %v1598
        %v1601 = vmul.f32 %v1594, %v1599
        %v1603 = vlaneseq
        %v1604 = vshrl.u32 %v1603, 7
        %v1605 = vsub.s32 0, %v1604
        %v1606 = vrot.slane %v1581, %v1605
        %v1608 = vadd.f32 %v1601, %v1606
        %1609 = vst.msk [vmem:[%s753] sm:$0xff] %vm772, %v1608
        %s1610 = sand.u32 %s397, 1
        %s1611 = scalar_lea.sflag [#allocation5], %s1610
        %s1612 = sand.u32 %s397, 1
        %s1613 = smul.addr %s1612, 8
        %s1614 = scalar_lea.vmem [#allocation29], %s1613
        // Predicated region
        $region149: #{temporal_transformer_forward.3} parent=83 // pred_check
          %p1615 = pneg %p407
        $region150: #{temporal_transformer_forward.3} parent=83 // pred_check_branch
          %1617 = sbr.rel (%p1615) target = $region152
        $region151: #{temporal_transformer_forward.3} parent=83 // pred_region
          %s1619 = ssub.s32 128, 128
          %1620 = vsyncadd %s1611, %s1619
          %s1621 = smul.addr %s43, 128
          %s1622 = scalar_lea.hbm %s16, %s1621
          %s1624 = sshll.u32 %s1614, 4
          %s1625 = int_to_ptr.vmem [resolvable:$true] %s1624
          %1627 = dma.vmem_to_hbm [thread:$0]  %s1625, 128, %s1622, %s1611
        $region152: #{temporal_transformer_forward.3} parent=83 // pred_fallthru
          _
      $region84: #{temporal_transformer_forward.3} parent=5 // pred_fallthru
        _
      %p1628 = scmp.le.s32.totalorder 2, %s38
      // Predicated region
      $region153: #{temporal_transformer_forward.3} parent=5 // pred_check
        %p1629 = pneg %p1628
      $region154: #{temporal_transformer_forward.3} parent=5 // pred_check_branch
        %1631 = sbr.rel (%p1629) target = $region156
      $region155: #{temporal_transformer_forward.3} parent=5 // pred_region
        %s1632 = ssub.s32 %s38, 2
        // Predicated region
        $region157: #{temporal_transformer_forward.3} parent=155 // pred_check
          %p1633 = pneg %p413
        $region158: #{temporal_transformer_forward.3} parent=155 // pred_check_branch
          %1635 = sbr.rel (%p1633) target = $region160
        $region159: #{temporal_transformer_forward.3} parent=155 // pred_region
          %s1636 = sand.u32 %s398, 1
          %s1637 = scalar_lea.sflag [#allocation5], %s1636
          %s1638 = sand.u32 %s398, 1
          %s1639 = smul.addr %s1638, 8
          %s1640 = scalar_lea.vmem [#allocation29], %s1639
          %1641 = dma.done %s1637, 128
        $region160: #{temporal_transformer_forward.3} parent=155 // pred_fallthru
          _
      $region156: #{temporal_transformer_forward.3} parent=5 // pred_fallthru
        _
    $region6: #{temporal_transformer_forward.3} parent=1 // loop_footer
      %s42 = sadd.s32 1, %s38
    $region7: #{temporal_transformer_forward.3} parent=1 // loop_footer_branch
      %37 = sbr.rel target = $region3
    $region8: #{temporal_transformer_forward.3} parent=1 // loop_exit
      _
    %1642 = vsyncpa [#allocation4], 1
    %s1643 = scalar_lea.sflag [#allocation4], 1
    %1644 = vsyncpa %s1643, 1
    %1645 = vsyncpa [#allocation7], 1
    %s1646 = scalar_lea.sflag [#allocation7], 1
    %1647 = vsyncpa %s1646, 1
    %1648 = vsyncpa [#allocation10], 1
    %1649 = vsyncpa [#allocation13], 1
    %1650 = vsyncpa [#allocation16], 1
    %1651 = vsyncpa [#allocation19], 1
    %1652 = vsyncpa [#allocation22], 1
    %1653 = vsyncpa [#allocation25], 1
    %1654 = vsyncpa [#allocation28], 1
    %1655 = vsyncpa [#allocation5], 1
    %s1656 = scalar_lea.sflag [#allocation5], 1
    %1657 = vsyncpa %s1656, 1

</llo_original>
